<compile_context>
chip_gen: v7x
topology: tpu7x:2x2x1
jax: 0.10.0
libtpu: 0.0.40
codegen_flags: <defaults>
</compile_context>

<pallas_src>
import functools
import math

import jax
import jax.numpy as jnp
from jax.experimental import pallas as pl
from jax.experimental.pallas import tpu as pltpu


def _layernorm(x, g, b, eps):
    mu = jnp.mean(x, axis=-1, keepdims=True)
    xc = x - mu
    var = jnp.mean(xc * xc, axis=-1, keepdims=True)
    return xc * jax.lax.rsqrt(var + eps) * g + b


# ---------------------------------------------------------------------------
# The fully fused forward kernel.  Grid = (num_layers,), "arbitrary".
#   scratch: h_ref    (B*S, D) f32  -- activation carried across layer steps
#            attn_ref (B*S, D) f32  -- per-head output concat buffer
# ---------------------------------------------------------------------------
def _mt_kernel(x_ref, w1_ref, b1_ref, bias_ref, poolw_ref, w2_ref, b2_ref,
               wqkv_ref, bqkv_ref, wout_ref, bout_ref,
               ln1g_ref, ln1b_ref, wff1_ref, bff1_ref,
               wff2_ref, bff2_ref, ln2g_ref, ln2b_ref,
               o_ref, h_ref, attn_ref, *, heads, ln_eps, l2_eps):
    l = pl.program_id(0)
    mxu_dt = wqkv_ref.dtype                      # bf16 fast path or f32

    # --- layer 0: input projection (linear1), result stays in VMEM ----------
    @pl.when(l == 0)
    def _():
        h_ref[...] = (jnp.dot(x_ref[...].astype(w1_ref.dtype), w1_ref[...],
                              preferred_element_type=jnp.float32) + b1_ref[...])

    h = h_ref[...]                               # (BS, D) f32, resident
    BS, D = h.shape
    dh = D // heads

    # --- self attention ------------------------------------------------------
    # 1/sqrt(dh) is pre-folded into the Q columns of w_qkv / b_qkv.
    qkv = jnp.dot(h.astype(mxu_dt), wqkv_ref[0],
                  preferred_element_type=jnp.float32) + bqkv_ref[0]      # (BS, 3D)
    qkv_m = qkv.astype(mxu_dt)                   # single cast, hoisted out of the head loop
    bias = bias_ref[...]                         # (BS, BS): block-diag batch + key-padding

    for hh in range(heads):
        q_h = qkv_m[:, hh * dh:(hh + 1) * dh]
        k_h = qkv_m[:, D + hh * dh:D + (hh + 1) * dh]
        v_h = qkv_m[:, 2 * D + hh * dh:2 * D + (hh + 1) * dh]
        s = jax.lax.dot_general(q_h, k_h, (((1,), (1,)), ((), ())),
                                preferred_element_type=jnp.float32) + bias
        s = s - jnp.max(s, axis=-1, keepdims=True)
        p = jnp.exp(s)
        p = p * pl.reciprocal(jnp.sum(p, axis=-1, keepdims=True), approx=True)
        attn_ref[:, hh * dh:(hh + 1) * dh] = jnp.dot(
            p.astype(mxu_dt), v_h, preferred_element_type=jnp.float32)

    # Head-concat + out-projection as ONE K=D matmul.
    sa = jnp.dot(attn_ref[...].astype(mxu_dt), wout_ref[0],
                 preferred_element_type=jnp.float32) + bout_ref[0]
    h1 = _layernorm(h + sa, ln1g_ref[0], ln1b_ref[0], ln_eps)

    # --- feed forward (relu); intermediate never leaves VMEM/vregs -----------
    ff = jnp.dot(h1.astype(mxu_dt), wff1_ref[0],
                 preferred_element_type=jnp.float32) + bff1_ref[0]
    ff = jnp.maximum(ff, 0.0)
    ff = jnp.dot(ff.astype(mxu_dt), wff2_ref[0],
                 preferred_element_type=jnp.float32) + bff2_ref[0]
    h2 = _layernorm(h1 + ff, ln2g_ref[0], ln2b_ref[0], ln_eps)
    h_ref[...] = h2                              # carry to next layer step

    # --- tail (only at the last layer step): pool (as matmul) + linear2 + l2 -
    @pl.when(l == pl.num_programs(0) - 1)
    def _():
        pooled = jnp.dot(poolw_ref[...], h2,
                         preferred_element_type=jnp.float32)             # (B, D)
        out = jnp.dot(pooled.astype(w2_ref.dtype), w2_ref[...],
                      preferred_element_type=jnp.float32) + b2_ref[...]  # (B, OUT)
        nrm = jnp.sqrt(jnp.sum(out * out, axis=-1, keepdims=True))
        o_ref[...] = out / jnp.maximum(nrm, l2_eps)                      # F.normalize


# ---------------------------------------------------------------------------
# One-time parameter prep: stack per-layer weights, fold the q-scale, cast the
# matmul weights to the MXU dtype (biases / LN params stay f32).
# ---------------------------------------------------------------------------
def prepare_params(params, *, heads, mxu_dtype=jnp.bfloat16):
    D = params["linear1_w"].shape[1]
    assert D % heads == 0
    scale = 1.0 / math.sqrt(D // heads)

    def stack(key):
        return jnp.stack([lyr[key] for lyr in params["layers"]], axis=0)

    w_qkv = stack("w_qkv").at[:, :, :D].multiply(scale)
    b_qkv = stack("b_qkv").at[:, :, :D].multiply(scale)

    cast = lambda w: w.astype(mxu_dtype)
    return {
        "w1": cast(params["linear1_w"]), "b1": params["linear1_b"],
        "w2": cast(params["linear2_w"]), "b2": params["linear2_b"],
        "w_qkv": cast(w_qkv), "b_qkv": b_qkv,
        "w_out": cast(stack("w_out")), "b_out": stack("b_out"),
        "ln1_g": stack("ln1_g"), "ln1_b": stack("ln1_b"),
        "w_ff1": cast(stack("w_ff1")), "b_ff1": stack("b_ff1"),
        "w_ff2": cast(stack("w_ff2")), "b_ff2": stack("b_ff2"),
        "ln2_g": stack("ln2_g"), "ln2_b": stack("ln2_b"),
    }


# ---------------------------------------------------------------------------
# Model forward: a single pallas_call for the whole network.
# ---------------------------------------------------------------------------
def mt_forward(prepped, x, padding_mask=None, *, heads):
    B, S, IN = x.shape
    D = prepped["w1"].shape[1]
    OUT = prepped["w2"].shape[1]
    L = prepped["w_qkv"].shape[0]
    BS = B * S

    if padding_mask is None:
        # TODO(synk): PyTorch's mask_pooling(mask=None) path is shape-broken for S != D;
        # we treat "no mask" as "no padding" (mean over all tokens).
        padding_mask = jnp.zeros((B, S), dtype=bool)

    x_flat = x.reshape(BS, IN)

    # Block-diagonal attention bias over the flattened batch: -1e30 (large finite, so
    # fully-padded rows cannot produce NaN) for cross-batch pairs and padded keys.
    batch_ids = jnp.repeat(jnp.arange(B), S)                               # (BS,)
    key_valid = jnp.logical_not(padding_mask.reshape(BS))
    valid = (batch_ids[:, None] == batch_ids[None, :]) & key_valid[None, :]
    attn_bias = jnp.where(valid, 0.0, -1e30).astype(jnp.float32)           # (BS, BS)

    # Mask pooling as a matmul: pool_w[b, b*S+s] = valid(b,s) / count(b).
    mask_f = key_valid.astype(jnp.float32).reshape(B, S)
    cnt = jnp.maximum(jnp.sum(mask_f, axis=1, keepdims=True), 1.0)
    tok_w = (mask_f / cnt).reshape(BS)
    pool_w = ((jnp.arange(B)[:, None] == batch_ids[None, :]).astype(jnp.float32)
              * tok_w[None, :])                                            # (B, BS)

    def const(shape):                              # whole array, loaded once
        return pl.BlockSpec(shape, lambda l, _n=len(shape): (0,) * _n)

    def per_layer(a):                              # stream layer l's slice
        return pl.BlockSpec((1, a.shape[1], a.shape[2]), lambda l: (l, 0, 0))

    layer_keys = ("w_qkv", "b_qkv", "w_out", "b_out", "ln1_g", "ln1_b",
                  "w_ff1", "b_ff1", "w_ff2", "b_ff2", "ln2_g", "ln2_b")
    layer_arrays = [prepped[k] for k in layer_keys]

    kernel = functools.partial(_mt_kernel, heads=heads, ln_eps=1e-5, l2_eps=1e-12)
    return pl.pallas_call(
        kernel,
        out_shape=jax.ShapeDtypeStruct((B, OUT), jnp.float32),
        grid=(L,),
        in_specs=[const((BS, IN)),
                  const(prepped["w1"].shape), const(prepped["b1"].shape),
                  const((BS, BS)), const((B, BS)),
                  const(prepped["w2"].shape), const(prepped["b2"].shape)]
                 + [per_layer(a) for a in layer_arrays],
        out_specs=pl.BlockSpec((B, OUT), lambda l: (0, 0)),
        scratch_shapes=[pltpu.VMEM((BS, D), jnp.float32),   # activation carry
                        pltpu.VMEM((BS, D), jnp.float32)],  # head-concat buffer
        compiler_params=pltpu.CompilerParams(
            dimension_semantics=("arbitrary",),
            vmem_limit_bytes=32 * 1024 * 1024),
    )(x_flat, prepped["w1"], prepped["b1"], attn_bias, pool_w,
      prepped["w2"], prepped["b2"], *layer_arrays)


# ---------------------------------------------------------------------------
# Pure-JAX reference (f32, highest matmul precision) for correctness checking
# ---------------------------------------------------------------------------
def mt_reference(params, x, padding_mask, *, heads):
    with jax.default_matmul_precision("highest"):
        B, S, _ = x.shape
        h = x @ params["linear1_w"] + params["linear1_b"]
        D = h.shape[-1]
        dh = D // heads
        bias = jnp.where(padding_mask, -1e30, 0.0)[:, None, None, :]
        for lyr in params["layers"]:
            qkv = h @ lyr["w_qkv"] + lyr["b_qkv"]
            q, k, v = qkv[..., :D], qkv[..., D:2 * D], qkv[..., 2 * D:]
            split = lambda t: t.reshape(B, S, heads, dh).transpose(0, 2, 1, 3)
            q, k, v = split(q), split(k), split(v)
            s = jnp.einsum("bhqd,bhkd->bhqk", q, k) / math.sqrt(dh) + bias
            p = jax.nn.softmax(s, axis=-1)
            o = jnp.einsum("bhqk,bhkd->bhqd", p, v).transpose(0, 2, 1, 3).reshape(B, S, D)
            sa = o @ lyr["w_out"] + lyr["b_out"]
            h = _layernorm(h + sa, lyr["ln1_g"], lyr["ln1_b"], 1e-5)
            ff = jnp.maximum(h @ lyr["w_ff1"] + lyr["b_ff1"], 0.0) @ lyr["w_ff2"] + lyr["b_ff2"]
            h = _layernorm(h + ff, lyr["ln2_g"], lyr["ln2_b"], 1e-5)
        mask_f = (~padding_mask).astype(jnp.float32)
        pooled = (jnp.sum(h * mask_f[:, :, None], axis=1)
                  / jnp.maximum(jnp.sum(mask_f, axis=1, keepdims=True), 1.0))
        out = pooled @ params["linear2_w"] + params["linear2_b"]
        nrm = jnp.sqrt(jnp.sum(out * out, axis=-1, keepdims=True))
        return out / jnp.maximum(nrm, 1e-12)


def init_params(key, *, input_dim, output_dim, dim, depth, ffn):
    counter = [0]

    def nk():
        counter[0] += 1
        return jax.random.fold_in(key, counter[0])

    def w(shape, scale=0.02):
        return scale * jax.random.normal(nk(), shape, dtype=jnp.float32)

    params = {
        "linear1_w": w((input_dim, dim)),
        "linear1_b": w((1, dim)),
        "linear2_w": w((dim, output_dim)),
        "linear2_b": w((1, output_dim)),
        "layers": [],
    }
    for _ in range(depth):
        params["layers"].append({
            "w_qkv": w((dim, 3 * dim)), "b_qkv": w((1, 3 * dim)),
            "w_out": w((dim, dim)),     "b_out": w((1, dim)),
            "w_ff1": w((dim, ffn)),     "b_ff1": w((1, ffn)),
            "w_ff2": w((ffn, dim)),     "b_ff2": w((1, dim)),
            "ln1_g": jnp.ones((1, dim), jnp.float32),
            "ln1_b": jnp.zeros((1, dim), jnp.float32),
            "ln2_g": jnp.ones((1, dim), jnp.float32),
            "ln2_b": jnp.zeros((1, dim), jnp.float32),
        })
    return params


if __name__ == "__main__":
    # Small shapes consistent with MT defaults (dim=256, heads=8, ffn=256); shallow depth.
    B, S = 2, 8
    INPUT_DIM, OUTPUT_DIM, DIM, DEPTH, HEADS, FFN = 128, 128, 256, 2, 8, 256

    key = jax.random.PRNGKey(0)
    kx, kp = jax.random.split(key)
    params = init_params(kp, input_dim=INPUT_DIM, output_dim=OUTPUT_DIM,
                         dim=DIM, depth=DEPTH, ffn=FFN)

    x = jax.random.normal(kx, (B, S, INPUT_DIM), dtype=jnp.float32)
    # True = padded token (last two positions of batch element 1 are padding)
    padding_mask = jnp.zeros((B, S), dtype=bool).at[1, 6:].set(True)

    fwd = jax.jit(functools.partial(mt_forward, heads=HEADS))

    # f32-MXU path: checked against the pure-JAX reference.
    prepped_f32 = prepare_params(params, heads=HEADS, mxu_dtype=jnp.float32)
    out_f32 = jax.block_until_ready(fwd(prepped_f32, x, padding_mask))
    ref = mt_reference(params, x, padding_mask, heads=HEADS)
    assert out_f32.shape == (B, OUTPUT_DIM), out_f32.shape
    assert bool(jnp.all(jnp.isfinite(out_f32)))
    assert float(jnp.max(jnp.abs(out_f32 - ref))) < 1e-2

    # bf16 weight path (default fast path on v6e/v7x): finite, unit-norm, close to f32 path.
    prepped_bf16 = prepare_params(params, heads=HEADS, mxu_dtype=jnp.bfloat16)
    out_bf16 = jax.block_until_ready(fwd(prepped_bf16, x, padding_mask))
    assert bool(jnp.all(jnp.isfinite(out_bf16)))
    norms = jnp.sqrt(jnp.sum(out_bf16 * out_bf16, axis=-1))
    assert bool(jnp.all(jnp.abs(norms - 1.0) < 1e-4))
    assert float(jnp.max(jnp.abs(out_bf16 - out_f32))) < 5e-2

    print("KERNEL_OK")
</pallas_src>

<mosaic_0001>
module attributes {stable_mosaic.version = 11 : i64} {
  func.func @_mt_kernel(%arg0: i32, %arg1: memref<16x128xf32, #tpu.memory_space<vmem>>, %arg2: memref<128x256xf32, #tpu.memory_space<vmem>>, %arg3: memref<1x256xf32, #tpu.memory_space<vmem>>, %arg4: memref<16x16xf32, #tpu.memory_space<vmem>>, %arg5: memref<2x16xf32, #tpu.memory_space<vmem>>, %arg6: memref<256x128xf32, #tpu.memory_space<vmem>>, %arg7: memref<1x128xf32, #tpu.memory_space<vmem>>, %arg8: memref<1x256x768xf32, #tpu.memory_space<vmem>>, %arg9: memref<1x1x768xf32, #tpu.memory_space<vmem>>, %arg10: memref<1x256x256xf32, #tpu.memory_space<vmem>>, %arg11: memref<1x1x256xf32, #tpu.memory_space<vmem>>, %arg12: memref<1x1x256xf32, #tpu.memory_space<vmem>>, %arg13: memref<1x1x256xf32, #tpu.memory_space<vmem>>, %arg14: memref<1x256x256xf32, #tpu.memory_space<vmem>>, %arg15: memref<1x1x256xf32, #tpu.memory_space<vmem>>, %arg16: memref<1x256x256xf32, #tpu.memory_space<vmem>>, %arg17: memref<1x1x256xf32, #tpu.memory_space<vmem>>, %arg18: memref<1x1x256xf32, #tpu.memory_space<vmem>>, %arg19: memref<1x1x256xf32, #tpu.memory_space<vmem>>, %arg20: memref<2x128xf32, #tpu.memory_space<vmem>>, %arg21: memref<16x256xf32, #tpu.memory_space<vmem>>, %arg22: memref<16x256xf32, #tpu.memory_space<vmem>>) attributes {dimension_semantics = [#tpu.dimension_semantics<arbitrary>], iteration_bounds = array<i64: 2>, scalar_prefetch = 0 : i64, scratch_operands = 2 : i64, tpu.core_type = #tpu.core_type<tc>, window_params = [{pipeline_mode = #tpu.pipeline_mode<synchronous>, transform_indices = @transform_0, window_bounds = array<i64: 16, 128>}, {pipeline_mode = #tpu.pipeline_mode<synchronous>, transform_indices = @transform_1, window_bounds = array<i64: 128, 256>}, {pipeline_mode = #tpu.pipeline_mode<synchronous>, transform_indices = @transform_2, window_bounds = array<i64: 1, 256>}, {pipeline_mode = #tpu.pipeline_mode<synchronous>, transform_indices = @transform_3, window_bounds = array<i64: 16, 16>}, {pipeline_mode = #tpu.pipeline_mode<synchronous>, transform_indices = @transform_4, window_bounds = array<i64: 2, 16>}, {pipeline_mode = #tpu.pipeline_mode<synchronous>, transform_indices = @transform_5, window_bounds = array<i64: 256, 128>}, {pipeline_mode = #tpu.pipeline_mode<synchronous>, transform_indices = @transform_6, window_bounds = array<i64: 1, 128>}, {transform_indices = @transform_7, window_bounds = array<i64: 1, 256, 768>}, {transform_indices = @transform_8, window_bounds = array<i64: 1, 1, 768>}, {transform_indices = @transform_9, window_bounds = array<i64: 1, 256, 256>}, {transform_indices = @transform_10, window_bounds = array<i64: 1, 1, 256>}, {transform_indices = @transform_11, window_bounds = array<i64: 1, 1, 256>}, {transform_indices = @transform_12, window_bounds = array<i64: 1, 1, 256>}, {transform_indices = @transform_13, window_bounds = array<i64: 1, 256, 256>}, {transform_indices = @transform_14, window_bounds = array<i64: 1, 1, 256>}, {transform_indices = @transform_15, window_bounds = array<i64: 1, 256, 256>}, {transform_indices = @transform_16, window_bounds = array<i64: 1, 1, 256>}, {transform_indices = @transform_17, window_bounds = array<i64: 1, 1, 256>}, {transform_indices = @transform_18, window_bounds = array<i64: 1, 1, 256>}, {pipeline_mode = #tpu.pipeline_mode<synchronous>, transform_indices = @transform_19, window_bounds = array<i64: 2, 128>}]} {
    %c0_i32 = arith.constant 0 : i32
    %0 = arith.cmpi eq, %arg0, %c0_i32 : i32
    %1 = arith.extui %0 : i1 to i32
    %c0_i32_0 = arith.constant 0 : i32
    %2 = arith.cmpi ne, %1, %c0_i32_0 : i32
    scf.if %2 {
      %c0_100 = arith.constant 0 : index
      %c0_101 = arith.constant 0 : index
      %226 = vector.load %arg1[%c0_100, %c0_101] : memref<16x128xf32, #tpu.memory_space<vmem>>, vector<16x128xf32>
      %c0_102 = arith.constant 0 : index
      %c0_103 = arith.constant 0 : index
      %227 = vector.load %arg2[%c0_102, %c0_103] : memref<128x256xf32, #tpu.memory_space<vmem>>, vector<128x256xf32>
      %cst_104 = arith.constant dense<0.000000e+00> : vector<16x256xf32>
      %228 = tpu.matmul %226, %227, %cst_104 {dimension_numbers = #tpu.dot_dimension_numbers<[1], [0], [0], [1], [0, 0, 1, 1], [], []>} : vector<16x128xf32>, vector<128x256xf32>, vector<16x256xf32> -> vector<16x256xf32>
      %c0_105 = arith.constant 0 : index
      %c0_106 = arith.constant 0 : index
      %229 = vector.load %arg3[%c0_105, %c0_106] : memref<1x256xf32, #tpu.memory_space<vmem>>, vector<1x256xf32>
      %230 = vector.broadcast %229 : vector<1x256xf32> to vector<16x256xf32>
      %231 = arith.addf %228, %230 : vector<16x256xf32>
      %c0_107 = arith.constant 0 : index
      %c0_108 = arith.constant 0 : index
      %232 = vector.load %arg21[%c0_107, %c0_108] : memref<16x256xf32, #tpu.memory_space<vmem>>, vector<16x256xf32>
      tpu.vector_store %arg21[%c0_107, %c0_108], %231 {strides = array<i32>} : memref<16x256xf32, #tpu.memory_space<vmem>>, vector<16x256xf32>,
    } else {
    }
    %c0 = arith.constant 0 : index
    %c0_1 = arith.constant 0 : index
    %3 = vector.load %arg21[%c0, %c0_1] : memref<16x256xf32, #tpu.memory_space<vmem>>, vector<16x256xf32>
    %c0_2 = arith.constant 0 : index
    %c0_3 = arith.constant 0 : index
    %c0_4 = arith.constant 0 : index
    %4 = vector.load %arg8[%c0_2, %c0_3, %c0_4] : memref<1x256x768xf32, #tpu.memory_space<vmem>>, vector<1x256x768xf32>
    %5 = vector.shape_cast %4 : vector<1x256x768xf32> to vector<256x768xf32>
    %cst = arith.constant dense<0.000000e+00> : vector<16x768xf32>
    %6 = tpu.matmul %3, %5, %cst {dimension_numbers = #tpu.dot_dimension_numbers<[1], [0], [0], [1], [0, 0, 1, 1], [], []>} : vector<16x256xf32>, vector<256x768xf32>, vector<16x768xf32> -> vector<16x768xf32>
    %c0_5 = arith.constant 0 : index
    %c0_6 = arith.constant 0 : index
    %c0_7 = arith.constant 0 : index
    %7 = vector.load %arg9[%c0_5, %c0_6, %c0_7] : memref<1x1x768xf32, #tpu.memory_space<vmem>>, vector<1x1x768xf32>
    %8 = vector.shape_cast %7 : vector<1x1x768xf32> to vector<1x768xf32>
    %9 = vector.broadcast %8 : vector<1x768xf32> to vector<16x768xf32>
    %10 = arith.addf %6, %9 : vector<16x768xf32>
    %c0_8 = arith.constant 0 : index
    %c0_9 = arith.constant 0 : index
    %11 = vector.load %arg4[%c0_8, %c0_9] : memref<16x16xf32, #tpu.memory_space<vmem>>, vector<16x16xf32>
    %12 = vector.extract_strided_slice %10 {offsets = [0, 0], sizes = [16, 32], strides = [1, 1]} : vector<16x768xf32> to vector<16x32xf32>
    %13 = vector.extract_strided_slice %10 {offsets = [0, 256], sizes = [16, 32], strides = [1, 1]} : vector<16x768xf32> to vector<16x32xf32>
    %14 = vector.extract_strided_slice %10 {offsets = [0, 512], sizes = [16, 32], strides = [1, 1]} : vector<16x768xf32> to vector<16x32xf32>
    %cst_10 = arith.constant dense<0.000000e+00> : vector<16x16xf32>
    %15 = tpu.matmul %12, %13, %cst_10 {dimension_numbers = #tpu.dot_dimension_numbers<[1], [1], [0], [0], [0, 0, 1, 0], [], []>} : vector<16x32xf32>, vector<16x32xf32>, vector<16x16xf32> -> vector<16x16xf32>
    %16 = arith.addf %15, %11 : vector<16x16xf32>
    %cst_11 = arith.constant dense<0xFF800000> : vector<16xf32>
    %17 = vector.multi_reduction <maximumf>, %16, %cst_11 [1] : vector<16x16xf32> to vector<16xf32>
    %18 = vector.shape_cast %17 : vector<16xf32> to vector<16x1xf32>
    %19 = vector.broadcast %18 : vector<16x1xf32> to vector<16x16xf32>
    %20 = arith.subf %16, %19 : vector<16x16xf32>
    %21 = math.exp %20 : vector<16x16xf32>
    %cst_12 = arith.constant dense<0.000000e+00> : vector<16xf32>
    %22 = vector.multi_reduction <add>, %21, %cst_12 [1] : vector<16x16xf32> to vector<16xf32>
    %23 = vector.shape_cast %22 : vector<16xf32> to vector<16x1xf32>
    %24 = tpu.reciprocal %23 {approx = true} : vector<16x1xf32> -> vector<16x1xf32>
    %25 = vector.broadcast %24 : vector<16x1xf32> to vector<16x16xf32>
    %26 = arith.mulf %21, %25 : vector<16x16xf32>
    %cst_13 = arith.constant dense<0.000000e+00> : vector<16x32xf32>
    %27 = tpu.matmul %26, %14, %cst_13 {dimension_numbers = #tpu.dot_dimension_numbers<[1], [0], [0], [1], [0, 0, 1, 1], [], []>} : vector<16x16xf32>, vector<16x32xf32>, vector<16x32xf32> -> vector<16x32xf32>
    %c0_14 = arith.constant 0 : index
    %c0_15 = arith.constant 0 : index
    %28 = vector.load %arg22[%c0_14, %c0_15] : memref<16x256xf32, #tpu.memory_space<vmem>>, vector<16x32xf32>
    tpu.vector_store %arg22[%c0_14, %c0_15], %27 {strides = array<i32>} : memref<16x256xf32, #tpu.memory_space<vmem>>, vector<16x32xf32>,
    %29 = vector.extract_strided_slice %10 {offsets = [0, 32], sizes = [16, 32], strides = [1, 1]} : vector<16x768xf32> to vector<16x32xf32>
    %30 = vector.extract_strided_slice %10 {offsets = [0, 288], sizes = [16, 32], strides = [1, 1]} : vector<16x768xf32> to vector<16x32xf32>
    %31 = vector.extract_strided_slice %10 {offsets = [0, 544], sizes = [16, 32], strides = [1, 1]} : vector<16x768xf32> to vector<16x32xf32>
    %cst_16 = arith.constant dense<0.000000e+00> : vector<16x16xf32>
    %32 = tpu.matmul %29, %30, %cst_16 {dimension_numbers = #tpu.dot_dimension_numbers<[1], [1], [0], [0], [0, 0, 1, 0], [], []>} : vector<16x32xf32>, vector<16x32xf32>, vector<16x16xf32> -> vector<16x16xf32>
    %33 = arith.addf %32, %11 : vector<16x16xf32>
    %cst_17 = arith.constant dense<0xFF800000> : vector<16xf32>
    %34 = vector.multi_reduction <maximumf>, %33, %cst_17 [1] : vector<16x16xf32> to vector<16xf32>
    %35 = vector.shape_cast %34 : vector<16xf32> to vector<16x1xf32>
    %36 = vector.broadcast %35 : vector<16x1xf32> to vector<16x16xf32>
    %37 = arith.subf %33, %36 : vector<16x16xf32>
    %38 = math.exp %37 : vector<16x16xf32>
    %cst_18 = arith.constant dense<0.000000e+00> : vector<16xf32>
    %39 = vector.multi_reduction <add>, %38, %cst_18 [1] : vector<16x16xf32> to vector<16xf32>
    %40 = vector.shape_cast %39 : vector<16xf32> to vector<16x1xf32>
    %41 = tpu.reciprocal %40 {approx = true} : vector<16x1xf32> -> vector<16x1xf32>
    %42 = vector.broadcast %41 : vector<16x1xf32> to vector<16x16xf32>
    %43 = arith.mulf %38, %42 : vector<16x16xf32>
    %cst_19 = arith.constant dense<0.000000e+00> : vector<16x32xf32>
    %44 = tpu.matmul %43, %31, %cst_19 {dimension_numbers = #tpu.dot_dimension_numbers<[1], [0], [0], [1], [0, 0, 1, 1], [], []>} : vector<16x16xf32>, vector<16x32xf32>, vector<16x32xf32> -> vector<16x32xf32>
    %c0_20 = arith.constant 0 : index
    %c32 = arith.constant 32 : index
    %45 = vector.load %arg22[%c0_20, %c32] : memref<16x256xf32, #tpu.memory_space<vmem>>, vector<16x32xf32>
    tpu.vector_store %arg22[%c0_20, %c32], %44 {strides = array<i32>} : memref<16x256xf32, #tpu.memory_space<vmem>>, vector<16x32xf32>,
    %46 = vector.extract_strided_slice %10 {offsets = [0, 64], sizes = [16, 32], strides = [1, 1]} : vector<16x768xf32> to vector<16x32xf32>
    %47 = vector.extract_strided_slice %10 {offsets = [0, 320], sizes = [16, 32], strides = [1, 1]} : vector<16x768xf32> to vector<16x32xf32>
    %48 = vector.extract_strided_slice %10 {offsets = [0, 576], sizes = [16, 32], strides = [1, 1]} : vector<16x768xf32> to vector<16x32xf32>
    %cst_21 = arith.constant dense<0.000000e+00> : vector<16x16xf32>
    %49 = tpu.matmul %46, %47, %cst_21 {dimension_numbers = #tpu.dot_dimension_numbers<[1], [1], [0], [0], [0, 0, 1, 0], [], []>} : vector<16x32xf32>, vector<16x32xf32>, vector<16x16xf32> -> vector<16x16xf32>
    %50 = arith.addf %49, %11 : vector<16x16xf32>
    %cst_22 = arith.constant dense<0xFF800000> : vector<16xf32>
    %51 = vector.multi_reduction <maximumf>, %50, %cst_22 [1] : vector<16x16xf32> to vector<16xf32>
    %52 = vector.shape_cast %51 : vector<16xf32> to vector<16x1xf32>
    %53 = vector.broadcast %52 : vector<16x1xf32> to vector<16x16xf32>
    %54 = arith.subf %50, %53 : vector<16x16xf32>
    %55 = math.exp %54 : vector<16x16xf32>
    %cst_23 = arith.constant dense<0.000000e+00> : vector<16xf32>
    %56 = vector.multi_reduction <add>, %55, %cst_23 [1] : vector<16x16xf32> to vector<16xf32>
    %57 = vector.shape_cast %56 : vector<16xf32> to vector<16x1xf32>
    %58 = tpu.reciprocal %57 {approx = true} : vector<16x1xf32> -> vector<16x1xf32>
    %59 = vector.broadcast %58 : vector<16x1xf32> to vector<16x16xf32>
    %60 = arith.mulf %55, %59 : vector<16x16xf32>
    %cst_24 = arith.constant dense<0.000000e+00> : vector<16x32xf32>
    %61 = tpu.matmul %60, %48, %cst_24 {dimension_numbers = #tpu.dot_dimension_numbers<[1], [0], [0], [1], [0, 0, 1, 1], [], []>} : vector<16x16xf32>, vector<16x32xf32>, vector<16x32xf32> -> vector<16x32xf32>
    %c0_25 = arith.constant 0 : index
    %c64 = arith.constant 64 : index
    %62 = vector.load %arg22[%c0_25, %c64] : memref<16x256xf32, #tpu.memory_space<vmem>>, vector<16x32xf32>
    tpu.vector_store %arg22[%c0_25, %c64], %61 {strides = array<i32>} : memref<16x256xf32, #tpu.memory_space<vmem>>, vector<16x32xf32>,
    %63 = vector.extract_strided_slice %10 {offsets = [0, 96], sizes = [16, 32], strides = [1, 1]} : vector<16x768xf32> to vector<16x32xf32>
    %64 = vector.extract_strided_slice %10 {offsets = [0, 352], sizes = [16, 32], strides = [1, 1]} : vector<16x768xf32> to vector<16x32xf32>
    %65 = vector.extract_strided_slice %10 {offsets = [0, 608], sizes = [16, 32], strides = [1, 1]} : vector<16x768xf32> to vector<16x32xf32>
    %cst_26 = arith.constant dense<0.000000e+00> : vector<16x16xf32>
    %66 = tpu.matmul %63, %64, %cst_26 {dimension_numbers = #tpu.dot_dimension_numbers<[1], [1], [0], [0], [0, 0, 1, 0], [], []>} : vector<16x32xf32>, vector<16x32xf32>, vector<16x16xf32> -> vector<16x16xf32>
    %67 = arith.addf %66, %11 : vector<16x16xf32>
    %cst_27 = arith.constant dense<0xFF800000> : vector<16xf32>
    %68 = vector.multi_reduction <maximumf>, %67, %cst_27 [1] : vector<16x16xf32> to vector<16xf32>
    %69 = vector.shape_cast %68 : vector<16xf32> to vector<16x1xf32>
    %70 = vector.broadcast %69 : vector<16x1xf32> to vector<16x16xf32>
    %71 = arith.subf %67, %70 : vector<16x16xf32>
    %72 = math.exp %71 : vector<16x16xf32>
    %cst_28 = arith.constant dense<0.000000e+00> : vector<16xf32>
    %73 = vector.multi_reduction <add>, %72, %cst_28 [1] : vector<16x16xf32> to vector<16xf32>
    %74 = vector.shape_cast %73 : vector<16xf32> to vector<16x1xf32>
    %75 = tpu.reciprocal %74 {approx = true} : vector<16x1xf32> -> vector<16x1xf32>
    %76 = vector.broadcast %75 : vector<16x1xf32> to vector<16x16xf32>
    %77 = arith.mulf %72, %76 : vector<16x16xf32>
    %cst_29 = arith.constant dense<0.000000e+00> : vector<16x32xf32>
    %78 = tpu.matmul %77, %65, %cst_29 {dimension_numbers = #tpu.dot_dimension_numbers<[1], [0], [0], [1], [0, 0, 1, 1], [], []>} : vector<16x16xf32>, vector<16x32xf32>, vector<16x32xf32> -> vector<16x32xf32>
    %c0_30 = arith.constant 0 : index
    %c96 = arith.constant 96 : index
    %79 = vector.load %arg22[%c0_30, %c96] : memref<16x256xf32, #tpu.memory_space<vmem>>, vector<16x32xf32>
    tpu.vector_store %arg22[%c0_30, %c96], %78 {strides = array<i32>} : memref<16x256xf32, #tpu.memory_space<vmem>>, vector<16x32xf32>,
    %80 = vector.extract_strided_slice %10 {offsets = [0, 128], sizes = [16, 32], strides = [1, 1]} : vector<16x768xf32> to vector<16x32xf32>
    %81 = vector.extract_strided_slice %10 {offsets = [0, 384], sizes = [16, 32], strides = [1, 1]} : vector<16x768xf32> to vector<16x32xf32>
    %82 = vector.extract_strided_slice %10 {offsets = [0, 640], sizes = [16, 32], strides = [1, 1]} : vector<16x768xf32> to vector<16x32xf32>
    %cst_31 = arith.constant dense<0.000000e+00> : vector<16x16xf32>
    %83 = tpu.matmul %80, %81, %cst_31 {dimension_numbers = #tpu.dot_dimension_numbers<[1], [1], [0], [0], [0, 0, 1, 0], [], []>} : vector<16x32xf32>, vector<16x32xf32>, vector<16x16xf32> -> vector<16x16xf32>
    %84 = arith.addf %83, %11 : vector<16x16xf32>
    %cst_32 = arith.constant dense<0xFF800000> : vector<16xf32>
    %85 = vector.multi_reduction <maximumf>, %84, %cst_32 [1] : vector<16x16xf32> to vector<16xf32>
    %86 = vector.shape_cast %85 : vector<16xf32> to vector<16x1xf32>
    %87 = vector.broadcast %86 : vector<16x1xf32> to vector<16x16xf32>
    %88 = arith.subf %84, %87 : vector<16x16xf32>
    %89 = math.exp %88 : vector<16x16xf32>
    %cst_33 = arith.constant dense<0.000000e+00> : vector<16xf32>
    %90 = vector.multi_reduction <add>, %89, %cst_33 [1] : vector<16x16xf32> to vector<16xf32>
    %91 = vector.shape_cast %90 : vector<16xf32> to vector<16x1xf32>
    %92 = tpu.reciprocal %91 {approx = true} : vector<16x1xf32> -> vector<16x1xf32>
    %93 = vector.broadcast %92 : vector<16x1xf32> to vector<16x16xf32>
    %94 = arith.mulf %89, %93 : vector<16x16xf32>
    %cst_34 = arith.constant dense<0.000000e+00> : vector<16x32xf32>
    %95 = tpu.matmul %94, %82, %cst_34 {dimension_numbers = #tpu.dot_dimension_numbers<[1], [0], [0], [1], [0, 0, 1, 1], [], []>} : vector<16x16xf32>, vector<16x32xf32>, vector<16x32xf32> -> vector<16x32xf32>
    %c0_35 = arith.constant 0 : index
    %c128 = arith.constant 128 : index
    %96 = vector.load %arg22[%c0_35, %c128] : memref<16x256xf32, #tpu.memory_space<vmem>>, vector<16x32xf32>
    tpu.vector_store %arg22[%c0_35, %c128], %95 {strides = array<i32>} : memref<16x256xf32, #tpu.memory_space<vmem>>, vector<16x32xf32>,
    %97 = vector.extract_strided_slice %10 {offsets = [0, 160], sizes = [16, 32], strides = [1, 1]} : vector<16x768xf32> to vector<16x32xf32>
    %98 = vector.extract_strided_slice %10 {offsets = [0, 416], sizes = [16, 32], strides = [1, 1]} : vector<16x768xf32> to vector<16x32xf32>
    %99 = vector.extract_strided_slice %10 {offsets = [0, 672], sizes = [16, 32], strides = [1, 1]} : vector<16x768xf32> to vector<16x32xf32>
    %cst_36 = arith.constant dense<0.000000e+00> : vector<16x16xf32>
    %100 = tpu.matmul %97, %98, %cst_36 {dimension_numbers = #tpu.dot_dimension_numbers<[1], [1], [0], [0], [0, 0, 1, 0], [], []>} : vector<16x32xf32>, vector<16x32xf32>, vector<16x16xf32> -> vector<16x16xf32>
    %101 = arith.addf %100, %11 : vector<16x16xf32>
    %cst_37 = arith.constant dense<0xFF800000> : vector<16xf32>
    %102 = vector.multi_reduction <maximumf>, %101, %cst_37 [1] : vector<16x16xf32> to vector<16xf32>
    %103 = vector.shape_cast %102 : vector<16xf32> to vector<16x1xf32>
    %104 = vector.broadcast %103 : vector<16x1xf32> to vector<16x16xf32>
    %105 = arith.subf %101, %104 : vector<16x16xf32>
    %106 = math.exp %105 : vector<16x16xf32>
    %cst_38 = arith.constant dense<0.000000e+00> : vector<16xf32>
    %107 = vector.multi_reduction <add>, %106, %cst_38 [1] : vector<16x16xf32> to vector<16xf32>
    %108 = vector.shape_cast %107 : vector<16xf32> to vector<16x1xf32>
    %109 = tpu.reciprocal %108 {approx = true} : vector<16x1xf32> -> vector<16x1xf32>
    %110 = vector.broadcast %109 : vector<16x1xf32> to vector<16x16xf32>
    %111 = arith.mulf %106, %110 : vector<16x16xf32>
    %cst_39 = arith.constant dense<0.000000e+00> : vector<16x32xf32>
    %112 = tpu.matmul %111, %99, %cst_39 {dimension_numbers = #tpu.dot_dimension_numbers<[1], [0], [0], [1], [0, 0, 1, 1], [], []>} : vector<16x16xf32>, vector<16x32xf32>, vector<16x32xf32> -> vector<16x32xf32>
    %c0_40 = arith.constant 0 : index
    %c160 = arith.constant 160 : index
    %113 = vector.load %arg22[%c0_40, %c160] : memref<16x256xf32, #tpu.memory_space<vmem>>, vector<16x32xf32>
    tpu.vector_store %arg22[%c0_40, %c160], %112 {strides = array<i32>} : memref<16x256xf32, #tpu.memory_space<vmem>>, vector<16x32xf32>,
    %114 = vector.extract_strided_slice %10 {offsets = [0, 192], sizes = [16, 32], strides = [1, 1]} : vector<16x768xf32> to vector<16x32xf32>
    %115 = vector.extract_strided_slice %10 {offsets = [0, 448], sizes = [16, 32], strides = [1, 1]} : vector<16x768xf32> to vector<16x32xf32>
    %116 = vector.extract_strided_slice %10 {offsets = [0, 704], sizes = [16, 32], strides = [1, 1]} : vector<16x768xf32> to vector<16x32xf32>
    %cst_41 = arith.constant dense<0.000000e+00> : vector<16x16xf32>
    %117 = tpu.matmul %114, %115, %cst_41 {dimension_numbers = #tpu.dot_dimension_numbers<[1], [1], [0], [0], [0, 0, 1, 0], [], []>} : vector<16x32xf32>, vector<16x32xf32>, vector<16x16xf32> -> vector<16x16xf32>
    %118 = arith.addf %117, %11 : vector<16x16xf32>
    %cst_42 = arith.constant dense<0xFF800000> : vector<16xf32>
    %119 = vector.multi_reduction <maximumf>, %118, %cst_42 [1] : vector<16x16xf32> to vector<16xf32>
    %120 = vector.shape_cast %119 : vector<16xf32> to vector<16x1xf32>
    %121 = vector.broadcast %120 : vector<16x1xf32> to vector<16x16xf32>
    %122 = arith.subf %118, %121 : vector<16x16xf32>
    %123 = math.exp %122 : vector<16x16xf32>
    %cst_43 = arith.constant dense<0.000000e+00> : vector<16xf32>
    %124 = vector.multi_reduction <add>, %123, %cst_43 [1] : vector<16x16xf32> to vector<16xf32>
    %125 = vector.shape_cast %124 : vector<16xf32> to vector<16x1xf32>
    %126 = tpu.reciprocal %125 {approx = true} : vector<16x1xf32> -> vector<16x1xf32>
    %127 = vector.broadcast %126 : vector<16x1xf32> to vector<16x16xf32>
    %128 = arith.mulf %123, %127 : vector<16x16xf32>
    %cst_44 = arith.constant dense<0.000000e+00> : vector<16x32xf32>
    %129 = tpu.matmul %128, %116, %cst_44 {dimension_numbers = #tpu.dot_dimension_numbers<[1], [0], [0], [1], [0, 0, 1, 1], [], []>} : vector<16x16xf32>, vector<16x32xf32>, vector<16x32xf32> -> vector<16x32xf32>
    %c0_45 = arith.constant 0 : index
    %c192 = arith.constant 192 : index
    %130 = vector.load %arg22[%c0_45, %c192] : memref<16x256xf32, #tpu.memory_space<vmem>>, vector<16x32xf32>
    tpu.vector_store %arg22[%c0_45, %c192], %129 {strides = array<i32>} : memref<16x256xf32, #tpu.memory_space<vmem>>, vector<16x32xf32>,
    %131 = vector.extract_strided_slice %10 {offsets = [0, 224], sizes = [16, 32], strides = [1, 1]} : vector<16x768xf32> to vector<16x32xf32>
    %132 = vector.extract_strided_slice %10 {offsets = [0, 480], sizes = [16, 32], strides = [1, 1]} : vector<16x768xf32> to vector<16x32xf32>
    %133 = vector.extract_strided_slice %10 {offsets = [0, 736], sizes = [16, 32], strides = [1, 1]} : vector<16x768xf32> to vector<16x32xf32>
    %cst_46 = arith.constant dense<0.000000e+00> : vector<16x16xf32>
    %134 = tpu.matmul %131, %132, %cst_46 {dimension_numbers = #tpu.dot_dimension_numbers<[1], [1], [0], [0], [0, 0, 1, 0], [], []>} : vector<16x32xf32>, vector<16x32xf32>, vector<16x16xf32> -> vector<16x16xf32>
    %135 = arith.addf %134, %11 : vector<16x16xf32>
    %cst_47 = arith.constant dense<0xFF800000> : vector<16xf32>
    %136 = vector.multi_reduction <maximumf>, %135, %cst_47 [1] : vector<16x16xf32> to vector<16xf32>
    %137 = vector.shape_cast %136 : vector<16xf32> to vector<16x1xf32>
    %138 = vector.broadcast %137 : vector<16x1xf32> to vector<16x16xf32>
    %139 = arith.subf %135, %138 : vector<16x16xf32>
    %140 = math.exp %139 : vector<16x16xf32>
    %cst_48 = arith.constant dense<0.000000e+00> : vector<16xf32>
    %141 = vector.multi_reduction <add>, %140, %cst_48 [1] : vector<16x16xf32> to vector<16xf32>
    %142 = vector.shape_cast %141 : vector<16xf32> to vector<16x1xf32>
    %143 = tpu.reciprocal %142 {approx = true} : vector<16x1xf32> -> vector<16x1xf32>
    %144 = vector.broadcast %143 : vector<16x1xf32> to vector<16x16xf32>
    %145 = arith.mulf %140, %144 : vector<16x16xf32>
    %cst_49 = arith.constant dense<0.000000e+00> : vector<16x32xf32>
    %146 = tpu.matmul %145, %133, %cst_49 {dimension_numbers = #tpu.dot_dimension_numbers<[1], [0], [0], [1], [0, 0, 1, 1], [], []>} : vector<16x16xf32>, vector<16x32xf32>, vector<16x32xf32> -> vector<16x32xf32>
    %c0_50 = arith.constant 0 : index
    %c224 = arith.constant 224 : index
    %147 = vector.load %arg22[%c0_50, %c224] : memref<16x256xf32, #tpu.memory_space<vmem>>, vector<16x32xf32>
    tpu.vector_store %arg22[%c0_50, %c224], %146 {strides = array<i32>} : memref<16x256xf32, #tpu.memory_space<vmem>>, vector<16x32xf32>,
    %c0_51 = arith.constant 0 : index
    %c0_52 = arith.constant 0 : index
    %148 = vector.load %arg22[%c0_51, %c0_52] : memref<16x256xf32, #tpu.memory_space<vmem>>, vector<16x256xf32>
    %c0_53 = arith.constant 0 : index
    %c0_54 = arith.constant 0 : index
    %c0_55 = arith.constant 0 : index
    %149 = vector.load %arg10[%c0_53, %c0_54, %c0_55] : memref<1x256x256xf32, #tpu.memory_space<vmem>>, vector<1x256x256xf32>
    %150 = vector.shape_cast %149 : vector<1x256x256xf32> to vector<256x256xf32>
    %cst_56 = arith.constant dense<0.000000e+00> : vector<16x256xf32>
    %151 = tpu.matmul %148, %150, %cst_56 {dimension_numbers = #tpu.dot_dimension_numbers<[1], [0], [0], [1], [0, 0, 1, 1], [], []>} : vector<16x256xf32>, vector<256x256xf32>, vector<16x256xf32> -> vector<16x256xf32>
    %c0_57 = arith.constant 0 : index
    %c0_58 = arith.constant 0 : index
    %c0_59 = arith.constant 0 : index
    %152 = vector.load %arg11[%c0_57, %c0_58, %c0_59] : memref<1x1x256xf32, #tpu.memory_space<vmem>>, vector<1x1x256xf32>
    %153 = vector.shape_cast %152 : vector<1x1x256xf32> to vector<1x256xf32>
    %154 = vector.broadcast %153 : vector<1x256xf32> to vector<16x256xf32>
    %155 = arith.addf %151, %154 : vector<16x256xf32>
    %156 = arith.addf %3, %155 : vector<16x256xf32>
    %c0_60 = arith.constant 0 : index
    %c0_61 = arith.constant 0 : index
    %c0_62 = arith.constant 0 : index
    %157 = vector.load %arg12[%c0_60, %c0_61, %c0_62] : memref<1x1x256xf32, #tpu.memory_space<vmem>>, vector<1x1x256xf32>
    %158 = vector.shape_cast %157 : vector<1x1x256xf32> to vector<1x256xf32>
    %c0_63 = arith.constant 0 : index
    %c0_64 = arith.constant 0 : index
    %c0_65 = arith.constant 0 : index
    %159 = vector.load %arg13[%c0_63, %c0_64, %c0_65] : memref<1x1x256xf32, #tpu.memory_space<vmem>>, vector<1x1x256xf32>
    %160 = vector.shape_cast %159 : vector<1x1x256xf32> to vector<1x256xf32>
    %cst_66 = arith.constant dense<0.000000e+00> : vector<16xf32>
    %161 = vector.multi_reduction <add>, %156, %cst_66 [1] : vector<16x256xf32> to vector<16xf32>
    %162 = vector.shape_cast %161 : vector<16xf32> to vector<16x1xf32>
    %cst_67 = arith.constant 2.560000e+02 : f32
    %163 = vector.broadcast %cst_67 : f32 to vector<16x1xf32>
    %164 = arith.divf %162, %163 : vector<16x1xf32>
    %165 = vector.broadcast %164 : vector<16x1xf32> to vector<16x256xf32>
    %166 = arith.subf %156, %165 : vector<16x256xf32>
    %167 = arith.mulf %166, %166 : vector<16x256xf32>
    %cst_68 = arith.constant dense<0.000000e+00> : vector<16xf32>
    %168 = vector.multi_reduction <add>, %167, %cst_68 [1] : vector<16x256xf32> to vector<16xf32>
    %169 = vector.shape_cast %168 : vector<16xf32> to vector<16x1xf32>
    %cst_69 = arith.constant 2.560000e+02 : f32
    %170 = vector.broadcast %cst_69 : f32 to vector<16x1xf32>
    %171 = arith.divf %169, %170 : vector<16x1xf32>
    %cst_70 = arith.constant 9.99999974E-6 : f32
    %172 = vector.broadcast %cst_70 : f32 to vector<16x1xf32>
    %173 = arith.addf %171, %172 : vector<16x1xf32>
    %174 = math.rsqrt %173 : vector<16x1xf32>
    %175 = vector.broadcast %174 : vector<16x1xf32> to vector<16x256xf32>
    %176 = arith.mulf %166, %175 : vector<16x256xf32>
    %177 = vector.broadcast %158 : vector<1x256xf32> to vector<16x256xf32>
    %178 = arith.mulf %176, %177 : vector<16x256xf32>
    %179 = vector.broadcast %160 : vector<1x256xf32> to vector<16x256xf32>
    %180 = arith.addf %178, %179 : vector<16x256xf32>
    %c0_71 = arith.constant 0 : index
    %c0_72 = arith.constant 0 : index
    %c0_73 = arith.constant 0 : index
    %181 = vector.load %arg14[%c0_71, %c0_72, %c0_73] : memref<1x256x256xf32, #tpu.memory_space<vmem>>, vector<1x256x256xf32>
    %182 = vector.shape_cast %181 : vector<1x256x256xf32> to vector<256x256xf32>
    %cst_74 = arith.constant dense<0.000000e+00> : vector<16x256xf32>
    %183 = tpu.matmul %180, %182, %cst_74 {dimension_numbers = #tpu.dot_dimension_numbers<[1], [0], [0], [1], [0, 0, 1, 1], [], []>} : vector<16x256xf32>, vector<256x256xf32>, vector<16x256xf32> -> vector<16x256xf32>
    %c0_75 = arith.constant 0 : index
    %c0_76 = arith.constant 0 : index
    %c0_77 = arith.constant 0 : index
    %184 = vector.load %arg15[%c0_75, %c0_76, %c0_77] : memref<1x1x256xf32, #tpu.memory_space<vmem>>, vector<1x1x256xf32>
    %185 = vector.shape_cast %184 : vector<1x1x256xf32> to vector<1x256xf32>
    %186 = vector.broadcast %185 : vector<1x256xf32> to vector<16x256xf32>
    %187 = arith.addf %183, %186 : vector<16x256xf32>
    %cst_78 = arith.constant 0.000000e+00 : f32
    %188 = vector.broadcast %cst_78 : f32 to vector<16x256xf32>
    %189 = arith.maximumf %187, %188 : vector<16x256xf32>
    %c0_79 = arith.constant 0 : index
    %c0_80 = arith.constant 0 : index
    %c0_81 = arith.constant 0 : index
    %190 = vector.load %arg16[%c0_79, %c0_80, %c0_81] : memref<1x256x256xf32, #tpu.memory_space<vmem>>, vector<1x256x256xf32>
    %191 = vector.shape_cast %190 : vector<1x256x256xf32> to vector<256x256xf32>
    %cst_82 = arith.constant dense<0.000000e+00> : vector<16x256xf32>
    %192 = tpu.matmul %189, %191, %cst_82 {dimension_numbers = #tpu.dot_dimension_numbers<[1], [0], [0], [1], [0, 0, 1, 1], [], []>} : vector<16x256xf32>, vector<256x256xf32>, vector<16x256xf32> -> vector<16x256xf32>
    %c0_83 = arith.constant 0 : index
    %c0_84 = arith.constant 0 : index
    %c0_85 = arith.constant 0 : index
    %193 = vector.load %arg17[%c0_83, %c0_84, %c0_85] : memref<1x1x256xf32, #tpu.memory_space<vmem>>, vector<1x1x256xf32>
    %194 = vector.shape_cast %193 : vector<1x1x256xf32> to vector<1x256xf32>
    %195 = vector.broadcast %194 : vector<1x256xf32> to vector<16x256xf32>
    %196 = arith.addf %192, %195 : vector<16x256xf32>
    %197 = arith.addf %180, %196 : vector<16x256xf32>
    %c0_86 = arith.constant 0 : index
    %c0_87 = arith.constant 0 : index
    %c0_88 = arith.constant 0 : index
    %198 = vector.load %arg18[%c0_86, %c0_87, %c0_88] : memref<1x1x256xf32, #tpu.memory_space<vmem>>, vector<1x1x256xf32>
    %199 = vector.shape_cast %198 : vector<1x1x256xf32> to vector<1x256xf32>
    %c0_89 = arith.constant 0 : index
    %c0_90 = arith.constant 0 : index
    %c0_91 = arith.constant 0 : index
    %200 = vector.load %arg19[%c0_89, %c0_90, %c0_91] : memref<1x1x256xf32, #tpu.memory_space<vmem>>, vector<1x1x256xf32>
    %201 = vector.shape_cast %200 : vector<1x1x256xf32> to vector<1x256xf32>
    %cst_92 = arith.constant dense<0.000000e+00> : vector<16xf32>
    %202 = vector.multi_reduction <add>, %197, %cst_92 [1] : vector<16x256xf32> to vector<16xf32>
    %203 = vector.shape_cast %202 : vector<16xf32> to vector<16x1xf32>
    %cst_93 = arith.constant 2.560000e+02 : f32
    %204 = vector.broadcast %cst_93 : f32 to vector<16x1xf32>
    %205 = arith.divf %203, %204 : vector<16x1xf32>
    %206 = vector.broadcast %205 : vector<16x1xf32> to vector<16x256xf32>
    %207 = arith.subf %197, %206 : vector<16x256xf32>
    %208 = arith.mulf %207, %207 : vector<16x256xf32>
    %cst_94 = arith.constant dense<0.000000e+00> : vector<16xf32>
    %209 = vector.multi_reduction <add>, %208, %cst_94 [1] : vector<16x256xf32> to vector<16xf32>
    %210 = vector.shape_cast %209 : vector<16xf32> to vector<16x1xf32>
    %cst_95 = arith.constant 2.560000e+02 : f32
    %211 = vector.broadcast %cst_95 : f32 to vector<16x1xf32>
    %212 = arith.divf %210, %211 : vector<16x1xf32>
    %cst_96 = arith.constant 9.99999974E-6 : f32
    %213 = vector.broadcast %cst_96 : f32 to vector<16x1xf32>
    %214 = arith.addf %212, %213 : vector<16x1xf32>
    %215 = math.rsqrt %214 : vector<16x1xf32>
    %216 = vector.broadcast %215 : vector<16x1xf32> to vector<16x256xf32>
    %217 = arith.mulf %207, %216 : vector<16x256xf32>
    %218 = vector.broadcast %199 : vector<1x256xf32> to vector<16x256xf32>
    %219 = arith.mulf %217, %218 : vector<16x256xf32>
    %220 = vector.broadcast %201 : vector<1x256xf32> to vector<16x256xf32>
    %221 = arith.addf %219, %220 : vector<16x256xf32>
    %c0_97 = arith.constant 0 : index
    %c0_98 = arith.constant 0 : index
    %222 = vector.load %arg21[%c0_97, %c0_98] : memref<16x256xf32, #tpu.memory_space<vmem>>, vector<16x256xf32>
    tpu.vector_store %arg21[%c0_97, %c0_98], %221 {strides = array<i32>} : memref<16x256xf32, #tpu.memory_space<vmem>>, vector<16x256xf32>,
    %c1_i32 = arith.constant 1 : i32
    %223 = arith.cmpi eq, %arg0, %c1_i32 : i32
    %224 = arith.extui %223 : i1 to i32
    %c0_i32_99 = arith.constant 0 : i32
    %225 = arith.cmpi ne, %224, %c0_i32_99 : i32
    scf.if %225 {
      %c0_100 = arith.constant 0 : index
      %c0_101 = arith.constant 0 : index
      %226 = vector.load %arg5[%c0_100, %c0_101] : memref<2x16xf32, #tpu.memory_space<vmem>>, vector<2x16xf32>
      %cst_102 = arith.constant dense<0.000000e+00> : vector<2x256xf32>
      %227 = tpu.matmul %226, %221, %cst_102 {dimension_numbers = #tpu.dot_dimension_numbers<[1], [0], [0], [1], [0, 0, 1, 1], [], []>} : vector<2x16xf32>, vector<16x256xf32>, vector<2x256xf32> -> vector<2x256xf32>
      %c0_103 = arith.constant 0 : index
      %c0_104 = arith.constant 0 : index
      %228 = vector.load %arg6[%c0_103, %c0_104] : memref<256x128xf32, #tpu.memory_space<vmem>>, vector<256x128xf32>
      %cst_105 = arith.constant dense<0.000000e+00> : vector<2x128xf32>
      %229 = tpu.matmul %227, %228, %cst_105 {dimension_numbers = #tpu.dot_dimension_numbers<[1], [0], [0], [1], [0, 0, 1, 1], [], []>} : vector<2x256xf32>, vector<256x128xf32>, vector<2x128xf32> -> vector<2x128xf32>
      %c0_106 = arith.constant 0 : index
      %c0_107 = arith.constant 0 : index
      %230 = vector.load %arg7[%c0_106, %c0_107] : memref<1x128xf32, #tpu.memory_space<vmem>>, vector<1x128xf32>
      %231 = vector.broadcast %230 : vector<1x128xf32> to vector<2x128xf32>
      %232 = arith.addf %229, %231 : vector<2x128xf32>
      %233 = arith.mulf %232, %232 : vector<2x128xf32>
      %cst_108 = arith.constant dense<0.000000e+00> : vector<2xf32>
      %234 = vector.multi_reduction <add>, %233, %cst_108 [1] : vector<2x128xf32> to vector<2xf32>
      %235 = vector.shape_cast %234 : vector<2xf32> to vector<2x1xf32>
      %236 = math.sqrt %235 : vector<2x1xf32>
      %cst_109 = arith.constant 9.99999996E-13 : f32
      %237 = vector.broadcast %cst_109 : f32 to vector<2x1xf32>
      %238 = arith.maximumf %236, %237 : vector<2x1xf32>
      %239 = vector.broadcast %238 : vector<2x1xf32> to vector<2x128xf32>
      %240 = arith.divf %232, %239 : vector<2x128xf32>
      %c0_110 = arith.constant 0 : index
      %c0_111 = arith.constant 0 : index
      %241 = vector.load %arg20[%c0_110, %c0_111] : memref<2x128xf32, #tpu.memory_space<vmem>>, vector<2x128xf32>
      tpu.vector_store %arg20[%c0_110, %c0_111], %240 {strides = array<i32>} : memref<2x128xf32, #tpu.memory_space<vmem>>, vector<2x128xf32>,
    } else {
    }
    return
  }
  func.func @transform_0(%arg0: i32) -> (i32, i32) {
    %c0_i32 = arith.constant 0 : i32
    %c0_i32_0 = arith.constant 0 : i32
    %c0_i32_1 = arith.constant 0 : i32
    return %c0_i32, %c0_i32_0 : i32, i32
  }
  func.func @transform_1(%arg0: i32) -> (i32, i32) {
    %c0_i32 = arith.constant 0 : i32
    %c0_i32_0 = arith.constant 0 : i32
    %c0_i32_1 = arith.constant 0 : i32
    return %c0_i32, %c0_i32_0 : i32, i32
  }
  func.func @transform_2(%arg0: i32) -> (i32, i32) {
    %c0_i32 = arith.constant 0 : i32
    %c0_i32_0 = arith.constant 0 : i32
    %c0_i32_1 = arith.constant 0 : i32
    return %c0_i32, %c0_i32_0 : i32, i32
  }
  func.func @transform_3(%arg0: i32) -> (i32, i32) {
    %c0_i32 = arith.constant 0 : i32
    %c0_i32_0 = arith.constant 0 : i32
    %c0_i32_1 = arith.constant 0 : i32
    return %c0_i32, %c0_i32_0 : i32, i32
  }
  func.func @transform_4(%arg0: i32) -> (i32, i32) {
    %c0_i32 = arith.constant 0 : i32
    %c0_i32_0 = arith.constant 0 : i32
    %c0_i32_1 = arith.constant 0 : i32
    return %c0_i32, %c0_i32_0 : i32, i32
  }
  func.func @transform_5(%arg0: i32) -> (i32, i32) {
    %c0_i32 = arith.constant 0 : i32
    %c0_i32_0 = arith.constant 0 : i32
    %c0_i32_1 = arith.constant 0 : i32
    return %c0_i32, %c0_i32_0 : i32, i32
  }
  func.func @transform_6(%arg0: i32) -> (i32, i32) {
    %c0_i32 = arith.constant 0 : i32
    %c0_i32_0 = arith.constant 0 : i32
    %c0_i32_1 = arith.constant 0 : i32
    return %c0_i32, %c0_i32_0 : i32, i32
  }
  func.func @transform_7(%arg0: i32) -> (i32, i32, i32) {
    %c0_i32 = arith.constant 0 : i32
    %c0_i32_0 = arith.constant 0 : i32
    %c0_i32_1 = arith.constant 0 : i32
    return %arg0, %c0_i32, %c0_i32_0 : i32, i32, i32
  }
  func.func @transform_8(%arg0: i32) -> (i32, i32, i32) {
    %c0_i32 = arith.constant 0 : i32
    %c0_i32_0 = arith.constant 0 : i32
    %c0_i32_1 = arith.constant 0 : i32
    return %arg0, %c0_i32, %c0_i32_0 : i32, i32, i32
  }
  func.func @transform_9(%arg0: i32) -> (i32, i32, i32) {
    %c0_i32 = arith.constant 0 : i32
    %c0_i32_0 = arith.constant 0 : i32
    %c0_i32_1 = arith.constant 0 : i32
    return %arg0, %c0_i32, %c0_i32_0 : i32, i32, i32
  }
  func.func @transform_10(%arg0: i32) -> (i32, i32, i32) {
    %c0_i32 = arith.constant 0 : i32
    %c0_i32_0 = arith.constant 0 : i32
    %c0_i32_1 = arith.constant 0 : i32
    return %arg0, %c0_i32, %c0_i32_0 : i32, i32, i32
  }
  func.func @transform_11(%arg0: i32) -> (i32, i32, i32) {
    %c0_i32 = arith.constant 0 : i32
    %c0_i32_0 = arith.constant 0 : i32
    %c0_i32_1 = arith.constant 0 : i32
    return %arg0, %c0_i32, %c0_i32_0 : i32, i32, i32
  }
  func.func @transform_12(%arg0: i32) -> (i32, i32, i32) {
    %c0_i32 = arith.constant 0 : i32
    %c0_i32_0 = arith.constant 0 : i32
    %c0_i32_1 = arith.constant 0 : i32
    return %arg0, %c0_i32, %c0_i32_0 : i32, i32, i32
  }
  func.func @transform_13(%arg0: i32) -> (i32, i32, i32) {
    %c0_i32 = arith.constant 0 : i32
    %c0_i32_0 = arith.constant 0 : i32
    %c0_i32_1 = arith.constant 0 : i32
    return %arg0, %c0_i32, %c0_i32_0 : i32, i32, i32
  }
  func.func @transform_14(%arg0: i32) -> (i32, i32, i32) {
    %c0_i32 = arith.constant 0 : i32
    %c0_i32_0 = arith.constant 0 : i32
    %c0_i32_1 = arith.constant 0 : i32
    return %arg0, %c0_i32, %c0_i32_0 : i32, i32, i32
  }
  func.func @transform_15(%arg0: i32) -> (i32, i32, i32) {
    %c0_i32 = arith.constant 0 : i32
    %c0_i32_0 = arith.constant 0 : i32
    %c0_i32_1 = arith.constant 0 : i32
    return %arg0, %c0_i32, %c0_i32_0 : i32, i32, i32
  }
  func.func @transform_16(%arg0: i32) -> (i32, i32, i32) {
    %c0_i32 = arith.constant 0 : i32
    %c0_i32_0 = arith.constant 0 : i32
    %c0_i32_1 = arith.constant 0 : i32
    return %arg0, %c0_i32, %c0_i32_0 : i32, i32, i32
  }
  func.func @transform_17(%arg0: i32) -> (i32, i32, i32) {
    %c0_i32 = arith.constant 0 : i32
    %c0_i32_0 = arith.constant 0 : i32
    %c0_i32_1 = arith.constant 0 : i32
    return %arg0, %c0_i32, %c0_i32_0 : i32, i32, i32
  }
  func.func @transform_18(%arg0: i32) -> (i32, i32, i32) {
    %c0_i32 = arith.constant 0 : i32
    %c0_i32_0 = arith.constant 0 : i32
    %c0_i32_1 = arith.constant 0 : i32
    return %arg0, %c0_i32, %c0_i32_0 : i32, i32, i32
  }
  func.func @transform_19(%arg0: i32) -> (i32, i32) {
    %c0_i32 = arith.constant 0 : i32
    %c0_i32_0 = arith.constant 0 : i32
    %c0_i32_1 = arith.constant 0 : i32
    return %c0_i32, %c0_i32_0 : i32, i32
  }
}

</mosaic_0001>

<llo_original>
// kernel: mul.5
$region0: #{mul.5}
  %s0 = inlined_call_operand.vmem [shape: f32[2,8], index: 0, kind: input, shape index: {}]
  %s1 = inlined_call_operand.vmem [shape: f32[16], index: 1, kind: output, shape index: {}]
  $region1: #{mul.5} parent=0
    #allocation0 [shape = 'u8[4096]{0}', space=vmem, size = 0x1000, scoped, tag = 'scoped mem for output reshape']
    #allocation1 [shape = 'u8[4096]{0}', space=vmem, size = 0x1000, scoped, tag = 'scoped mem for input reshape']
    %s3 = sshllo.u32 0, 2
    %v4 = vld [vmem:[%s0] sm:%s3]
    %5 = vst [vmem:[#allocation1] sm:%s3] %v4
    %v6 = vld [vmem:[#allocation1] sm:$0x1]
    %vm7 = vcmask 64512
    %8 = vst.msk [vmem:[#allocation0] sm:$0x1] %vm7, %v6
    %s9 = scalar_lea.vmem [#allocation1], 1
    %v10 = vld [vmem:[%s9] sm:$0x1]
    %11 = vrot.lane.b32.xlu0 %v10, 8
    %v12 = vpop.permute.xlu0 %11
    %vm13 = vcmask 130112
    %14 = vst.msk [vmem:[#allocation0] sm:$0x1] %vm13, %v12
    %s16 = sshllo.u32 0, 1
    %v18 = vld [vmem:[#allocation0] sm:%s16]
    %s19 = sshllo.u32 0, 1
    %20 = vst [vmem:[%s1] sm:%s19] %v18

// kernel: eq.15
$region0: #{eq.15}
  %s0 = inlined_call_operand.vmem [shape: s32[2,8], index: 0, kind: input, shape index: {}]
  %s1 = inlined_call_operand.vmem [shape: s32[16], index: 1, kind: output, shape index: {}]
  $region1: #{eq.15} parent=0
    #allocation0 [shape = 'u8[4096]{0}', space=vmem, size = 0x1000, scoped, tag = 'scoped mem for output reshape']
    #allocation1 [shape = 'u8[4096]{0}', space=vmem, size = 0x1000, scoped, tag = 'scoped mem for input reshape']
    %s3 = sshllo.u32 0, 2
    %v4 = vld [vmem:[%s0] sm:%s3]
    %5 = vst [vmem:[#allocation1] sm:%s3] %v4
    %v6 = vld [vmem:[#allocation1] sm:$0x1]
    %vm7 = vcmask 64512
    %8 = vst.msk [vmem:[#allocation0] sm:$0x1] %vm7, %v6
    %s9 = scalar_lea.vmem [#allocation1], 1
    %v10 = vld [vmem:[%s9] sm:$0x1]
    %11 = vrot.lane.b32.xlu0 %v10, 8
    %v12 = vpop.permute.xlu0 %11
    %vm13 = vcmask 130112
    %14 = vst.msk [vmem:[#allocation0] sm:$0x1] %vm13, %v12
    %s16 = sshllo.u32 0, 1
    %v18 = vld [vmem:[#allocation0] sm:%s16]
    %s19 = sshllo.u32 0, 1
    %20 = vst [vmem:[%s1] sm:%s19] %v18

// kernel: mt_forward.1
$region0: #{mt_forward.1}
  #allocation0 [shape = 'u32[]', space=smem, size = 0x4, offset = 0x4, fixed_abs, tag = 'smem constant byte address 0x4 - core index']
  #allocation1 [shape = 'u32[144,128]{1,0:T(1,128)}', space=vmem, size = 0x12000, scoped, tag = 'internal scratch']
  #allocation2 [shape = 'f32[16,256]{1,0:T(8,128)}', space=vmem, size = 0x4000, scoped, tag = 'scratch operand']
  #allocation3 [shape = 'f32[16,256]{1,0:T(8,128)}', space=vmem, size = 0x4000, scoped, tag = 'scratch operand']
  %s0 = inlined_call_operand.hbm [shape: f32[16,128], index: 0, kind: input, shape index: {}]
  %s1 = inlined_call_operand.hbm [shape: f32[128,256], index: 1, kind: input, shape index: {}]
  %s2 = inlined_call_operand.hbm [shape: f32[1,256], index: 2, kind: input, shape index: {}]
  %s3 = inlined_call_operand.vmem [shape: f32[16,16], index: 3, kind: input, shape index: {}]
  %s4 = inlined_call_operand.vmem [shape: f32[2,16], index: 4, kind: input, shape index: {}]
  %s5 = inlined_call_operand.hbm [shape: f32[256,128], index: 5, kind: input, shape index: {}]
  %s6 = inlined_call_operand.hbm [shape: f32[1,128], index: 6, kind: input, shape index: {}]
  %s7 = inlined_call_operand.hbm [shape: f32[2,256,768], index: 7, kind: input, shape index: {}]
  %s8 = inlined_call_operand.hbm [shape: f32[2,1,768], index: 8, kind: input, shape index: {}]
  %s9 = inlined_call_operand.hbm [shape: f32[2,256,256], index: 9, kind: input, shape index: {}]
  %s10 = inlined_call_operand.hbm [shape: f32[2,1,256], index: 10, kind: input, shape index: {}]
  %s11 = inlined_call_operand.hbm [shape: f32[2,1,256], index: 11, kind: input, shape index: {}]
  %s12 = inlined_call_operand.hbm [shape: f32[2,1,256], index: 12, kind: input, shape index: {}]
  %s13 = inlined_call_operand.hbm [shape: f32[2,256,256], index: 13, kind: input, shape index: {}]
  %s14 = inlined_call_operand.hbm [shape: f32[2,1,256], index: 14, kind: input, shape index: {}]
  %s15 = inlined_call_operand.hbm [shape: f32[2,256,256], index: 15, kind: input, shape index: {}]
  %s16 = inlined_call_operand.hbm [shape: f32[2,1,256], index: 16, kind: input, shape index: {}]
  %s17 = inlined_call_operand.hbm [shape: f32[2,1,256], index: 17, kind: input, shape index: {}]
  %s18 = inlined_call_operand.hbm [shape: f32[2,1,256], index: 18, kind: input, shape index: {}]
  %s19 = inlined_call_operand.hbm [shape: f32[2,128], index: 19, kind: output, shape index: {}]
  %s20 = sld [smem:[#allocation0]]
  $region185: #{mt_forward.1} parent=0
    _
  %s22 = ssub.s32 1, %s20
  %s23 = scalar_select 0, %s22, %s20
  $region1: #{mt_forward.1} parent=0
    #allocation4 [shape = 'u8[8192]{0}', space=vmem, size = 0x2000, scoped, tag = 'input window, operand 0, single buffered']
    #allocation5 [shape = 's32[2]{0}', space=sflag, size = 0x8, scoped, tag = 'scoped memory for mt_forward.1']
    #allocation6 [shape = 's32[2]{0}', space=sflag, size = 0x8, scoped, tag = 'scoped memory for mt_forward.1']
    #allocation7 [shape = 'u8[131072]{0}', space=vmem, size = 0x20000, scoped, tag = 'input window, operand 1, single buffered']
    #allocation8 [shape = 's32[1]{0}', space=sflag, size = 0x4, scoped, tag = 'scoped memory for mt_forward.1']
    #allocation9 [shape = 'u8[1024]{0}', space=vmem, size = 0x400, scoped, tag = 'input window, operand 2, single buffered']
    #allocation10 [shape = 'u8[131072]{0}', space=vmem, size = 0x20000, scoped, tag = 'input window, operand 5, single buffered']
    #allocation11 [shape = 's32[1]{0}', space=sflag, size = 0x4, scoped, tag = 'scoped memory for mt_forward.1']
    #allocation12 [shape = 'u8[512]{0}', space=vmem, size = 0x400, scoped, tag = 'input window, operand 6, single buffered']
    #allocation13 [shape = 'u8[1572864]{0}', space=vmem, size = 0x180000, scoped, tag = 'input window, operand 7']
    #allocation14 [shape = 's32[2]{0}', space=sflag, size = 0x8, scoped, tag = 'scoped memory for mt_forward.1']
    #allocation15 [shape = 'u8[6144]{0}', space=vmem, size = 0x1800, scoped, tag = 'input window, operand 8']
    #allocation16 [shape = 'u8[524288]{0}', space=vmem, size = 0x80000, scoped, tag = 'input window, operand 9']
    #allocation17 [shape = 's32[2]{0}', space=sflag, size = 0x8, scoped, tag = 'scoped memory for mt_forward.1']
    #allocation18 [shape = 'u8[2048]{0}', space=vmem, size = 0x800, scoped, tag = 'input window, operand 10']
    #allocation19 [shape = 'u8[2048]{0}', space=vmem, size = 0x800, scoped, tag = 'input window, operand 11']
    #allocation20 [shape = 's32[2]{0}', space=sflag, size = 0x8, scoped, tag = 'scoped memory for mt_forward.1']
    #allocation21 [shape = 'u8[2048]{0}', space=vmem, size = 0x800, scoped, tag = 'input window, operand 12']
    #allocation22 [shape = 'u8[524288]{0}', space=vmem, size = 0x80000, scoped, tag = 'input window, operand 13']
    #allocation23 [shape = 's32[2]{0}', space=sflag, size = 0x8, scoped, tag = 'scoped memory for mt_forward.1']
    #allocation24 [shape = 'u8[2048]{0}', space=vmem, size = 0x800, scoped, tag = 'input window, operand 14']
    #allocation25 [shape = 'u8[524288]{0}', space=vmem, size = 0x80000, scoped, tag = 'input window, operand 15']
    #allocation26 [shape = 's32[2]{0}', space=sflag, size = 0x8, scoped, tag = 'scoped memory for mt_forward.1']
    #allocation27 [shape = 'u8[2048]{0}', space=vmem, size = 0x800, scoped, tag = 'input window, operand 16']
    #allocation28 [shape = 'u8[2048]{0}', space=vmem, size = 0x800, scoped, tag = 'input window, operand 17']
    #allocation29 [shape = 's32[2]{0}', space=sflag, size = 0x8, scoped, tag = 'scoped memory for mt_forward.1']
    #allocation30 [shape = 'u8[2048]{0}', space=vmem, size = 0x800, scoped, tag = 'input window, operand 18']
    #allocation31 [shape = 'u8[1024]{0}', space=vmem, size = 0x400, scoped, tag = 'output window, operand 0, single buffered']
    %24 = vsyncpa [#allocation5], 0
    %25 = vsyncpa [#allocation8], 0
    %26 = vsyncpa [#allocation11], 0
    %27 = vsyncpa [#allocation14], 0
    %s28 = scalar_lea.sflag [#allocation14], 1
    %29 = vsyncpa %s28, 0
    %30 = vsyncpa [#allocation17], 0
    %s31 = scalar_lea.sflag [#allocation17], 1
    %32 = vsyncpa %s31, 0
    %33 = vsyncpa [#allocation20], 0
    %s34 = scalar_lea.sflag [#allocation20], 1
    %35 = vsyncpa %s34, 0
    %36 = vsyncpa [#allocation23], 0
    %s37 = scalar_lea.sflag [#allocation23], 1
    %38 = vsyncpa %s37, 0
    %39 = vsyncpa [#allocation26], 0
    %s40 = scalar_lea.sflag [#allocation26], 1
    %41 = vsyncpa %s40, 0
    %42 = vsyncpa [#allocation29], 0
    %s43 = scalar_lea.sflag [#allocation29], 1
    %44 = vsyncpa %s43, 0
    %45 = vsyncpa [#allocation6], 0
    loop: start=0, step=1, limit=4
    $region2: #{mt_forward.1} parent=1 // loop_pre_header
      _
    $region3: #{mt_forward.1} parent=1 // loop_header
      %s47 = sphi 0, %s51
      %p48 = scmp.ge.s32.totalorder %s47, 4
      %s55 = sphi 0, %s55
      %s57 = sphi 0, %s55
      %s58 = sphi 0, %s57
      %s72 = sphi 0, %s58
      %s76 = sphi 0, %s76
      %s78 = sphi 0, %s76
      %s79 = sphi 0, %s78
      %s93 = sphi 0, %s79
      %s97 = sphi 0, %s97
      %s99 = sphi 0, %s97
      %s100 = sphi 0, %s99
      %s114 = sphi 0, %s100
      %s118 = sphi 0, %s118
      %s120 = sphi 0, %s118
      %s121 = sphi 0, %s120
      %s135 = sphi 0, %s121
      %s139 = sphi 0, %s139
      %s141 = sphi 0, %s139
      %s142 = sphi 0, %s141
      %s156 = sphi 0, %s142
      %s160 = sphi 0, %s160
      %s162 = sphi 0, %s160
      %s163 = sphi 0, %s162
      %s177 = sphi 0, %s163
      %s181 = sphi 0, %s181
      %s183 = sphi 0, %s181
      %s184 = sphi 0, %s183
      %s198 = sphi 0, %s184
      %s204 = sphi 0, %s206
      %s207 = sphi 0, %s204
      %s208 = sphi 0, %s207
      %s224 = sphi 0, %s208
      %s230 = sphi 0, %s232
      %s233 = sphi 0, %s230
      %s234 = sphi 0, %s233
      %s250 = sphi 0, %s234
      %s256 = sphi 0, %s258
      %s259 = sphi 0, %s256
      %s260 = sphi 0, %s259
      %s276 = sphi 0, %s260
      %s282 = sphi 0, %s284
      %s285 = sphi 0, %s282
      %s286 = sphi 0, %s285
      %s302 = sphi 0, %s286
      %s308 = sphi 0, %s310
      %s311 = sphi 0, %s308
      %s312 = sphi 0, %s311
      %s328 = sphi 0, %s312
      %s334 = sphi 0, %s336
      %s337 = sphi 0, %s334
      %s338 = sphi 0, %s337
      %s354 = sphi 0, %s338
      %s360 = sphi 0, %s362
      %s363 = sphi 0, %s360
      %s364 = sphi 0, %s363
      %s380 = sphi 0, %s364
      %s386 = sphi 0, %s388
      %s389 = sphi 0, %s386
      %s390 = sphi 0, %s389
      %s406 = sphi 0, %s390
      %s412 = sphi 0, %s414
      %s415 = sphi 0, %s412
      %s416 = sphi 0, %s415
      %s432 = sphi 0, %s416
      %s438 = sphi 0, %s440
      %s441 = sphi 0, %s438
      %s442 = sphi 0, %s441
      %s458 = sphi 0, %s442
      %s464 = sphi 0, %s466
      %s467 = sphi 0, %s464
      %s468 = sphi 0, %s467
      %s484 = sphi 0, %s468
      %s490 = sphi 0, %s492
      %s493 = sphi 0, %s490
      %s494 = sphi 0, %s493
      %s510 = sphi 0, %s494
      %s514 = sphi 0, %s514
      %s516 = sphi 0, %s514
      %s517 = sphi 0, %s516
      %s531 = sphi 0, %s517
    $region4: #{mt_forward.1} parent=1 // loop_header_branch
      %50 = sbr.rel (%p48) target = $region8
    $region5: #{mt_forward.1} parent=1 // loop_body
      %s52 = ssub.s32 %s47, 1
      %s53 = ssub.s32 %s47, 2
      %s54 = sadd.s32 %s47, 1
      %s56 = sadd.s32 %s55, 1
      %p59 = scmp.eq.s32.totalorder %s47, 1
      %p60 = scmp.ne.s32.totalorder %s55, %s57
      %p61 = scmp.eq.s32.totalorder %s47, 0
      %p62 = por %p60, %p61
      %p63 = scmp.ne.s32.totalorder %s55, %s57
      %p64 = scmp.eq.s32.totalorder %s52, 1
      %p65 = por %p63, %p64
      %p66 = scmp.ne.s32.totalorder %s57, %s58
      %p67 = scmp.eq.s32.totalorder %s52, 0
      %p68 = por %p66, %p67
      %p69 = scmp.ne.s32.totalorder %s57, %s58
      %p70 = scmp.eq.s32.totalorder %s53, 1
      %p71 = por %p69, %p70
      %p73 = scmp.ne.s32.totalorder %s58, %s72
      %p74 = scmp.eq.s32.totalorder %s53, 0
      %p75 = por %p73, %p74
      %s77 = sadd.s32 %s76, 1
      %p80 = scmp.eq.s32.totalorder %s47, 1
      %p81 = scmp.ne.s32.totalorder %s76, %s78
      %p82 = scmp.eq.s32.totalorder %s47, 0
      %p83 = por %p81, %p82
      %p84 = scmp.ne.s32.totalorder %s76, %s78
      %p85 = scmp.eq.s32.totalorder %s52, 1
      %p86 = por %p84, %p85
      %p87 = scmp.ne.s32.totalorder %s78, %s79
      %p88 = scmp.eq.s32.totalorder %s52, 0
      %p89 = por %p87, %p88
      %p90 = scmp.ne.s32.totalorder %s78, %s79
      %p91 = scmp.eq.s32.totalorder %s53, 1
      %p92 = por %p90, %p91
      %p94 = scmp.ne.s32.totalorder %s79, %s93
      %p95 = scmp.eq.s32.totalorder %s53, 0
      %p96 = por %p94, %p95
      %s98 = sadd.s32 %s97, 1
      %p101 = scmp.eq.s32.totalorder %s47, 1
      %p102 = scmp.ne.s32.totalorder %s97, %s99
      %p103 = scmp.eq.s32.totalorder %s47, 0
      %p104 = por %p102, %p103
      %p105 = scmp.ne.s32.totalorder %s97, %s99
      %p106 = scmp.eq.s32.totalorder %s52, 1
      %p107 = por %p105, %p106
      %p108 = scmp.ne.s32.totalorder %s99, %s100
      %p109 = scmp.eq.s32.totalorder %s52, 0
      %p110 = por %p108, %p109
      %p111 = scmp.ne.s32.totalorder %s99, %s100
      %p112 = scmp.eq.s32.totalorder %s53, 1
      %p113 = por %p111, %p112
      %p115 = scmp.ne.s32.totalorder %s100, %s114
      %p116 = scmp.eq.s32.totalorder %s53, 0
      %p117 = por %p115, %p116
      %s119 = sadd.s32 %s118, 1
      %p122 = scmp.eq.s32.totalorder %s47, 1
      %p123 = scmp.ne.s32.totalorder %s118, %s120
      %p124 = scmp.eq.s32.totalorder %s47, 0
      %p125 = por %p123, %p124
      %p126 = scmp.ne.s32.totalorder %s118, %s120
      %p127 = scmp.eq.s32.totalorder %s52, 1
      %p128 = por %p126, %p127
      %p129 = scmp.ne.s32.totalorder %s120, %s121
      %p130 = scmp.eq.s32.totalorder %s52, 0
      %p131 = por %p129, %p130
      %p132 = scmp.ne.s32.totalorder %s120, %s121
      %p133 = scmp.eq.s32.totalorder %s53, 1
      %p134 = por %p132, %p133
      %p136 = scmp.ne.s32.totalorder %s121, %s135
      %p137 = scmp.eq.s32.totalorder %s53, 0
      %p138 = por %p136, %p137
      %s140 = sadd.s32 %s139, 1
      %p143 = scmp.eq.s32.totalorder %s47, 1
      %p144 = scmp.ne.s32.totalorder %s139, %s141
      %p145 = scmp.eq.s32.totalorder %s47, 0
      %p146 = por %p144, %p145
      %p147 = scmp.ne.s32.totalorder %s139, %s141
      %p148 = scmp.eq.s32.totalorder %s52, 1
      %p149 = por %p147, %p148
      %p150 = scmp.ne.s32.totalorder %s141, %s142
      %p151 = scmp.eq.s32.totalorder %s52, 0
      %p152 = por %p150, %p151
      %p153 = scmp.ne.s32.totalorder %s141, %s142
      %p154 = scmp.eq.s32.totalorder %s53, 1
      %p155 = por %p153, %p154
      %p157 = scmp.ne.s32.totalorder %s142, %s156
      %p158 = scmp.eq.s32.totalorder %s53, 0
      %p159 = por %p157, %p158
      %s161 = sadd.s32 %s160, 1
      %p164 = scmp.eq.s32.totalorder %s47, 1
      %p165 = scmp.ne.s32.totalorder %s160, %s162
      %p166 = scmp.eq.s32.totalorder %s47, 0
      %p167 = por %p165, %p166
      %p168 = scmp.ne.s32.totalorder %s160, %s162
      %p169 = scmp.eq.s32.totalorder %s52, 1
      %p170 = por %p168, %p169
      %p171 = scmp.ne.s32.totalorder %s162, %s163
      %p172 = scmp.eq.s32.totalorder %s52, 0
      %p173 = por %p171, %p172
      %p174 = scmp.ne.s32.totalorder %s162, %s163
      %p175 = scmp.eq.s32.totalorder %s53, 1
      %p176 = por %p174, %p175
      %p178 = scmp.ne.s32.totalorder %s163, %s177
      %p179 = scmp.eq.s32.totalorder %s53, 0
      %p180 = por %p178, %p179
      %s182 = sadd.s32 %s181, 1
      %p185 = scmp.eq.s32.totalorder %s47, 1
      %p186 = scmp.ne.s32.totalorder %s181, %s183
      %p187 = scmp.eq.s32.totalorder %s47, 0
      %p188 = por %p186, %p187
      %p189 = scmp.ne.s32.totalorder %s181, %s183
      %p190 = scmp.eq.s32.totalorder %s52, 1
      %p191 = por %p189, %p190
      %p192 = scmp.ne.s32.totalorder %s183, %s184
      %p193 = scmp.eq.s32.totalorder %s52, 0
      %p194 = por %p192, %p193
      %p195 = scmp.ne.s32.totalorder %s183, %s184
      %p196 = scmp.eq.s32.totalorder %s53, 1
      %p197 = por %p195, %p196
      %p199 = scmp.ne.s32.totalorder %s184, %s198
      %p200 = scmp.eq.s32.totalorder %s53, 0
      %p201 = por %p199, %p200
      %s202 = ssub.s32 %s47, %s54
      %p203 = scmp.eq.s32.totalorder %s202, 0
      %s205 = sadd.s32 %s204, 1
      %s206 = scalar_select %p203, %s204, %s205
      %p209 = pneg %p203
      %p210 = scmp.eq.s32.totalorder %s47, 1
      %p211 = por %p209, %p210
      %p212 = scmp.ne.s32.totalorder %s204, %s207
      %p213 = scmp.eq.s32.totalorder %s47, 0
      %p214 = por %p212, %p213
      %p215 = scmp.ne.s32.totalorder %s204, %s207
      %p216 = scmp.eq.s32.totalorder %s52, 1
      %p217 = por %p215, %p216
      %p218 = scmp.ne.s32.totalorder %s207, %s208
      %p219 = scmp.eq.s32.totalorder %s52, 0
      %p220 = por %p218, %p219
      %p221 = scmp.ne.s32.totalorder %s207, %s208
      %p222 = scmp.eq.s32.totalorder %s53, 1
      %p223 = por %p221, %p222
      %p225 = scmp.ne.s32.totalorder %s208, %s224
      %p226 = scmp.eq.s32.totalorder %s53, 0
      %p227 = por %p225, %p226
      %s228 = ssub.s32 %s47, %s54
      %p229 = scmp.eq.s32.totalorder %s228, 0
      %s231 = sadd.s32 %s230, 1
      %s232 = scalar_select %p229, %s230, %s231
      %p235 = pneg %p229
      %p236 = scmp.eq.s32.totalorder %s47, 1
      %p237 = por %p235, %p236
      %p238 = scmp.ne.s32.totalorder %s230, %s233
      %p239 = scmp.eq.s32.totalorder %s47, 0
      %p240 = por %p238, %p239
      %p241 = scmp.ne.s32.totalorder %s230, %s233
      %p242 = scmp.eq.s32.totalorder %s52, 1
      %p243 = por %p241, %p242
      %p244 = scmp.ne.s32.totalorder %s233, %s234
      %p245 = scmp.eq.s32.totalorder %s52, 0
      %p246 = por %p244, %p245
      %p247 = scmp.ne.s32.totalorder %s233, %s234
      %p248 = scmp.eq.s32.totalorder %s53, 1
      %p249 = por %p247, %p248
      %p251 = scmp.ne.s32.totalorder %s234, %s250
      %p252 = scmp.eq.s32.totalorder %s53, 0
      %p253 = por %p251, %p252
      %s254 = ssub.s32 %s47, %s54
      %p255 = scmp.eq.s32.totalorder %s254, 0
      %s257 = sadd.s32 %s256, 1
      %s258 = scalar_select %p255, %s256, %s257
      %p261 = pneg %p255
      %p262 = scmp.eq.s32.totalorder %s47, 1
      %p263 = por %p261, %p262
      %p264 = scmp.ne.s32.totalorder %s256, %s259
      %p265 = scmp.eq.s32.totalorder %s47, 0
      %p266 = por %p264, %p265
      %p267 = scmp.ne.s32.totalorder %s256, %s259
      %p268 = scmp.eq.s32.totalorder %s52, 1
      %p269 = por %p267, %p268
      %p270 = scmp.ne.s32.totalorder %s259, %s260
      %p271 = scmp.eq.s32.totalorder %s52, 0
      %p272 = por %p270, %p271
      %p273 = scmp.ne.s32.totalorder %s259, %s260
      %p274 = scmp.eq.s32.totalorder %s53, 1
      %p275 = por %p273, %p274
      %p277 = scmp.ne.s32.totalorder %s260, %s276
      %p278 = scmp.eq.s32.totalorder %s53, 0
      %p279 = por %p277, %p278
      %s280 = ssub.s32 %s47, %s54
      %p281 = scmp.eq.s32.totalorder %s280, 0
      %s283 = sadd.s32 %s282, 1
      %s284 = scalar_select %p281, %s282, %s283
      %p287 = pneg %p281
      %p288 = scmp.eq.s32.totalorder %s47, 1
      %p289 = por %p287, %p288
      %p290 = scmp.ne.s32.totalorder %s282, %s285
      %p291 = scmp.eq.s32.totalorder %s47, 0
      %p292 = por %p290, %p291
      %p293 = scmp.ne.s32.totalorder %s282, %s285
      %p294 = scmp.eq.s32.totalorder %s52, 1
      %p295 = por %p293, %p294
      %p296 = scmp.ne.s32.totalorder %s285, %s286
      %p297 = scmp.eq.s32.totalorder %s52, 0
      %p298 = por %p296, %p297
      %p299 = scmp.ne.s32.totalorder %s285, %s286
      %p300 = scmp.eq.s32.totalorder %s53, 1
      %p301 = por %p299, %p300
      %p303 = scmp.ne.s32.totalorder %s286, %s302
      %p304 = scmp.eq.s32.totalorder %s53, 0
      %p305 = por %p303, %p304
      %s306 = ssub.s32 %s47, %s54
      %p307 = scmp.eq.s32.totalorder %s306, 0
      %s309 = sadd.s32 %s308, 1
      %s310 = scalar_select %p307, %s308, %s309
      %p313 = pneg %p307
      %p314 = scmp.eq.s32.totalorder %s47, 1
      %p315 = por %p313, %p314
      %p316 = scmp.ne.s32.totalorder %s308, %s311
      %p317 = scmp.eq.s32.totalorder %s47, 0
      %p318 = por %p316, %p317
      %p319 = scmp.ne.s32.totalorder %s308, %s311
      %p320 = scmp.eq.s32.totalorder %s52, 1
      %p321 = por %p319, %p320
      %p322 = scmp.ne.s32.totalorder %s311, %s312
      %p323 = scmp.eq.s32.totalorder %s52, 0
      %p324 = por %p322, %p323
      %p325 = scmp.ne.s32.totalorder %s311, %s312
      %p326 = scmp.eq.s32.totalorder %s53, 1
      %p327 = por %p325, %p326
      %p329 = scmp.ne.s32.totalorder %s312, %s328
      %p330 = scmp.eq.s32.totalorder %s53, 0
      %p331 = por %p329, %p330
      %s332 = ssub.s32 %s47, %s54
      %p333 = scmp.eq.s32.totalorder %s332, 0
      %s335 = sadd.s32 %s334, 1
      %s336 = scalar_select %p333, %s334, %s335
      %p339 = pneg %p333
      %p340 = scmp.eq.s32.totalorder %s47, 1
      %p341 = por %p339, %p340
      %p342 = scmp.ne.s32.totalorder %s334, %s337
      %p343 = scmp.eq.s32.totalorder %s47, 0
      %p344 = por %p342, %p343
      %p345 = scmp.ne.s32.totalorder %s334, %s337
      %p346 = scmp.eq.s32.totalorder %s52, 1
      %p347 = por %p345, %p346
      %p348 = scmp.ne.s32.totalorder %s337, %s338
      %p349 = scmp.eq.s32.totalorder %s52, 0
      %p350 = por %p348, %p349
      %p351 = scmp.ne.s32.totalorder %s337, %s338
      %p352 = scmp.eq.s32.totalorder %s53, 1
      %p353 = por %p351, %p352
      %p355 = scmp.ne.s32.totalorder %s338, %s354
      %p356 = scmp.eq.s32.totalorder %s53, 0
      %p357 = por %p355, %p356
      %s358 = ssub.s32 %s47, %s54
      %p359 = scmp.eq.s32.totalorder %s358, 0
      %s361 = sadd.s32 %s360, 1
      %s362 = scalar_select %p359, %s360, %s361
      %p365 = pneg %p359
      %p366 = scmp.eq.s32.totalorder %s47, 1
      %p367 = por %p365, %p366
      %p368 = scmp.ne.s32.totalorder %s360, %s363
      %p369 = scmp.eq.s32.totalorder %s47, 0
      %p370 = por %p368, %p369
      %p371 = scmp.ne.s32.totalorder %s360, %s363
      %p372 = scmp.eq.s32.totalorder %s52, 1
      %p373 = por %p371, %p372
      %p374 = scmp.ne.s32.totalorder %s363, %s364
      %p375 = scmp.eq.s32.totalorder %s52, 0
      %p376 = por %p374, %p375
      %p377 = scmp.ne.s32.totalorder %s363, %s364
      %p378 = scmp.eq.s32.totalorder %s53, 1
      %p379 = por %p377, %p378
      %p381 = scmp.ne.s32.totalorder %s364, %s380
      %p382 = scmp.eq.s32.totalorder %s53, 0
      %p383 = por %p381, %p382
      %s384 = ssub.s32 %s47, %s54
      %p385 = scmp.eq.s32.totalorder %s384, 0
      %s387 = sadd.s32 %s386, 1
      %s388 = scalar_select %p385, %s386, %s387
      %p391 = pneg %p385
      %p392 = scmp.eq.s32.totalorder %s47, 1
      %p393 = por %p391, %p392
      %p394 = scmp.ne.s32.totalorder %s386, %s389
      %p395 = scmp.eq.s32.totalorder %s47, 0
      %p396 = por %p394, %p395
      %p397 = scmp.ne.s32.totalorder %s386, %s389
      %p398 = scmp.eq.s32.totalorder %s52, 1
      %p399 = por %p397, %p398
      %p400 = scmp.ne.s32.totalorder %s389, %s390
      %p401 = scmp.eq.s32.totalorder %s52, 0
      %p402 = por %p400, %p401
      %p403 = scmp.ne.s32.totalorder %s389, %s390
      %p404 = scmp.eq.s32.totalorder %s53, 1
      %p405 = por %p403, %p404
      %p407 = scmp.ne.s32.totalorder %s390, %s406
      %p408 = scmp.eq.s32.totalorder %s53, 0
      %p409 = por %p407, %p408
      %s410 = ssub.s32 %s47, %s54
      %p411 = scmp.eq.s32.totalorder %s410, 0
      %s413 = sadd.s32 %s412, 1
      %s414 = scalar_select %p411, %s412, %s413
      %p417 = pneg %p411
      %p418 = scmp.eq.s32.totalorder %s47, 1
      %p419 = por %p417, %p418
      %p420 = scmp.ne.s32.totalorder %s412, %s415
      %p421 = scmp.eq.s32.totalorder %s47, 0
      %p422 = por %p420, %p421
      %p423 = scmp.ne.s32.totalorder %s412, %s415
      %p424 = scmp.eq.s32.totalorder %s52, 1
      %p425 = por %p423, %p424
      %p426 = scmp.ne.s32.totalorder %s415, %s416
      %p427 = scmp.eq.s32.totalorder %s52, 0
      %p428 = por %p426, %p427
      %p429 = scmp.ne.s32.totalorder %s415, %s416
      %p430 = scmp.eq.s32.totalorder %s53, 1
      %p431 = por %p429, %p430
      %p433 = scmp.ne.s32.totalorder %s416, %s432
      %p434 = scmp.eq.s32.totalorder %s53, 0
      %p435 = por %p433, %p434
      %s436 = ssub.s32 %s47, %s54
      %p437 = scmp.eq.s32.totalorder %s436, 0
      %s439 = sadd.s32 %s438, 1
      %s440 = scalar_select %p437, %s438, %s439
      %p443 = pneg %p437
      %p444 = scmp.eq.s32.totalorder %s47, 1
      %p445 = por %p443, %p444
      %p446 = scmp.ne.s32.totalorder %s438, %s441
      %p447 = scmp.eq.s32.totalorder %s47, 0
      %p448 = por %p446, %p447
      %p449 = scmp.ne.s32.totalorder %s438, %s441
      %p450 = scmp.eq.s32.totalorder %s52, 1
      %p451 = por %p449, %p450
      %p452 = scmp.ne.s32.totalorder %s441, %s442
      %p453 = scmp.eq.s32.totalorder %s52, 0
      %p454 = por %p452, %p453
      %p455 = scmp.ne.s32.totalorder %s441, %s442
      %p456 = scmp.eq.s32.totalorder %s53, 1
      %p457 = por %p455, %p456
      %p459 = scmp.ne.s32.totalorder %s442, %s458
      %p460 = scmp.eq.s32.totalorder %s53, 0
      %p461 = por %p459, %p460
      %s462 = ssub.s32 %s47, %s54
      %p463 = scmp.eq.s32.totalorder %s462, 0
      %s465 = sadd.s32 %s464, 1
      %s466 = scalar_select %p463, %s464, %s465
      %p469 = pneg %p463
      %p470 = scmp.eq.s32.totalorder %s47, 1
      %p471 = por %p469, %p470
      %p472 = scmp.ne.s32.totalorder %s464, %s467
      %p473 = scmp.eq.s32.totalorder %s47, 0
      %p474 = por %p472, %p473
      %p475 = scmp.ne.s32.totalorder %s464, %s467
      %p476 = scmp.eq.s32.totalorder %s52, 1
      %p477 = por %p475, %p476
      %p478 = scmp.ne.s32.totalorder %s467, %s468
      %p479 = scmp.eq.s32.totalorder %s52, 0
      %p480 = por %p478, %p479
      %p481 = scmp.ne.s32.totalorder %s467, %s468
      %p482 = scmp.eq.s32.totalorder %s53, 1
      %p483 = por %p481, %p482
      %p485 = scmp.ne.s32.totalorder %s468, %s484
      %p486 = scmp.eq.s32.totalorder %s53, 0
      %p487 = por %p485, %p486
      %s488 = ssub.s32 %s47, %s54
      %p489 = scmp.eq.s32.totalorder %s488, 0
      %s491 = sadd.s32 %s490, 1
      %s492 = scalar_select %p489, %s490, %s491
      %p495 = pneg %p489
      %p496 = scmp.eq.s32.totalorder %s47, 1
      %p497 = por %p495, %p496
      %p498 = scmp.ne.s32.totalorder %s490, %s493
      %p499 = scmp.eq.s32.totalorder %s47, 0
      %p500 = por %p498, %p499
      %p501 = scmp.ne.s32.totalorder %s490, %s493
      %p502 = scmp.eq.s32.totalorder %s52, 1
      %p503 = por %p501, %p502
      %p504 = scmp.ne.s32.totalorder %s493, %s494
      %p505 = scmp.eq.s32.totalorder %s52, 0
      %p506 = por %p504, %p505
      %p507 = scmp.ne.s32.totalorder %s493, %s494
      %p508 = scmp.eq.s32.totalorder %s53, 1
      %p509 = por %p507, %p508
      %p511 = scmp.ne.s32.totalorder %s494, %s510
      %p512 = scmp.eq.s32.totalorder %s53, 0
      %p513 = por %p511, %p512
      %s515 = sadd.s32 %s514, 1
      %p518 = scmp.eq.s32.totalorder %s47, 1
      %p519 = scmp.ne.s32.totalorder %s514, %s516
      %p520 = scmp.eq.s32.totalorder %s47, 0
      %p521 = por %p519, %p520
      %p522 = scmp.ne.s32.totalorder %s514, %s516
      %p523 = scmp.eq.s32.totalorder %s52, 1
      %p524 = por %p522, %p523
      %p525 = scmp.ne.s32.totalorder %s516, %s517
      %p526 = scmp.eq.s32.totalorder %s52, 0
      %p527 = por %p525, %p526
      %p528 = scmp.ne.s32.totalorder %s516, %s517
      %p529 = scmp.eq.s32.totalorder %s53, 1
      %p530 = por %p528, %p529
      %p532 = scmp.ne.s32.totalorder %s517, %s531
      %p533 = scmp.eq.s32.totalorder %s53, 0
      %p534 = por %p532, %p533
      %p535 = scmp.le.s32.totalorder 1, %s47
      %p536 = scmp.lt.s32.totalorder %s47, 3
      %p537 = pnand %p535, %p536
      %p538 = pneg %p537
      // Predicated region
      $region9: #{mt_forward.1} parent=5 // pred_check
        _
      $region10: #{mt_forward.1} parent=5 // pred_check_branch
        %540 = sbr.rel (%p537) target = $region12
      $region11: #{mt_forward.1} parent=5 // pred_region
        %s541 = ssub.s32 %s47, 1
        // Predicated region
        $region13: #{mt_forward.1} parent=11 // pred_check
          %p542 = pneg %p68
        $region14: #{mt_forward.1} parent=11 // pred_check_branch
          %544 = sbr.rel (%p542) target = $region16
        $region15: #{mt_forward.1} parent=11 // pred_region
          %s546 = ssub.s32 256, 256
          %547 = vsyncadd [#allocation5], %s546
          %s548 = sshll.u32 [#allocation4], 4
          %s549 = int_to_ptr.vmem [resolvable:$true] %s548
          %554 = dma.hbm_to_vmem [thread:$0]  %s0, 256, %s549, [#allocation5], 128, 128, 8
        $region16: #{mt_forward.1} parent=11 // pred_fallthru
          _
        // Predicated region
        $region17: #{mt_forward.1} parent=11 // pred_check
          %p555 = pneg %p89
        $region18: #{mt_forward.1} parent=11 // pred_check_branch
          %557 = sbr.rel (%p555) target = $region20
        $region19: #{mt_forward.1} parent=11 // pred_region
          %s559 = ssub.s32 4096, 4096
          %560 = vsyncadd [#allocation8], %s559
          %s561 = sshll.u32 [#allocation7], 4
          %s562 = int_to_ptr.vmem [resolvable:$true] %s561
          %567 = dma.hbm_to_vmem [thread:$0]  %s1, 4096, %s562, [#allocation8], 256, 256, 16
        $region20: #{mt_forward.1} parent=11 // pred_fallthru
          _
        // Predicated region
        $region21: #{mt_forward.1} parent=11 // pred_check
          %p568 = pneg %p110
        $region22: #{mt_forward.1} parent=11 // pred_check_branch
          %570 = sbr.rel (%p568) target = $region24
        $region23: #{mt_forward.1} parent=11 // pred_region
          %s572 = ssub.s32 32, 32
          %573 = vsyncadd [#allocation8], %s572
          %s575 = sshll.u32 [#allocation9], 4
          %s576 = int_to_ptr.vmem [resolvable:$true] %s575
          %578 = dma.hbm_to_vmem [thread:$0]  %s2, 32, %s576, [#allocation8]
        $region24: #{mt_forward.1} parent=11 // pred_fallthru
          _
        // Predicated region
        $region25: #{mt_forward.1} parent=11 // pred_check
          %p579 = pneg %p131
        $region26: #{mt_forward.1} parent=11 // pred_check_branch
          %581 = sbr.rel (%p579) target = $region28
        $region27: #{mt_forward.1} parent=11 // pred_region
          _
        $region28: #{mt_forward.1} parent=11 // pred_fallthru
          _
        // Predicated region
        $region29: #{mt_forward.1} parent=11 // pred_check
          %p582 = pneg %p152
        $region30: #{mt_forward.1} parent=11 // pred_check_branch
          %584 = sbr.rel (%p582) target = $region32
        $region31: #{mt_forward.1} parent=11 // pred_region
          _
        $region32: #{mt_forward.1} parent=11 // pred_fallthru
          _
        // Predicated region
        $region33: #{mt_forward.1} parent=11 // pred_check
          %p585 = pneg %p173
        $region34: #{mt_forward.1} parent=11 // pred_check_branch
          %587 = sbr.rel (%p585) target = $region36
        $region35: #{mt_forward.1} parent=11 // pred_region
          %s589 = ssub.s32 4096, 4096
          %590 = vsyncadd [#allocation11], %s589
          %s591 = sshll.u32 [#allocation10], 4
          %s592 = int_to_ptr.vmem [resolvable:$true] %s591
          %597 = dma.hbm_to_vmem [thread:$0]  %s5, 4096, %s592, [#allocation11], 128, 128, 8
        $region36: #{mt_forward.1} parent=11 // pred_fallthru
          _
        // Predicated region
        $region37: #{mt_forward.1} parent=11 // pred_check
          %p598 = pneg %p194
        $region38: #{mt_forward.1} parent=11 // pred_check_branch
          %600 = sbr.rel (%p598) target = $region40
        $region39: #{mt_forward.1} parent=11 // pred_region
          %s602 = ssub.s32 16, 16
          %603 = vsyncadd [#allocation11], %s602
          %s605 = sshll.u32 [#allocation12], 4
          %s606 = int_to_ptr.vmem [resolvable:$true] %s605
          %608 = dma.hbm_to_vmem [thread:$0]  %s6, 16, %s606, [#allocation11]
        $region40: #{mt_forward.1} parent=11 // pred_fallthru
          _
      $region12: #{mt_forward.1} parent=5 // pred_fallthru
        _
      %p609 = scmp.lt.s32.totalorder %s47, 2
      // Predicated region
      $region41: #{mt_forward.1} parent=5 // pred_check
        %p610 = pneg %p609
      $region42: #{mt_forward.1} parent=5 // pred_check_branch
        %612 = sbr.rel (%p610) target = $region44
      $region43: #{mt_forward.1} parent=5 // pred_region
        // Predicated region
        $region45: #{mt_forward.1} parent=43 // pred_check
          %p613 = pneg %p214
        $region46: #{mt_forward.1} parent=43 // pred_check_branch
          %615 = sbr.rel (%p613) target = $region48
        $region47: #{mt_forward.1} parent=43 // pred_region
          %s616 = sand.u32 %s47, 1
          %s617 = scalar_lea.sflag [#allocation14], %s616
          %s618 = sand.u32 %s204, 1
          %s619 = smul.addr %s618, 1536
          %s620 = scalar_lea.vmem [#allocation13], %s619
          %s622 = ssub.s32 24576, 24576
          %623 = vsyncadd %s617, %s622
          %s624 = smul.addr %s47, 192
          %s625 = smul.addr %s624, 128
          %s626 = scalar_lea.hbm %s7, %s625
          %s627 = sshll.u32 %s620, 4
          %s628 = int_to_ptr.vmem [resolvable:$true] %s627
          %633 = dma.hbm_to_vmem [thread:$0]  %s626, 24576, %s628, %s617, 768, 768, 48
        $region48: #{mt_forward.1} parent=43 // pred_fallthru
          _
        // Predicated region
        $region49: #{mt_forward.1} parent=43 // pred_check
          %p634 = pneg %p240
        $region50: #{mt_forward.1} parent=43 // pred_check_branch
          %636 = sbr.rel (%p634) target = $region52
        $region51: #{mt_forward.1} parent=43 // pred_region
          %s637 = sand.u32 %s47, 1
          %s638 = scalar_lea.sflag [#allocation14], %s637
          %s639 = sand.u32 %s230, 1
          %s640 = smul.addr %s639, 6
          %s641 = scalar_lea.vmem [#allocation15], %s640
          %s643 = ssub.s32 96, 96
          %644 = vsyncadd %s638, %s643
          %s645 = smul.addr %s47, 6
          %s646 = smul.addr %s645, 16
          %s647 = scalar_lea.hbm %s8, %s646
          %s649 = sshll.u32 %s641, 4
          %s650 = int_to_ptr.vmem [resolvable:$true] %s649
          %652 = dma.hbm_to_vmem [thread:$0]  %s647, 96, %s650, %s638
        $region52: #{mt_forward.1} parent=43 // pred_fallthru
          _
        // Predicated region
        $region53: #{mt_forward.1} parent=43 // pred_check
          %p653 = pneg %p266
        $region54: #{mt_forward.1} parent=43 // pred_check_branch
          %655 = sbr.rel (%p653) target = $region56
        $region55: #{mt_forward.1} parent=43 // pred_region
          %s656 = sand.u32 %s47, 1
          %s657 = scalar_lea.sflag [#allocation17], %s656
          %s658 = sand.u32 %s256, 1
          %s659 = smul.addr %s658, 512
          %s660 = scalar_lea.vmem [#allocation16], %s659
          %s662 = ssub.s32 8192, 8192
          %663 = vsyncadd %s657, %s662
          %s664 = smul.addr %s47, 64
          %s665 = smul.addr %s664, 128
          %s666 = scalar_lea.hbm %s9, %s665
          %s667 = sshll.u32 %s660, 4
          %s668 = int_to_ptr.vmem [resolvable:$true] %s667
          %673 = dma.hbm_to_vmem [thread:$0]  %s666, 8192, %s668, %s657, 256, 256, 16
        $region56: #{mt_forward.1} parent=43 // pred_fallthru
          _
        // Predicated region
        $region57: #{mt_forward.1} parent=43 // pred_check
          %p674 = pneg %p292
        $region58: #{mt_forward.1} parent=43 // pred_check_branch
          %676 = sbr.rel (%p674) target = $region60
        $region59: #{mt_forward.1} parent=43 // pred_region
          %s677 = sand.u32 %s47, 1
          %s678 = scalar_lea.sflag [#allocation17], %s677
          %s679 = sand.u32 %s282, 1
          %s680 = smul.addr %s679, 2
          %s681 = scalar_lea.vmem [#allocation18], %s680
          %s683 = ssub.s32 32, 32
          %684 = vsyncadd %s678, %s683
          %s685 = smul.addr %s47, 2
          %s686 = smul.addr %s685, 16
          %s687 = scalar_lea.hbm %s10, %s686
          %s689 = sshll.u32 %s681, 4
          %s690 = int_to_ptr.vmem [resolvable:$true] %s689
          %692 = dma.hbm_to_vmem [thread:$0]  %s687, 32, %s690, %s678
        $region60: #{mt_forward.1} parent=43 // pred_fallthru
          _
        // Predicated region
        $region61: #{mt_forward.1} parent=43 // pred_check
          %p693 = pneg %p318
        $region62: #{mt_forward.1} parent=43 // pred_check_branch
          %695 = sbr.rel (%p693) target = $region64
        $region63: #{mt_forward.1} parent=43 // pred_region
          %s696 = sand.u32 %s47, 1
          %s697 = scalar_lea.sflag [#allocation20], %s696
          %s698 = sand.u32 %s308, 1
          %s699 = smul.addr %s698, 2
          %s700 = scalar_lea.vmem [#allocation19], %s699
          %s702 = ssub.s32 32, 32
          %703 = vsyncadd %s697, %s702
          %s704 = smul.addr %s47, 2
          %s705 = smul.addr %s704, 16
          %s706 = scalar_lea.hbm %s11, %s705
          %s708 = sshll.u32 %s700, 4
          %s709 = int_to_ptr.vmem [resolvable:$true] %s708
          %711 = dma.hbm_to_vmem [thread:$0]  %s706, 32, %s709, %s697
        $region64: #{mt_forward.1} parent=43 // pred_fallthru
          _
        // Predicated region
        $region65: #{mt_forward.1} parent=43 // pred_check
          %p712 = pneg %p344
        $region66: #{mt_forward.1} parent=43 // pred_check_branch
          %714 = sbr.rel (%p712) target = $region68
        $region67: #{mt_forward.1} parent=43 // pred_region
          %s715 = sand.u32 %s47, 1
          %s716 = scalar_lea.sflag [#allocation20], %s715
          %s717 = sand.u32 %s334, 1
          %s718 = smul.addr %s717, 2
          %s719 = scalar_lea.vmem [#allocation21], %s718
          %s721 = ssub.s32 32, 32
          %722 = vsyncadd %s716, %s721
          %s723 = smul.addr %s47, 2
          %s724 = smul.addr %s723, 16
          %s725 = scalar_lea.hbm %s12, %s724
          %s727 = sshll.u32 %s719, 4
          %s728 = int_to_ptr.vmem [resolvable:$true] %s727
          %730 = dma.hbm_to_vmem [thread:$0]  %s725, 32, %s728, %s716
        $region68: #{mt_forward.1} parent=43 // pred_fallthru
          _
        // Predicated region
        $region69: #{mt_forward.1} parent=43 // pred_check
          %p731 = pneg %p370
        $region70: #{mt_forward.1} parent=43 // pred_check_branch
          %733 = sbr.rel (%p731) target = $region72
        $region71: #{mt_forward.1} parent=43 // pred_region
          %s734 = sand.u32 %s47, 1
          %s735 = scalar_lea.sflag [#allocation23], %s734
          %s736 = sand.u32 %s360, 1
          %s737 = smul.addr %s736, 512
          %s738 = scalar_lea.vmem [#allocation22], %s737
          %s740 = ssub.s32 8192, 8192
          %741 = vsyncadd %s735, %s740
          %s742 = smul.addr %s47, 64
          %s743 = smul.addr %s742, 128
          %s744 = scalar_lea.hbm %s13, %s743
          %s745 = sshll.u32 %s738, 4
          %s746 = int_to_ptr.vmem [resolvable:$true] %s745
          %751 = dma.hbm_to_vmem [thread:$0]  %s744, 8192, %s746, %s735, 256, 256, 16
        $region72: #{mt_forward.1} parent=43 // pred_fallthru
          _
        // Predicated region
        $region73: #{mt_forward.1} parent=43 // pred_check
          %p752 = pneg %p396
        $region74: #{mt_forward.1} parent=43 // pred_check_branch
          %754 = sbr.rel (%p752) target = $region76
        $region75: #{mt_forward.1} parent=43 // pred_region
          %s755 = sand.u32 %s47, 1
          %s756 = scalar_lea.sflag [#allocation23], %s755
          %s757 = sand.u32 %s386, 1
          %s758 = smul.addr %s757, 2
          %s759 = scalar_lea.vmem [#allocation24], %s758
          %s761 = ssub.s32 32, 32
          %762 = vsyncadd %s756, %s761
          %s763 = smul.addr %s47, 2
          %s764 = smul.addr %s763, 16
          %s765 = scalar_lea.hbm %s14, %s764
          %s767 = sshll.u32 %s759, 4
          %s768 = int_to_ptr.vmem [resolvable:$true] %s767
          %770 = dma.hbm_to_vmem [thread:$0]  %s765, 32, %s768, %s756
        $region76: #{mt_forward.1} parent=43 // pred_fallthru
          _
        // Predicated region
        $region77: #{mt_forward.1} parent=43 // pred_check
          %p771 = pneg %p422
        $region78: #{mt_forward.1} parent=43 // pred_check_branch
          %773 = sbr.rel (%p771) target = $region80
        $region79: #{mt_forward.1} parent=43 // pred_region
          %s774 = sand.u32 %s47, 1
          %s775 = scalar_lea.sflag [#allocation26], %s774
          %s776 = sand.u32 %s412, 1
          %s777 = smul.addr %s776, 512
          %s778 = scalar_lea.vmem [#allocation25], %s777
          %s780 = ssub.s32 8192, 8192
          %781 = vsyncadd %s775, %s780
          %s782 = smul.addr %s47, 64
          %s783 = smul.addr %s782, 128
          %s784 = scalar_lea.hbm %s15, %s783
          %s785 = sshll.u32 %s778, 4
          %s786 = int_to_ptr.vmem [resolvable:$true] %s785
          %791 = dma.hbm_to_vmem [thread:$0]  %s784, 8192, %s786, %s775, 256, 256, 16
        $region80: #{mt_forward.1} parent=43 // pred_fallthru
          _
        // Predicated region
        $region81: #{mt_forward.1} parent=43 // pred_check
          %p792 = pneg %p448
        $region82: #{mt_forward.1} parent=43 // pred_check_branch
          %794 = sbr.rel (%p792) target = $region84
        $region83: #{mt_forward.1} parent=43 // pred_region
          %s795 = sand.u32 %s47, 1
          %s796 = scalar_lea.sflag [#allocation26], %s795
          %s797 = sand.u32 %s438, 1
          %s798 = smul.addr %s797, 2
          %s799 = scalar_lea.vmem [#allocation27], %s798
          %s801 = ssub.s32 32, 32
          %802 = vsyncadd %s796, %s801
          %s803 = smul.addr %s47, 2
          %s804 = smul.addr %s803, 16
          %s805 = scalar_lea.hbm %s16, %s804
          %s807 = sshll.u32 %s799, 4
          %s808 = int_to_ptr.vmem [resolvable:$true] %s807
          %810 = dma.hbm_to_vmem [thread:$0]  %s805, 32, %s808, %s796
        $region84: #{mt_forward.1} parent=43 // pred_fallthru
          _
        // Predicated region
        $region85: #{mt_forward.1} parent=43 // pred_check
          %p811 = pneg %p474
        $region86: #{mt_forward.1} parent=43 // pred_check_branch
          %813 = sbr.rel (%p811) target = $region88
        $region87: #{mt_forward.1} parent=43 // pred_region
          %s814 = sand.u32 %s47, 1
          %s815 = scalar_lea.sflag [#allocation29], %s814
          %s816 = sand.u32 %s464, 1
          %s817 = smul.addr %s816, 2
          %s818 = scalar_lea.vmem [#allocation28], %s817
          %s820 = ssub.s32 32, 32
          %821 = vsyncadd %s815, %s820
          %s822 = smul.addr %s47, 2
          %s823 = smul.addr %s822, 16
          %s824 = scalar_lea.hbm %s17, %s823
          %s826 = sshll.u32 %s818, 4
          %s827 = int_to_ptr.vmem [resolvable:$true] %s826
          %829 = dma.hbm_to_vmem [thread:$0]  %s824, 32, %s827, %s815
        $region88: #{mt_forward.1} parent=43 // pred_fallthru
          _
        // Predicated region
        $region89: #{mt_forward.1} parent=43 // pred_check
          %p830 = pneg %p500
        $region90: #{mt_forward.1} parent=43 // pred_check_branch
          %832 = sbr.rel (%p830) target = $region92
        $region91: #{mt_forward.1} parent=43 // pred_region
          %s833 = sand.u32 %s47, 1
          %s834 = scalar_lea.sflag [#allocation29], %s833
          %s835 = sand.u32 %s490, 1
          %s836 = smul.addr %s835, 2
          %s837 = scalar_lea.vmem [#allocation30], %s836
          %s839 = ssub.s32 32, 32
          %840 = vsyncadd %s834, %s839
          %s841 = smul.addr %s47, 2
          %s842 = smul.addr %s841, 16
          %s843 = scalar_lea.hbm %s18, %s842
          %s845 = sshll.u32 %s837, 4
          %s846 = int_to_ptr.vmem [resolvable:$true] %s845
          %848 = dma.hbm_to_vmem [thread:$0]  %s843, 32, %s846, %s834
        $region92: #{mt_forward.1} parent=43 // pred_fallthru
          _
      $region44: #{mt_forward.1} parent=5 // pred_fallthru
        _
      %p849 = scmp.le.s32.totalorder 1, %s47
      %p850 = scmp.lt.s32.totalorder %s47, 3
      %p851 = pnand %p849, %p850
      %p852 = pneg %p851
      // Predicated region
      $region93: #{mt_forward.1} parent=5 // pred_check
        _
      $region94: #{mt_forward.1} parent=5 // pred_check_branch
        %854 = sbr.rel (%p851) target = $region96
      $region95: #{mt_forward.1} parent=5 // pred_region
        %s855 = ssub.s32 %s47, 1
        // Predicated region
        $region97: #{mt_forward.1} parent=95 // pred_check
          %p856 = pneg %p68
        $region98: #{mt_forward.1} parent=95 // pred_check_branch
          %858 = sbr.rel (%p856) target = $region100
        $region99: #{mt_forward.1} parent=95 // pred_region
          %859 = dma.done [#allocation5], 256
        $region100: #{mt_forward.1} parent=95 // pred_fallthru
          _
        // Predicated region
        $region101: #{mt_forward.1} parent=95 // pred_check
          %p860 = pneg %p89
        $region102: #{mt_forward.1} parent=95 // pred_check_branch
          %862 = sbr.rel (%p860) target = $region104
        $region103: #{mt_forward.1} parent=95 // pred_region
          %863 = dma.done [#allocation8], 4096
        $region104: #{mt_forward.1} parent=95 // pred_fallthru
          _
        // Predicated region
        $region105: #{mt_forward.1} parent=95 // pred_check
          %p864 = pneg %p110
        $region106: #{mt_forward.1} parent=95 // pred_check_branch
          %866 = sbr.rel (%p864) target = $region108
        $region107: #{mt_forward.1} parent=95 // pred_region
          %867 = dma.done [#allocation8], 32
        $region108: #{mt_forward.1} parent=95 // pred_fallthru
          _
        // Predicated region
        $region109: #{mt_forward.1} parent=95 // pred_check
          %p868 = pneg %p173
        $region110: #{mt_forward.1} parent=95 // pred_check_branch
          %870 = sbr.rel (%p868) target = $region112
        $region111: #{mt_forward.1} parent=95 // pred_region
          %871 = dma.done [#allocation11], 4096
        $region112: #{mt_forward.1} parent=95 // pred_fallthru
          _
        // Predicated region
        $region113: #{mt_forward.1} parent=95 // pred_check
          %p872 = pneg %p194
        $region114: #{mt_forward.1} parent=95 // pred_check_branch
          %874 = sbr.rel (%p872) target = $region116
        $region115: #{mt_forward.1} parent=95 // pred_region
          %875 = dma.done [#allocation11], 16
        $region116: #{mt_forward.1} parent=95 // pred_fallthru
          _
        %s876 = sand.u32 %s52, 1
        %s877 = scalar_lea.sflag [#allocation14], %s876
        %s878 = sand.u32 %s207, 1
        %s879 = smul.addr %s878, 1536
        %s880 = scalar_lea.vmem [#allocation13], %s879
        // Predicated region
        $region117: #{mt_forward.1} parent=95 // pred_check
          %p881 = pneg %p220
        $region118: #{mt_forward.1} parent=95 // pred_check_branch
          %883 = sbr.rel (%p881) target = $region120
        $region119: #{mt_forward.1} parent=95 // pred_region
          %884 = dma.done %s877, 24576
        $region120: #{mt_forward.1} parent=95 // pred_fallthru
          _
        %s885 = sand.u32 %s52, 1
        %s886 = scalar_lea.sflag [#allocation14], %s885
        %s887 = sand.u32 %s233, 1
        %s888 = smul.addr %s887, 6
        %s889 = scalar_lea.vmem [#allocation15], %s888
        // Predicated region
        $region121: #{mt_forward.1} parent=95 // pred_check
          %p890 = pneg %p246
        $region122: #{mt_forward.1} parent=95 // pred_check_branch
          %892 = sbr.rel (%p890) target = $region124
        $region123: #{mt_forward.1} parent=95 // pred_region
          %893 = dma.done %s886, 96
        $region124: #{mt_forward.1} parent=95 // pred_fallthru
          _
        %s894 = sand.u32 %s52, 1
        %s895 = scalar_lea.sflag [#allocation17], %s894
        %s896 = sand.u32 %s259, 1
        %s897 = smul.addr %s896, 512
        %s898 = scalar_lea.vmem [#allocation16], %s897
        // Predicated region
        $region125: #{mt_forward.1} parent=95 // pred_check
          %p899 = pneg %p272
        $region126: #{mt_forward.1} parent=95 // pred_check_branch
          %901 = sbr.rel (%p899) target = $region128
        $region127: #{mt_forward.1} parent=95 // pred_region
          %902 = dma.done %s895, 8192
        $region128: #{mt_forward.1} parent=95 // pred_fallthru
          _
        %s903 = sand.u32 %s52, 1
        %s904 = scalar_lea.sflag [#allocation17], %s903
        %s905 = sand.u32 %s285, 1
        %s906 = smul.addr %s905, 2
        %s907 = scalar_lea.vmem [#allocation18], %s906
        // Predicated region
        $region129: #{mt_forward.1} parent=95 // pred_check
          %p908 = pneg %p298
        $region130: #{mt_forward.1} parent=95 // pred_check_branch
          %910 = sbr.rel (%p908) target = $region132
        $region131: #{mt_forward.1} parent=95 // pred_region
          %911 = dma.done %s904, 32
        $region132: #{mt_forward.1} parent=95 // pred_fallthru
          _
        %s912 = sand.u32 %s52, 1
        %s913 = scalar_lea.sflag [#allocation20], %s912
        %s914 = sand.u32 %s311, 1
        %s915 = smul.addr %s914, 2
        %s916 = scalar_lea.vmem [#allocation19], %s915
        // Predicated region
        $region133: #{mt_forward.1} parent=95 // pred_check
          %p917 = pneg %p324
        $region134: #{mt_forward.1} parent=95 // pred_check_branch
          %919 = sbr.rel (%p917) target = $region136
        $region135: #{mt_forward.1} parent=95 // pred_region
          %920 = dma.done %s913, 32
        $region136: #{mt_forward.1} parent=95 // pred_fallthru
          _
        %s921 = sand.u32 %s52, 1
        %s922 = scalar_lea.sflag [#allocation20], %s921
        %s923 = sand.u32 %s337, 1
        %s924 = smul.addr %s923, 2
        %s925 = scalar_lea.vmem [#allocation21], %s924
        // Predicated region
        $region137: #{mt_forward.1} parent=95 // pred_check
          %p926 = pneg %p350
        $region138: #{mt_forward.1} parent=95 // pred_check_branch
          %928 = sbr.rel (%p926) target = $region140
        $region139: #{mt_forward.1} parent=95 // pred_region
          %929 = dma.done %s922, 32
        $region140: #{mt_forward.1} parent=95 // pred_fallthru
          _
        %s930 = sand.u32 %s52, 1
        %s931 = scalar_lea.sflag [#allocation23], %s930
        %s932 = sand.u32 %s363, 1
        %s933 = smul.addr %s932, 512
        %s934 = scalar_lea.vmem [#allocation22], %s933
        // Predicated region
        $region141: #{mt_forward.1} parent=95 // pred_check
          %p935 = pneg %p376
        $region142: #{mt_forward.1} parent=95 // pred_check_branch
          %937 = sbr.rel (%p935) target = $region144
        $region143: #{mt_forward.1} parent=95 // pred_region
          %938 = dma.done %s931, 8192
        $region144: #{mt_forward.1} parent=95 // pred_fallthru
          _
        %s939 = sand.u32 %s52, 1
        %s940 = scalar_lea.sflag [#allocation23], %s939
        %s941 = sand.u32 %s389, 1
        %s942 = smul.addr %s941, 2
        %s943 = scalar_lea.vmem [#allocation24], %s942
        // Predicated region
        $region145: #{mt_forward.1} parent=95 // pred_check
          %p944 = pneg %p402
        $region146: #{mt_forward.1} parent=95 // pred_check_branch
          %946 = sbr.rel (%p944) target = $region148
        $region147: #{mt_forward.1} parent=95 // pred_region
          %947 = dma.done %s940, 32
        $region148: #{mt_forward.1} parent=95 // pred_fallthru
          _
        %s948 = sand.u32 %s52, 1
        %s949 = scalar_lea.sflag [#allocation26], %s948
        %s950 = sand.u32 %s415, 1
        %s951 = smul.addr %s950, 512
        %s952 = scalar_lea.vmem [#allocation25], %s951
        // Predicated region
        $region149: #{mt_forward.1} parent=95 // pred_check
          %p953 = pneg %p428
        $region150: #{mt_forward.1} parent=95 // pred_check_branch
          %955 = sbr.rel (%p953) target = $region152
        $region151: #{mt_forward.1} parent=95 // pred_region
          %956 = dma.done %s949, 8192
        $region152: #{mt_forward.1} parent=95 // pred_fallthru
          _
        %s957 = sand.u32 %s52, 1
        %s958 = scalar_lea.sflag [#allocation26], %s957
        %s959 = sand.u32 %s441, 1
        %s960 = smul.addr %s959, 2
        %s961 = scalar_lea.vmem [#allocation27], %s960
        // Predicated region
        $region153: #{mt_forward.1} parent=95 // pred_check
          %p962 = pneg %p454
        $region154: #{mt_forward.1} parent=95 // pred_check_branch
          %964 = sbr.rel (%p962) target = $region156
        $region155: #{mt_forward.1} parent=95 // pred_region
          %965 = dma.done %s958, 32
        $region156: #{mt_forward.1} parent=95 // pred_fallthru
          _
        %s966 = sand.u32 %s52, 1
        %s967 = scalar_lea.sflag [#allocation29], %s966
        %s968 = sand.u32 %s467, 1
        %s969 = smul.addr %s968, 2
        %s970 = scalar_lea.vmem [#allocation28], %s969
        // Predicated region
        $region157: #{mt_forward.1} parent=95 // pred_check
          %p971 = pneg %p480
        $region158: #{mt_forward.1} parent=95 // pred_check_branch
          %973 = sbr.rel (%p971) target = $region160
        $region159: #{mt_forward.1} parent=95 // pred_region
          %974 = dma.done %s967, 32
        $region160: #{mt_forward.1} parent=95 // pred_fallthru
          _
        %s975 = sand.u32 %s52, 1
        %s976 = scalar_lea.sflag [#allocation29], %s975
        %s977 = sand.u32 %s493, 1
        %s978 = smul.addr %s977, 2
        %s979 = scalar_lea.vmem [#allocation30], %s978
        // Predicated region
        $region161: #{mt_forward.1} parent=95 // pred_check
          %p980 = pneg %p506
        $region162: #{mt_forward.1} parent=95 // pred_check_branch
          %982 = sbr.rel (%p980) target = $region164
        $region163: #{mt_forward.1} parent=95 // pred_region
          %983 = dma.done %s976, 32
        $region164: #{mt_forward.1} parent=95 // pred_fallthru
          _
        %p984 = pneg %p68
        %p985 = pneg %p65
        %p986 = pneg %p89
        %p987 = pneg %p86
        %p988 = pneg %p110
        %p989 = pneg %p107
        %p990 = pneg %p131
        %p991 = pneg %p128
        %p992 = pneg %p152
        %p993 = pneg %p149
        %p994 = pneg %p173
        %p995 = pneg %p170
        %p996 = pneg %p194
        %p997 = pneg %p191
        %s998 = sand.u32 %s52, 1
        %s999 = scalar_lea.sflag [#allocation14], %s998
        %s1000 = sand.u32 %s207, 1
        %s1001 = smul.addr %s1000, 1536
        %s1002 = scalar_lea.vmem [#allocation13], %s1001
        %p1003 = pneg %p220
        %p1004 = pneg %p217
        %s1005 = sand.u32 %s52, 1
        %s1006 = scalar_lea.sflag [#allocation14], %s1005
        %s1007 = sand.u32 %s233, 1
        %s1008 = smul.addr %s1007, 6
        %s1009 = scalar_lea.vmem [#allocation15], %s1008
        %p1010 = pneg %p246
        %p1011 = pneg %p243
        %s1012 = sand.u32 %s52, 1
        %s1013 = scalar_lea.sflag [#allocation17], %s1012
        %s1014 = sand.u32 %s259, 1
        %s1015 = smul.addr %s1014, 512
        %s1016 = scalar_lea.vmem [#allocation16], %s1015
        %p1017 = pneg %p272
        %p1018 = pneg %p269
        %s1019 = sand.u32 %s52, 1
        %s1020 = scalar_lea.sflag [#allocation17], %s1019
        %s1021 = sand.u32 %s285, 1
        %s1022 = smul.addr %s1021, 2
        %s1023 = scalar_lea.vmem [#allocation18], %s1022
        %p1024 = pneg %p298
        %p1025 = pneg %p295
        %s1026 = sand.u32 %s52, 1
        %s1027 = scalar_lea.sflag [#allocation20], %s1026
        %s1028 = sand.u32 %s311, 1
        %s1029 = smul.addr %s1028, 2
        %s1030 = scalar_lea.vmem [#allocation19], %s1029
        %p1031 = pneg %p324
        %p1032 = pneg %p321
        %s1033 = sand.u32 %s52, 1
        %s1034 = scalar_lea.sflag [#allocation20], %s1033
        %s1035 = sand.u32 %s337, 1
        %s1036 = smul.addr %s1035, 2
        %s1037 = scalar_lea.vmem [#allocation21], %s1036
        %p1038 = pneg %p350
        %p1039 = pneg %p347
        %s1040 = sand.u32 %s52, 1
        %s1041 = scalar_lea.sflag [#allocation23], %s1040
        %s1042 = sand.u32 %s363, 1
        %s1043 = smul.addr %s1042, 512
        %s1044 = scalar_lea.vmem [#allocation22], %s1043
        %p1045 = pneg %p376
        %p1046 = pneg %p373
        %s1047 = sand.u32 %s52, 1
        %s1048 = scalar_lea.sflag [#allocation23], %s1047
        %s1049 = sand.u32 %s389, 1
        %s1050 = smul.addr %s1049, 2
        %s1051 = scalar_lea.vmem [#allocation24], %s1050
        %p1052 = pneg %p402
        %p1053 = pneg %p399
        %s1054 = sand.u32 %s52, 1
        %s1055 = scalar_lea.sflag [#allocation26], %s1054
        %s1056 = sand.u32 %s415, 1
        %s1057 = smul.addr %s1056, 512
        %s1058 = scalar_lea.vmem [#allocation25], %s1057
        %p1059 = pneg %p428
        %p1060 = pneg %p425
        %s1061 = sand.u32 %s52, 1
        %s1062 = scalar_lea.sflag [#allocation26], %s1061
        %s1063 = sand.u32 %s441, 1
        %s1064 = smul.addr %s1063, 2
        %s1065 = scalar_lea.vmem [#allocation27], %s1064
        %p1066 = pneg %p454
        %p1067 = pneg %p451
        %s1068 = sand.u32 %s52, 1
        %s1069 = scalar_lea.sflag [#allocation29], %s1068
        %s1070 = sand.u32 %s467, 1
        %s1071 = smul.addr %s1070, 2
        %s1072 = scalar_lea.vmem [#allocation28], %s1071
        %p1073 = pneg %p480
        %p1074 = pneg %p477
        %s1075 = sand.u32 %s52, 1
        %s1076 = scalar_lea.sflag [#allocation29], %s1075
        %s1077 = sand.u32 %s493, 1
        %s1078 = smul.addr %s1077, 2
        %s1079 = scalar_lea.vmem [#allocation30], %s1078
        %p1080 = pneg %p506
        %p1081 = pneg %p503
        %p1082 = pneg %p527
        %p1083 = pneg %p524
        %p1084 = scmp.eq.s32.totalorder %s52, 0
        // Predicated region
        $region165: #{mt_forward.1} parent=95 // pred_check
          %p1085 = pneg %p1084
        $region166: #{mt_forward.1} parent=95 // pred_check_branch
          %1087 = sbr.rel (%p1085) target = $region168
        $region167: #{mt_forward.1} parent=95 // pred_region
          %v1088 = vld [vmem:[#allocation4] sm:$0xff]
          %v1089 = vld [vmem:[#allocation4 + $0x8] sm:$0xff]
          %v1090 = vld [vmem:[#allocation7] sm:$0xff]
          %v1091 = vld [vmem:[#allocation7 + $0x8] sm:$0xff]
          %v1092 = vld [vmem:[#allocation7 + $0x10] sm:$0xff]
          %v1093 = vld [vmem:[#allocation7 + $0x18] sm:$0xff]
          %v1094 = vld [vmem:[#allocation7 + $0x20] sm:$0xff]
          %v1095 = vld [vmem:[#allocation7 + $0x28] sm:$0xff]
          %v1096 = vld [vmem:[#allocation7 + $0x30] sm:$0xff]
          %v1097 = vld [vmem:[#allocation7 + $0x38] sm:$0xff]
          %v1098 = vld [vmem:[#allocation7 + $0x40] sm:$0xff]
          %v1099 = vld [vmem:[#allocation7 + $0x48] sm:$0xff]
          %v1100 = vld [vmem:[#allocation7 + $0x50] sm:$0xff]
          %v1101 = vld [vmem:[#allocation7 + $0x58] sm:$0xff]
          %v1102 = vld [vmem:[#allocation7 + $0x60] sm:$0xff]
          %v1103 = vld [vmem:[#allocation7 + $0x68] sm:$0xff]
          %v1104 = vld [vmem:[#allocation7 + $0x70] sm:$0xff]
          %v1105 = vld [vmem:[#allocation7 + $0x78] sm:$0xff]
          %v1106 = vld [vmem:[#allocation7 + $0x80] sm:$0xff]
          %v1107 = vld [vmem:[#allocation7 + $0x88] sm:$0xff]
          %v1108 = vld [vmem:[#allocation7 + $0x90] sm:$0xff]
          %v1109 = vld [vmem:[#allocation7 + $0x98] sm:$0xff]
          %v1110 = vld [vmem:[#allocation7 + $0xa0] sm:$0xff]
          %v1111 = vld [vmem:[#allocation7 + $0xa8] sm:$0xff]
          %v1112 = vld [vmem:[#allocation7 + $0xb0] sm:$0xff]
          %v1113 = vld [vmem:[#allocation7 + $0xb8] sm:$0xff]
          %v1114 = vld [vmem:[#allocation7 + $0xc0] sm:$0xff]
          %v1115 = vld [vmem:[#allocation7 + $0xc8] sm:$0xff]
          %v1116 = vld [vmem:[#allocation7 + $0xd0] sm:$0xff]
          %v1117 = vld [vmem:[#allocation7 + $0xd8] sm:$0xff]
          %v1118 = vld [vmem:[#allocation7 + $0xe0] sm:$0xff]
          %v1119 = vld [vmem:[#allocation7 + $0xe8] sm:$0xff]
          %v1120 = vld [vmem:[#allocation7 + $0xf0] sm:$0xff]
          %v1121 = vld [vmem:[#allocation7 + $0xf8] sm:$0xff]
          %v1122 = vld [vmem:[#allocation9] sm:$0x3]
          %v1124 = vlaneseq
          %v1125 = vshrl.u32 %v1124, 7
          %v1126 = vsub.s32 0, %v1125
          %v1127 = vrot.slane %v1122, %v1126
          %v1128 = vlaneseq
          %v1129 = vshrl.u32 %v1128, 7
          %v1130 = vsub.s32 1, %v1129
          %v1131 = vrot.slane %v1122, %v1130
          %1134 = vmatprep.subr.mxu0 %v1091
          %1135 = vmatpush1.msra.mxu0 %v1090
          %1136 = vmatprep.subr.mxu0 %v1093
          %1137 = vmatpush1.msra.mxu0 %v1092
          %1138 = vmatprep.subr.mxu0 %v1095
          %1139 = vmatpush1.msra.mxu0 %v1094
          %1140 = vmatprep.subr.mxu0 %v1097
          %1141 = vmatpush1.msra.mxu0 %v1096
          %1142 = vmatprep.subr.mxu0 %v1099
          %1143 = vmatpush1.msra.mxu0 %v1098
          %1144 = vmatprep.subr.mxu0 %v1101
          %1145 = vmatpush1.msra.mxu0 %v1100
          %1146 = vmatprep.subr.mxu0 %v1103
          %1147 = vmatpush1.msra.mxu0 %v1102
          %1148 = vmatprep.subr.mxu0 %v1105
          %1149 = vmatpush1.msra.mxu0 %v1104
          %1150 = vmatprep.subr.mxu0 %v1107
          %1151 = vmatpush1.msra.mxu0 %v1106
          %1152 = vmatprep.subr.mxu0 %v1109
          %1153 = vmatpush1.msra.mxu0 %v1108
          %1154 = vmatprep.subr.mxu0 %v1111
          %1155 = vmatpush1.msra.mxu0 %v1110
          %1156 = vmatprep.subr.mxu0 %v1113
          %1157 = vmatpush1.msra.mxu0 %v1112
          %1158 = vmatprep.subr.mxu0 %v1115
          %1159 = vmatpush1.msra.mxu0 %v1114
          %1160 = vmatprep.subr.mxu0 %v1117
          %1161 = vmatpush1.msra.mxu0 %v1116
          %1162 = vmatprep.subr.mxu0 %v1119
          %1163 = vmatpush1.msra.mxu0 %v1118
          %1164 = vmatprep.subr.mxu0 %v1121
          %1165 = vmatpush1.msra.mxu0 %v1120
          %1166 = vmatprep.subr.mxu0 0.0
          %1167 = vmatpush1.msra.mxu0 0.0
          %1168 = vmatprep.subr.mxu0 0.0
          %1169 = vmatpush1.msra.mxu0 0.0
          %1170 = vmatprep.subr.mxu0 0.0
          %1171 = vmatpush1.msra.mxu0 0.0
          %1172 = vmatprep.subr.mxu0 0.0
          %1173 = vmatpush1.msra.mxu0 0.0
          %1174 = vmatprep.subr.mxu0 0.0
          %1175 = vmatpush1.msra.mxu0 0.0
          %1176 = vmatprep.subr.mxu0 0.0
          %1177 = vmatpush1.msra.mxu0 0.0
          %1178 = vmatprep.subr.mxu0 0.0
          %1179 = vmatpush1.msra.mxu0 0.0
          %1180 = vmatprep.subr.mxu0 0.0
          %1181 = vmatpush1.msra.mxu0 0.0
          %1182 = vmatprep.subr.mxu0 0.0
          %1183 = vmatpush1.msra.mxu0 0.0
          %1184 = vmatprep.subr.mxu0 0.0
          %1185 = vmatpush1.msra.mxu0 0.0
          %1186 = vmatprep.subr.mxu0 0.0
          %1187 = vmatpush1.msra.mxu0 0.0
          %1188 = vmatprep.subr.mxu0 0.0
          %1189 = vmatpush1.msra.mxu0 0.0
          %1190 = vmatprep.subr.mxu0 0.0
          %1191 = vmatpush1.msra.mxu0 0.0
          %1192 = vmatprep.subr.mxu0 0.0
          %1193 = vmatpush1.msra.mxu0 0.0
          %1194 = vmatprep.subr.mxu0 0.0
          %1195 = vmatpush1.msra.mxu0 0.0
          %1196 = vmatprep.subr.mxu0 0.0
          %1197 = vmatpush1.msra.mxu0 0.0
          %1198 = vmatprep.mubr.f32.mxu0 0.0
          %1199 = vmatmul.mubr.f32.gmra.mrb[0].mxu0 %v1088
          %v1200 = vpop.f32.mrb[0].mxu0
          %v1201 = vadd.f32 %v1127, %v1200
          %v1202 = vpop.f32.mrb[0].mxu0
          %v1203 = vadd.f32 %v1131, %v1202
          %1204 = vmatprep.mubr.f32.mxu0 0.0
          %1205 = vmatmul.mubr.f32.gmra.mrb[0].mxu0 %v1089
          %v1206 = vpop.f32.mrb[0].mxu0
          %v1207 = vadd.f32 %v1127, %v1206
          %v1208 = vpop.f32.mrb[0].mxu0
          %v1209 = vadd.f32 %v1131, %v1208
          %1210 = vdwg.mxu0
          %1211 = vst [vmem:[#allocation2] sm:$0xff] %v1201
          %1212 = vst [vmem:[#allocation2 + $0x8] sm:$0xff] %v1203
          %1213 = vst [vmem:[#allocation2 + $0x10] sm:$0xff] %v1207
          %1214 = vst [vmem:[#allocation2 + $0x18] sm:$0xff] %v1209
        $region168: #{mt_forward.1} parent=95 // pred_fallthru
          _
        %v1215 = vld [vmem:[#allocation2] sm:$0xff]
        %v1216 = vld [vmem:[#allocation2 + $0x8] sm:$0xff]
        %v1217 = vld [vmem:[#allocation2 + $0x10] sm:$0xff]
        %v1218 = vld [vmem:[#allocation2 + $0x18] sm:$0xff]
        %v1219 = vld [vmem:[%s880] sm:$0xff]
        %v1220 = vld [vmem:[%s880 + $0x8] sm:$0xff]
        %v1221 = vld [vmem:[%s880 + $0x10] sm:$0xff]
        %v1222 = vld [vmem:[%s880 + $0x18] sm:$0xff]
        %v1223 = vld [vmem:[%s880 + $0x20] sm:$0xff]
        %v1224 = vld [vmem:[%s880 + $0x28] sm:$0xff]
        %v1225 = vld [vmem:[%s880 + $0x30] sm:$0xff]
        %v1226 = vld [vmem:[%s880 + $0x38] sm:$0xff]
        %v1227 = vld [vmem:[%s880 + $0x40] sm:$0xff]
        %v1228 = vld [vmem:[%s880 + $0x48] sm:$0xff]
        %v1229 = vld [vmem:[%s880 + $0x50] sm:$0xff]
        %v1230 = vld [vmem:[%s880 + $0x58] sm:$0xff]
        %v1231 = vld [vmem:[%s880 + $0x60] sm:$0xff]
        %v1232 = vld [vmem:[%s880 + $0x68] sm:$0xff]
        %v1233 = vld [vmem:[%s880 + $0x70] sm:$0xff]
        %v1234 = vld [vmem:[%s880 + $0x78] sm:$0xff]
        %v1235 = vld [vmem:[%s880 + $0x80] sm:$0xff]
        %v1236 = vld [vmem:[%s880 + $0x88] sm:$0xff]
        %v1237 = vld [vmem:[%s880 + $0x90] sm:$0xff]
        %v1238 = vld [vmem:[%s880 + $0x98] sm:$0xff]
        %v1239 = vld [vmem:[%s880 + $0xa0] sm:$0xff]
        %v1240 = vld [vmem:[%s880 + $0xa8] sm:$0xff]
        %v1241 = vld [vmem:[%s880 + $0xb0] sm:$0xff]
        %v1242 = vld [vmem:[%s880 + $0xb8] sm:$0xff]
        %v1243 = vld [vmem:[%s880 + $0xc0] sm:$0xff]
        %v1244 = vld [vmem:[%s880 + $0xc8] sm:$0xff]
        %v1245 = vld [vmem:[%s880 + $0xd0] sm:$0xff]
        %v1246 = vld [vmem:[%s880 + $0xd8] sm:$0xff]
        %v1247 = vld [vmem:[%s880 + $0xe0] sm:$0xff]
        %v1248 = vld [vmem:[%s880 + $0xe8] sm:$0xff]
        %v1249 = vld [vmem:[%s880 + $0xf0] sm:$0xff]
        %v1250 = vld [vmem:[%s880 + $0xf8] sm:$0xff]
        %v1251 = vld [vmem:[%s880 + $0x100] sm:$0xff]
        %v1252 = vld [vmem:[%s880 + $0x108] sm:$0xff]
        %v1253 = vld [vmem:[%s880 + $0x110] sm:$0xff]
        %v1254 = vld [vmem:[%s880 + $0x118] sm:$0xff]
        %v1255 = vld [vmem:[%s880 + $0x120] sm:$0xff]
        %v1256 = vld [vmem:[%s880 + $0x128] sm:$0xff]
        %v1257 = vld [vmem:[%s880 + $0x130] sm:$0xff]
        %v1258 = vld [vmem:[%s880 + $0x138] sm:$0xff]
        %v1259 = vld [vmem:[%s880 + $0x140] sm:$0xff]
        %v1260 = vld [vmem:[%s880 + $0x148] sm:$0xff]
        %v1261 = vld [vmem:[%s880 + $0x150] sm:$0xff]
        %v1262 = vld [vmem:[%s880 + $0x158] sm:$0xff]
        %v1263 = vld [vmem:[%s880 + $0x160] sm:$0xff]
        %v1264 = vld [vmem:[%s880 + $0x168] sm:$0xff]
        %v1265 = vld [vmem:[%s880 + $0x170] sm:$0xff]
        %v1266 = vld [vmem:[%s880 + $0x178] sm:$0xff]
        %v1267 = vld [vmem:[%s880 + $0x180] sm:$0xff]
        %v1268 = vld [vmem:[%s880 + $0x188] sm:$0xff]
        %v1269 = vld [vmem:[%s880 + $0x190] sm:$0xff]
        %v1270 = vld [vmem:[%s880 + $0x198] sm:$0xff]
        %v1271 = vld [vmem:[%s880 + $0x1a0] sm:$0xff]
        %v1272 = vld [vmem:[%s880 + $0x1a8] sm:$0xff]
        %v1273 = vld [vmem:[%s880 + $0x1b0] sm:$0xff]
        %v1274 = vld [vmem:[%s880 + $0x1b8] sm:$0xff]
        %v1275 = vld [vmem:[%s880 + $0x1c0] sm:$0xff]
        %v1276 = vld [vmem:[%s880 + $0x1c8] sm:$0xff]
        %v1277 = vld [vmem:[%s880 + $0x1d0] sm:$0xff]
        %v1278 = vld [vmem:[%s880 + $0x1d8] sm:$0xff]
        %v1279 = vld [vmem:[%s880 + $0x1e0] sm:$0xff]
        %v1280 = vld [vmem:[%s880 + $0x1e8] sm:$0xff]
        %v1281 = vld [vmem:[%s880 + $0x1f0] sm:$0xff]
        %v1282 = vld [vmem:[%s880 + $0x1f8] sm:$0xff]
        %v1283 = vld [vmem:[%s880 + $0x200] sm:$0xff]
        %v1284 = vld [vmem:[%s880 + $0x208] sm:$0xff]
        %v1285 = vld [vmem:[%s880 + $0x210] sm:$0xff]
        %v1286 = vld [vmem:[%s880 + $0x218] sm:$0xff]
        %v1287 = vld [vmem:[%s880 + $0x220] sm:$0xff]
        %v1288 = vld [vmem:[%s880 + $0x228] sm:$0xff]
        %v1289 = vld [vmem:[%s880 + $0x230] sm:$0xff]
        %v1290 = vld [vmem:[%s880 + $0x238] sm:$0xff]
        %v1291 = vld [vmem:[%s880 + $0x240] sm:$0xff]
        %v1292 = vld [vmem:[%s880 + $0x248] sm:$0xff]
        %v1293 = vld [vmem:[%s880 + $0x250] sm:$0xff]
        %v1294 = vld [vmem:[%s880 + $0x258] sm:$0xff]
        %v1295 = vld [vmem:[%s880 + $0x260] sm:$0xff]
        %v1296 = vld [vmem:[%s880 + $0x268] sm:$0xff]
        %v1297 = vld [vmem:[%s880 + $0x270] sm:$0xff]
        %v1298 = vld [vmem:[%s880 + $0x278] sm:$0xff]
        %v1299 = vld [vmem:[%s880 + $0x280] sm:$0xff]
        %v1300 = vld [vmem:[%s880 + $0x288] sm:$0xff]
        %v1301 = vld [vmem:[%s880 + $0x290] sm:$0xff]
        %v1302 = vld [vmem:[%s880 + $0x298] sm:$0xff]
        %v1303 = vld [vmem:[%s880 + $0x2a0] sm:$0xff]
        %v1304 = vld [vmem:[%s880 + $0x2a8] sm:$0xff]
        %v1305 = vld [vmem:[%s880 + $0x2b0] sm:$0xff]
        %v1306 = vld [vmem:[%s880 + $0x2b8] sm:$0xff]
        %v1307 = vld [vmem:[%s880 + $0x2c0] sm:$0xff]
        %v1308 = vld [vmem:[%s880 + $0x2c8] sm:$0xff]
        %v1309 = vld [vmem:[%s880 + $0x2d0] sm:$0xff]
        %v1310 = vld [vmem:[%s880 + $0x2d8] sm:$0xff]
        %v1311 = vld [vmem:[%s880 + $0x2e0] sm:$0xff]
        %v1312 = vld [vmem:[%s880 + $0x2e8] sm:$0xff]
        %v1313 = vld [vmem:[%s880 + $0x2f0] sm:$0xff]
        %v1314 = vld [vmem:[%s880 + $0x2f8] sm:$0xff]
        %v1315 = vld [vmem:[%s880 + $0x300] sm:$0xff]
        %v1316 = vld [vmem:[%s880 + $0x308] sm:$0xff]
        %v1317 = vld [vmem:[%s880 + $0x310] sm:$0xff]
        %v1318 = vld [vmem:[%s880 + $0x318] sm:$0xff]
        %v1319 = vld [vmem:[%s880 + $0x320] sm:$0xff]
        %v1320 = vld [vmem:[%s880 + $0x328] sm:$0xff]
        %v1321 = vld [vmem:[%s880 + $0x330] sm:$0xff]
        %v1322 = vld [vmem:[%s880 + $0x338] sm:$0xff]
        %v1323 = vld [vmem:[%s880 + $0x340] sm:$0xff]
        %v1324 = vld [vmem:[%s880 + $0x348] sm:$0xff]
        %v1325 = vld [vmem:[%s880 + $0x350] sm:$0xff]
        %v1326 = vld [vmem:[%s880 + $0x358] sm:$0xff]
        %v1327 = vld [vmem:[%s880 + $0x360] sm:$0xff]
        %v1328 = vld [vmem:[%s880 + $0x368] sm:$0xff]
        %v1329 = vld [vmem:[%s880 + $0x370] sm:$0xff]
        %v1330 = vld [vmem:[%s880 + $0x378] sm:$0xff]
        %v1331 = vld [vmem:[%s880 + $0x380] sm:$0xff]
        %v1332 = vld [vmem:[%s880 + $0x388] sm:$0xff]
        %v1333 = vld [vmem:[%s880 + $0x390] sm:$0xff]
        %v1334 = vld [vmem:[%s880 + $0x398] sm:$0xff]
        %v1335 = vld [vmem:[%s880 + $0x3a0] sm:$0xff]
        %v1336 = vld [vmem:[%s880 + $0x3a8] sm:$0xff]
        %v1337 = vld [vmem:[%s880 + $0x3b0] sm:$0xff]
        %v1338 = vld [vmem:[%s880 + $0x3b8] sm:$0xff]
        %v1339 = vld [vmem:[%s880 + $0x3c0] sm:$0xff]
        %v1340 = vld [vmem:[%s880 + $0x3c8] sm:$0xff]
        %v1341 = vld [vmem:[%s880 + $0x3d0] sm:$0xff]
        %v1342 = vld [vmem:[%s880 + $0x3d8] sm:$0xff]
        %v1343 = vld [vmem:[%s880 + $0x3e0] sm:$0xff]
        %v1344 = vld [vmem:[%s880 + $0x3e8] sm:$0xff]
        %v1345 = vld [vmem:[%s880 + $0x3f0] sm:$0xff]
        %v1346 = vld [vmem:[%s880 + $0x3f8] sm:$0xff]
        %v1347 = vld [vmem:[%s880 + $0x400] sm:$0xff]
        %v1348 = vld [vmem:[%s880 + $0x408] sm:$0xff]
        %v1349 = vld [vmem:[%s880 + $0x410] sm:$0xff]
        %v1350 = vld [vmem:[%s880 + $0x418] sm:$0xff]
        %v1351 = vld [vmem:[%s880 + $0x420] sm:$0xff]
        %v1352 = vld [vmem:[%s880 + $0x428] sm:$0xff]
        %v1353 = vld [vmem:[%s880 + $0x430] sm:$0xff]
        %v1354 = vld [vmem:[%s880 + $0x438] sm:$0xff]
        %v1355 = vld [vmem:[%s880 + $0x440] sm:$0xff]
        %v1356 = vld [vmem:[%s880 + $0x448] sm:$0xff]
        %v1357 = vld [vmem:[%s880 + $0x450] sm:$0xff]
        %v1358 = vld [vmem:[%s880 + $0x458] sm:$0xff]
        %v1359 = vld [vmem:[%s880 + $0x460] sm:$0xff]
        %v1360 = vld [vmem:[%s880 + $0x468] sm:$0xff]
        %v1361 = vld [vmem:[%s880 + $0x470] sm:$0xff]
        %v1362 = vld [vmem:[%s880 + $0x478] sm:$0xff]
        %v1363 = vld [vmem:[%s880 + $0x480] sm:$0xff]
        %v1364 = vld [vmem:[%s880 + $0x488] sm:$0xff]
        %v1365 = vld [vmem:[%s880 + $0x490] sm:$0xff]
        %v1366 = vld [vmem:[%s880 + $0x498] sm:$0xff]
        %v1367 = vld [vmem:[%s880 + $0x4a0] sm:$0xff]
        %v1368 = vld [vmem:[%s880 + $0x4a8] sm:$0xff]
        %v1369 = vld [vmem:[%s880 + $0x4b0] sm:$0xff]
        %v1370 = vld [vmem:[%s880 + $0x4b8] sm:$0xff]
        %v1371 = vld [vmem:[%s880 + $0x4c0] sm:$0xff]
        %v1372 = vld [vmem:[%s880 + $0x4c8] sm:$0xff]
        %v1373 = vld [vmem:[%s880 + $0x4d0] sm:$0xff]
        %v1374 = vld [vmem:[%s880 + $0x4d8] sm:$0xff]
        %v1375 = vld [vmem:[%s880 + $0x4e0] sm:$0xff]
        %v1376 = vld [vmem:[%s880 + $0x4e8] sm:$0xff]
        %v1377 = vld [vmem:[%s880 + $0x4f0] sm:$0xff]
        %v1378 = vld [vmem:[%s880 + $0x4f8] sm:$0xff]
        %v1379 = vld [vmem:[%s880 + $0x500] sm:$0xff]
        %v1380 = vld [vmem:[%s880 + $0x508] sm:$0xff]
        %v1381 = vld [vmem:[%s880 + $0x510] sm:$0xff]
        %v1382 = vld [vmem:[%s880 + $0x518] sm:$0xff]
        %v1383 = vld [vmem:[%s880 + $0x520] sm:$0xff]
        %v1384 = vld [vmem:[%s880 + $0x528] sm:$0xff]
        %v1385 = vld [vmem:[%s880 + $0x530] sm:$0xff]
        %v1386 = vld [vmem:[%s880 + $0x538] sm:$0xff]
        %v1387 = vld [vmem:[%s880 + $0x540] sm:$0xff]
        %v1388 = vld [vmem:[%s880 + $0x548] sm:$0xff]
        %v1389 = vld [vmem:[%s880 + $0x550] sm:$0xff]
        %v1390 = vld [vmem:[%s880 + $0x558] sm:$0xff]
        %v1391 = vld [vmem:[%s880 + $0x560] sm:$0xff]
        %v1392 = vld [vmem:[%s880 + $0x568] sm:$0xff]
        %v1393 = vld [vmem:[%s880 + $0x570] sm:$0xff]
        %v1394 = vld [vmem:[%s880 + $0x578] sm:$0xff]
        %v1395 = vld [vmem:[%s880 + $0x580] sm:$0xff]
        %v1396 = vld [vmem:[%s880 + $0x588] sm:$0xff]
        %v1397 = vld [vmem:[%s880 + $0x590] sm:$0xff]
        %v1398 = vld [vmem:[%s880 + $0x598] sm:$0xff]
        %v1399 = vld [vmem:[%s880 + $0x5a0] sm:$0xff]
        %v1400 = vld [vmem:[%s880 + $0x5a8] sm:$0xff]
        %v1401 = vld [vmem:[%s880 + $0x5b0] sm:$0xff]
        %v1402 = vld [vmem:[%s880 + $0x5b8] sm:$0xff]
        %v1403 = vld [vmem:[%s880 + $0x5c0] sm:$0xff]
        %v1404 = vld [vmem:[%s880 + $0x5c8] sm:$0xff]
        %v1405 = vld [vmem:[%s880 + $0x5d0] sm:$0xff]
        %v1406 = vld [vmem:[%s880 + $0x5d8] sm:$0xff]
        %v1407 = vld [vmem:[%s880 + $0x5e0] sm:$0xff]
        %v1408 = vld [vmem:[%s880 + $0x5e8] sm:$0xff]
        %v1409 = vld [vmem:[%s880 + $0x5f0] sm:$0xff]
        %v1410 = vld [vmem:[%s880 + $0x5f8] sm:$0xff]
        %v1411 = vld [vmem:[%s889] sm:$0x3f]
        %v1413 = vlaneseq
        %v1414 = vshrl.u32 %v1413, 7
        %v1415 = vsub.s32 0, %v1414
        %v1416 = vrot.slane %v1411, %v1415
        %v1417 = vlaneseq
        %v1418 = vshrl.u32 %v1417, 7
        %v1419 = vsub.s32 1, %v1418
        %v1420 = vrot.slane %v1411, %v1419
        %v1421 = vlaneseq
        %v1422 = vshrl.u32 %v1421, 7
        %v1423 = vsub.s32 2, %v1422
        %v1424 = vrot.slane %v1411, %v1423
        %v1425 = vlaneseq
        %v1426 = vshrl.u32 %v1425, 7
        %v1427 = vsub.s32 3, %v1426
        %v1428 = vrot.slane %v1411, %v1427
        %v1429 = vlaneseq
        %v1430 = vshrl.u32 %v1429, 7
        %v1431 = vsub.s32 4, %v1430
        %v1432 = vrot.slane %v1411, %v1431
        %v1433 = vlaneseq
        %v1434 = vshrl.u32 %v1433, 7
        %v1435 = vsub.s32 5, %v1434
        %v1436 = vrot.slane %v1411, %v1435
        %1443 = vmatprep.subr.mxu0 %v1220
        %1444 = vmatpush1.msra.mxu0 %v1219
        %1445 = vmatprep.subr.mxu0 %v1226
        %1446 = vmatpush1.msra.mxu0 %v1225
        %1447 = vmatprep.subr.mxu0 %v1232
        %1448 = vmatpush1.msra.mxu0 %v1231
        %1449 = vmatprep.subr.mxu0 %v1238
        %1450 = vmatpush1.msra.mxu0 %v1237
        %1451 = vmatprep.subr.mxu0 %v1244
        %1452 = vmatpush1.msra.mxu0 %v1243
        %1453 = vmatprep.subr.mxu0 %v1250
        %1454 = vmatpush1.msra.mxu0 %v1249
        %1455 = vmatprep.subr.mxu0 %v1256
        %1456 = vmatpush1.msra.mxu0 %v1255
        %1457 = vmatprep.subr.mxu0 %v1262
        %1458 = vmatpush1.msra.mxu0 %v1261
        %1459 = vmatprep.subr.mxu0 %v1268
        %1460 = vmatpush1.msra.mxu0 %v1267
        %1461 = vmatprep.subr.mxu0 %v1274
        %1462 = vmatpush1.msra.mxu0 %v1273
        %1463 = vmatprep.subr.mxu0 %v1280
        %1464 = vmatpush1.msra.mxu0 %v1279
        %1465 = vmatprep.subr.mxu0 %v1286
        %1466 = vmatpush1.msra.mxu0 %v1285
        %1467 = vmatprep.subr.mxu0 %v1292
        %1468 = vmatpush1.msra.mxu0 %v1291
        %1469 = vmatprep.subr.mxu0 %v1298
        %1470 = vmatpush1.msra.mxu0 %v1297
        %1471 = vmatprep.subr.mxu0 %v1304
        %1472 = vmatpush1.msra.mxu0 %v1303
        %1473 = vmatprep.subr.mxu0 %v1310
        %1474 = vmatpush1.msra.mxu0 %v1309
        %1475 = vmatprep.subr.mxu0 %v1316
        %1476 = vmatpush1.msra.mxu0 %v1315
        %1477 = vmatprep.subr.mxu0 %v1322
        %1478 = vmatpush1.msra.mxu0 %v1321
        %1479 = vmatprep.subr.mxu0 %v1328
        %1480 = vmatpush1.msra.mxu0 %v1327
        %1481 = vmatprep.subr.mxu0 %v1334
        %1482 = vmatpush1.msra.mxu0 %v1333
        %1483 = vmatprep.subr.mxu0 %v1340
        %1484 = vmatpush1.msra.mxu0 %v1339
        %1485 = vmatprep.subr.mxu0 %v1346
        %1486 = vmatpush1.msra.mxu0 %v1345
        %1487 = vmatprep.subr.mxu0 %v1352
        %1488 = vmatpush1.msra.mxu0 %v1351
        %1489 = vmatprep.subr.mxu0 %v1358
        %1490 = vmatpush1.msra.mxu0 %v1357
        %1491 = vmatprep.subr.mxu0 %v1364
        %1492 = vmatpush1.msra.mxu0 %v1363
        %1493 = vmatprep.subr.mxu0 %v1370
        %1494 = vmatpush1.msra.mxu0 %v1369
        %1495 = vmatprep.subr.mxu0 %v1376
        %1496 = vmatpush1.msra.mxu0 %v1375
        %1497 = vmatprep.subr.mxu0 %v1382
        %1498 = vmatpush1.msra.mxu0 %v1381
        %1499 = vmatprep.subr.mxu0 %v1388
        %1500 = vmatpush1.msra.mxu0 %v1387
        %1501 = vmatprep.subr.mxu0 %v1394
        %1502 = vmatpush1.msra.mxu0 %v1393
        %1503 = vmatprep.subr.mxu0 %v1400
        %1504 = vmatpush1.msra.mxu0 %v1399
        %1505 = vmatprep.subr.mxu0 %v1406
        %1506 = vmatpush1.msra.mxu0 %v1405
        %1507 = vmatprep.mubr.f32.mxu0 %v1216
        %1508 = vmatmul.mubr.f32.gmra.mrb[0].mxu0 %v1215
        %v1509 = vpop.f32.mrb[0].mxu0
        %v1510 = vadd.f32 %v1416, %v1509
        %v1511 = vpop.f32.mrb[0].mxu0
        %v1512 = vadd.f32 %v1420, %v1511
        %1513 = vmatprep.mubr.f32.mxu0 %v1218
        %1514 = vmatmul.mubr.f32.gmra.mrb[0].mxu0 %v1217
        %v1515 = vpop.f32.mrb[0].mxu0
        %v1516 = vadd.f32 %v1416, %v1515
        %v1517 = vpop.f32.mrb[0].mxu0
        %v1518 = vadd.f32 %v1420, %v1517
        %1519 = vdwg.mxu0
        %1520 = vmatprep.subr.mxu0 %v1222
        %1521 = vmatpush1.msra.mxu0 %v1221
        %1522 = vmatprep.subr.mxu0 %v1228
        %1523 = vmatpush1.msra.mxu0 %v1227
        %1524 = vmatprep.subr.mxu0 %v1234
        %1525 = vmatpush1.msra.mxu0 %v1233
        %1526 = vmatprep.subr.mxu0 %v1240
        %1527 = vmatpush1.msra.mxu0 %v1239
        %1528 = vmatprep.subr.mxu0 %v1246
        %1529 = vmatpush1.msra.mxu0 %v1245
        %1530 = vmatprep.subr.mxu0 %v1252
        %1531 = vmatpush1.msra.mxu0 %v1251
        %1532 = vmatprep.subr.mxu0 %v1258
        %1533 = vmatpush1.msra.mxu0 %v1257
        %1534 = vmatprep.subr.mxu0 %v1264
        %1535 = vmatpush1.msra.mxu0 %v1263
        %1536 = vmatprep.subr.mxu0 %v1270
        %1537 = vmatpush1.msra.mxu0 %v1269
        %1538 = vmatprep.subr.mxu0 %v1276
        %1539 = vmatpush1.msra.mxu0 %v1275
        %1540 = vmatprep.subr.mxu0 %v1282
        %1541 = vmatpush1.msra.mxu0 %v1281
        %1542 = vmatprep.subr.mxu0 %v1288
        %1543 = vmatpush1.msra.mxu0 %v1287
        %1544 = vmatprep.subr.mxu0 %v1294
        %1545 = vmatpush1.msra.mxu0 %v1293
        %1546 = vmatprep.subr.mxu0 %v1300
        %1547 = vmatpush1.msra.mxu0 %v1299
        %1548 = vmatprep.subr.mxu0 %v1306
        %1549 = vmatpush1.msra.mxu0 %v1305
        %1550 = vmatprep.subr.mxu0 %v1312
        %1551 = vmatpush1.msra.mxu0 %v1311
        %1552 = vmatprep.subr.mxu0 %v1318
        %1553 = vmatpush1.msra.mxu0 %v1317
        %1554 = vmatprep.subr.mxu0 %v1324
        %1555 = vmatpush1.msra.mxu0 %v1323
        %1556 = vmatprep.subr.mxu0 %v1330
        %1557 = vmatpush1.msra.mxu0 %v1329
        %1558 = vmatprep.subr.mxu0 %v1336
        %1559 = vmatpush1.msra.mxu0 %v1335
        %1560 = vmatprep.subr.mxu0 %v1342
        %1561 = vmatpush1.msra.mxu0 %v1341
        %1562 = vmatprep.subr.mxu0 %v1348
        %1563 = vmatpush1.msra.mxu0 %v1347
        %1564 = vmatprep.subr.mxu0 %v1354
        %1565 = vmatpush1.msra.mxu0 %v1353
        %1566 = vmatprep.subr.mxu0 %v1360
        %1567 = vmatpush1.msra.mxu0 %v1359
        %1568 = vmatprep.subr.mxu0 %v1366
        %1569 = vmatpush1.msra.mxu0 %v1365
        %1570 = vmatprep.subr.mxu0 %v1372
        %1571 = vmatpush1.msra.mxu0 %v1371
        %1572 = vmatprep.subr.mxu0 %v1378
        %1573 = vmatpush1.msra.mxu0 %v1377
        %1574 = vmatprep.subr.mxu0 %v1384
        %1575 = vmatpush1.msra.mxu0 %v1383
        %1576 = vmatprep.subr.mxu0 %v1390
        %1577 = vmatpush1.msra.mxu0 %v1389
        %1578 = vmatprep.subr.mxu0 %v1396
        %1579 = vmatpush1.msra.mxu0 %v1395
        %1580 = vmatprep.subr.mxu0 %v1402
        %1581 = vmatpush1.msra.mxu0 %v1401
        %1582 = vmatprep.subr.mxu0 %v1408
        %1583 = vmatpush1.msra.mxu0 %v1407
        %1584 = vmatprep.mubr.f32.mxu0 %v1216
        %1585 = vmatmul.mubr.f32.gmra.mrb[0].mxu0 %v1215
        %v1586 = vpop.f32.mrb[0].mxu0
        %v1587 = vadd.f32 %v1424, %v1586
        %v1588 = vpop.f32.mrb[0].mxu0
        %v1589 = vadd.f32 %v1428, %v1588
        %1590 = vmatprep.mubr.f32.mxu0 %v1218
        %1591 = vmatmul.mubr.f32.gmra.mrb[0].mxu0 %v1217
        %v1592 = vpop.f32.mrb[0].mxu0
        %v1593 = vadd.f32 %v1424, %v1592
        %v1594 = vpop.f32.mrb[0].mxu0
        %v1595 = vadd.f32 %v1428, %v1594
        %1596 = vdwg.mxu0
        %1597 = vmatprep.subr.mxu0 %v1224
        %1598 = vmatpush1.msra.mxu0 %v1223
        %1599 = vmatprep.subr.mxu0 %v1230
        %1600 = vmatpush1.msra.mxu0 %v1229
        %1601 = vmatprep.subr.mxu0 %v1236
        %1602 = vmatpush1.msra.mxu0 %v1235
        %1603 = vmatprep.subr.mxu0 %v1242
        %1604 = vmatpush1.msra.mxu0 %v1241
        %1605 = vmatprep.subr.mxu0 %v1248
        %1606 = vmatpush1.msra.mxu0 %v1247
        %1607 = vmatprep.subr.mxu0 %v1254
        %1608 = vmatpush1.msra.mxu0 %v1253
        %1609 = vmatprep.subr.mxu0 %v1260
        %1610 = vmatpush1.msra.mxu0 %v1259
        %1611 = vmatprep.subr.mxu0 %v1266
        %1612 = vmatpush1.msra.mxu0 %v1265
        %1613 = vmatprep.subr.mxu0 %v1272
        %1614 = vmatpush1.msra.mxu0 %v1271
        %1615 = vmatprep.subr.mxu0 %v1278
        %1616 = vmatpush1.msra.mxu0 %v1277
        %1617 = vmatprep.subr.mxu0 %v1284
        %1618 = vmatpush1.msra.mxu0 %v1283
        %1619 = vmatprep.subr.mxu0 %v1290
        %1620 = vmatpush1.msra.mxu0 %v1289
        %1621 = vmatprep.subr.mxu0 %v1296
        %1622 = vmatpush1.msra.mxu0 %v1295
        %1623 = vmatprep.subr.mxu0 %v1302
        %1624 = vmatpush1.msra.mxu0 %v1301
        %1625 = vmatprep.subr.mxu0 %v1308
        %1626 = vmatpush1.msra.mxu0 %v1307
        %1627 = vmatprep.subr.mxu0 %v1314
        %1628 = vmatpush1.msra.mxu0 %v1313
        %1629 = vmatprep.subr.mxu0 %v1320
        %1630 = vmatpush1.msra.mxu0 %v1319
        %1631 = vmatprep.subr.mxu0 %v1326
        %1632 = vmatpush1.msra.mxu0 %v1325
        %1633 = vmatprep.subr.mxu0 %v1332
        %1634 = vmatpush1.msra.mxu0 %v1331
        %1635 = vmatprep.subr.mxu0 %v1338
        %1636 = vmatpush1.msra.mxu0 %v1337
        %1637 = vmatprep.subr.mxu0 %v1344
        %1638 = vmatpush1.msra.mxu0 %v1343
        %1639 = vmatprep.subr.mxu0 %v1350
        %1640 = vmatpush1.msra.mxu0 %v1349
        %1641 = vmatprep.subr.mxu0 %v1356
        %1642 = vmatpush1.msra.mxu0 %v1355
        %1643 = vmatprep.subr.mxu0 %v1362
        %1644 = vmatpush1.msra.mxu0 %v1361
        %1645 = vmatprep.subr.mxu0 %v1368
        %1646 = vmatpush1.msra.mxu0 %v1367
        %1647 = vmatprep.subr.mxu0 %v1374
        %1648 = vmatpush1.msra.mxu0 %v1373
        %1649 = vmatprep.subr.mxu0 %v1380
        %1650 = vmatpush1.msra.mxu0 %v1379
        %1651 = vmatprep.subr.mxu0 %v1386
        %1652 = vmatpush1.msra.mxu0 %v1385
        %1653 = vmatprep.subr.mxu0 %v1392
        %1654 = vmatpush1.msra.mxu0 %v1391
        %1655 = vmatprep.subr.mxu0 %v1398
        %1656 = vmatpush1.msra.mxu0 %v1397
        %1657 = vmatprep.subr.mxu0 %v1404
        %1658 = vmatpush1.msra.mxu0 %v1403
        %1659 = vmatprep.subr.mxu0 %v1410
        %1660 = vmatpush1.msra.mxu0 %v1409
        %1661 = vmatprep.mubr.f32.mxu0 %v1216
        %1662 = vmatmul.mubr.f32.gmra.mrb[0].mxu0 %v1215
        %v1663 = vpop.f32.mrb[0].mxu0
        %v1664 = vadd.f32 %v1432, %v1663
        %v1665 = vpop.f32.mrb[0].mxu0
        %v1666 = vadd.f32 %v1436, %v1665
        %1667 = vmatprep.mubr.f32.mxu0 %v1218
        %1668 = vmatmul.mubr.f32.gmra.mrb[0].mxu0 %v1217
        %v1669 = vpop.f32.mrb[0].mxu0
        %v1670 = vadd.f32 %v1432, %v1669
        %v1671 = vpop.f32.mrb[0].mxu0
        %v1672 = vadd.f32 %v1436, %v1671
        %1673 = vdwg.mxu0
        %v1674 = vld [vmem:[%s3] sm:$0xff]
        %v1675 = vld [vmem:[%s3 + $0x8] sm:$0xff]
        %vm1676 = vcmask 261120
        %v1678 = vsel %vm1676, %v1510, 0
        %v1681 = vsel %vm1676, %v1516, 0
        %v1684 = vsel %vm1676, %v1587, 0
        %v1687 = vsel %vm1676, %v1593, 0
        %1689 = vmatprep.subr.mxu0 0.0
        %1690 = vmatpush1.xpose.msra.mxu0 %v1684
        %1691 = vmatprep.subr.mxu0 0.0
        %1692 = vmatpush1.xpose.msra.mxu0 %v1687
        %1693 = vmatprep.subr.mxu0 0.0
        %1694 = vmatpush1.xpose.msra.mxu0 0.0
        %1695 = vmatprep.subr.mxu0 0.0
        %1696 = vmatpush1.xpose.msra.mxu0 0.0
        %1697 = vmatprep.subr.mxu0 0.0
        %1698 = vmatpush1.xpose.msra.mxu0 0.0
        %1699 = vmatprep.subr.mxu0 0.0
        %1700 = vmatpush1.xpose.msra.mxu0 0.0
        %1701 = vmatprep.subr.mxu0 0.0
        %1702 = vmatpush1.xpose.msra.mxu0 0.0
        %1703 = vmatprep.subr.mxu0 0.0
        %1704 = vmatpush1.xpose.msra.mxu0 0.0
        %1705 = vmatprep.subr.mxu0 0.0
        %1706 = vmatpush1.xpose.msra.mxu0 0.0
        %1707 = vmatprep.subr.mxu0 0.0
        %1708 = vmatpush1.xpose.msra.mxu0 0.0
        %1709 = vmatprep.subr.mxu0 0.0
        %1710 = vmatpush1.xpose.msra.mxu0 0.0
        %1711 = vmatprep.subr.mxu0 0.0
        %1712 = vmatpush1.xpose.msra.mxu0 0.0
        %1713 = vmatprep.subr.mxu0 0.0
        %1714 = vmatpush1.xpose.msra.mxu0 0.0
        %1715 = vmatprep.subr.mxu0 0.0
        %1716 = vmatpush1.xpose.msra.mxu0 0.0
        %1717 = vmatprep.subr.mxu0 0.0
        %1718 = vmatpush1.xpose.msra.mxu0 0.0
        %1719 = vmatprep.subr.mxu0 0.0
        %1720 = vmatpush1.xpose.msra.mxu0 0.0
        %1721 = vmatprep.subr.mxu0 0.0
        %1722 = vmatpush1.xpose.msra.mxu0 0.0
        %1723 = vmatprep.subr.mxu0 0.0
        %1724 = vmatpush1.xpose.msra.mxu0 0.0
        %1725 = vmatprep.subr.mxu0 0.0
        %1726 = vmatpush1.xpose.msra.mxu0 0.0
        %1727 = vmatprep.subr.mxu0 0.0
        %1728 = vmatpush1.xpose.msra.mxu0 0.0
        %1729 = vmatprep.subr.mxu0 0.0
        %1730 = vmatpush1.xpose.msra.mxu0 0.0
        %1731 = vmatprep.subr.mxu0 0.0
        %1732 = vmatpush1.xpose.msra.mxu0 0.0
        %1733 = vmatprep.subr.mxu0 0.0
        %1734 = vmatpush1.xpose.msra.mxu0 0.0
        %1735 = vmatprep.subr.mxu0 0.0
        %1736 = vmatpush1.xpose.msra.mxu0 0.0
        %1737 = vmatprep.subr.mxu0 0.0
        %1738 = vmatpush1.xpose.msra.mxu0 0.0
        %1739 = vmatprep.subr.mxu0 0.0
        %1740 = vmatpush1.xpose.msra.mxu0 0.0
        %1741 = vmatprep.subr.mxu0 0.0
        %1742 = vmatpush1.xpose.msra.mxu0 0.0
        %1743 = vmatprep.subr.mxu0 0.0
        %1744 = vmatpush1.xpose.msra.mxu0 0.0
        %1745 = vmatprep.subr.mxu0 0.0
        %1746 = vmatpush1.xpose.msra.mxu0 0.0
        %1747 = vmatprep.subr.mxu0 0.0
        %1748 = vmatpush1.xpose.msra.mxu0 0.0
        %1749 = vmatprep.subr.mxu0 0.0
        %1750 = vmatpush1.xpose.msra.mxu0 0.0
        %1751 = vmatprep.subr.mxu0 0.0
        %1752 = vmatpush1.xpose.msra.mxu0 0.0
        %1753 = vmatprep.mubr.f32.mxu0 0.0
        %1754 = vmatmul.mubr.f32.gmra.mrb[0].mxu0 %v1678
        %v1755 = vpop.f32.mrb[0].mxu0
        %v1756 = vadd.f32 %v1674, %v1755
        %v1757 = vpop.f32.mrb[0].mxu0
        %1758 = vmatprep.mubr.f32.mxu0 0.0
        %1759 = vmatmul.mubr.f32.gmra.mrb[0].mxu0 %v1681
        %v1760 = vpop.f32.mrb[0].mxu0
        %v1761 = vadd.f32 %v1675, %v1760
        %v1762 = vpop.f32.mrb[0].mxu0
        %1763 = vdwg.mxu0
        %vm1764 = vcmask 130048
        %v1765 = vsel %vm1764, %v1756, -inf
        %1766 = vmax.xlane.f32.xlu0 %v1765
        %v1767 = vpop.xlane.xlu0 %1766
        %v1768 = vsel %vm1764, %v1761, -inf
        %1769 = vmax.xlane.f32.xlu0 %v1768
        %v1770 = vpop.xlane.xlu0 %1769
        %v1771 = vsub.f32 %v1756, %v1767
        %v1772 = vsub.f32 %v1761, %v1770
        %v1773 = vmul.f32 %v1771, 1.442695
        %v1774 = vpow.pop %v1773
        %v1775 = vmul.f32 %v1772, 1.442695
        %v1776 = vpow.pop %v1775
        %v1777 = vsel %vm1764, %v1774, 0.0
        %1778 = vadd.xlane.f32.xlu0 %v1777
        %v1779 = vpop.xlane.xlu0 %1778
        %v1780 = vsel %vm1764, %v1776, 0.0
        %1781 = vadd.xlane.f32.xlu0 %v1780
        %v1782 = vpop.xlane.xlu0 %1781
        %v1783 = vrcp.pop %v1779
        %v1784 = vrcp.pop %v1782
        %v1785 = vmul.f32 %v1774, %v1783
        %v1786 = vmul.f32 %v1776, %v1784
        %v1788 = vsel %vm1764, %v1785, 0
        %v1791 = vsel %vm1764, %v1786, 0
        %1793 = vmatprep.subr.mxu0 0.0
        %1794 = vmatpush1.msra.mxu0 %v1664
        %1795 = vmatprep.subr.mxu0 0.0
        %1796 = vmatpush1.msra.mxu0 %v1670
        %1797 = vmatprep.subr.mxu0 0.0
        %1798 = vmatpush1.msra.mxu0 0.0
        %1799 = vmatprep.subr.mxu0 0.0
        %1800 = vmatpush1.msra.mxu0 0.0
        %1801 = vmatprep.subr.mxu0 0.0
        %1802 = vmatpush1.msra.mxu0 0.0
        %1803 = vmatprep.subr.mxu0 0.0
        %1804 = vmatpush1.msra.mxu0 0.0
        %1805 = vmatprep.subr.mxu0 0.0
        %1806 = vmatpush1.msra.mxu0 0.0
        %1807 = vmatprep.subr.mxu0 0.0
        %1808 = vmatpush1.msra.mxu0 0.0
        %1809 = vmatprep.subr.mxu0 0.0
        %1810 = vmatpush1.msra.mxu0 0.0
        %1811 = vmatprep.subr.mxu0 0.0
        %1812 = vmatpush1.msra.mxu0 0.0
        %1813 = vmatprep.subr.mxu0 0.0
        %1814 = vmatpush1.msra.mxu0 0.0
        %1815 = vmatprep.subr.mxu0 0.0
        %1816 = vmatpush1.msra.mxu0 0.0
        %1817 = vmatprep.subr.mxu0 0.0
        %1818 = vmatpush1.msra.mxu0 0.0
        %1819 = vmatprep.subr.mxu0 0.0
        %1820 = vmatpush1.msra.mxu0 0.0
        %1821 = vmatprep.subr.mxu0 0.0
        %1822 = vmatpush1.msra.mxu0 0.0
        %1823 = vmatprep.subr.mxu0 0.0
        %1824 = vmatpush1.msra.mxu0 0.0
        %1825 = vmatprep.subr.mxu0 0.0
        %1826 = vmatpush1.msra.mxu0 0.0
        %1827 = vmatprep.subr.mxu0 0.0
        %1828 = vmatpush1.msra.mxu0 0.0
        %1829 = vmatprep.subr.mxu0 0.0
        %1830 = vmatpush1.msra.mxu0 0.0
        %1831 = vmatprep.subr.mxu0 0.0
        %1832 = vmatpush1.msra.mxu0 0.0
        %1833 = vmatprep.subr.mxu0 0.0
        %1834 = vmatpush1.msra.mxu0 0.0
        %1835 = vmatprep.subr.mxu0 0.0
        %1836 = vmatpush1.msra.mxu0 0.0
        %1837 = vmatprep.subr.mxu0 0.0
        %1838 = vmatpush1.msra.mxu0 0.0
        %1839 = vmatprep.subr.mxu0 0.0
        %1840 = vmatpush1.msra.mxu0 0.0
        %1841 = vmatprep.subr.mxu0 0.0
        %1842 = vmatpush1.msra.mxu0 0.0
        %1843 = vmatprep.subr.mxu0 0.0
        %1844 = vmatpush1.msra.mxu0 0.0
        %1845 = vmatprep.subr.mxu0 0.0
        %1846 = vmatpush1.msra.mxu0 0.0
        %1847 = vmatprep.subr.mxu0 0.0
        %1848 = vmatpush1.msra.mxu0 0.0
        %1849 = vmatprep.subr.mxu0 0.0
        %1850 = vmatpush1.msra.mxu0 0.0
        %1851 = vmatprep.subr.mxu0 0.0
        %1852 = vmatpush1.msra.mxu0 0.0
        %1853 = vmatprep.subr.mxu0 0.0
        %1854 = vmatpush1.msra.mxu0 0.0
        %1855 = vmatprep.subr.mxu0 0.0
        %1856 = vmatpush1.msra.mxu0 0.0
        %1857 = vmatprep.mubr.f32.mxu0 0.0
        %1858 = vmatmul.mubr.f32.gmra.mrb[0].mxu0 %v1788
        %v1859 = vpop.f32.mrb[0].mxu0
        %v1860 = vadd.f32 0.0, %v1859
        %v1861 = vpop.f32.mrb[0].mxu0
        %1862 = vmatprep.mubr.f32.mxu0 0.0
        %1863 = vmatmul.mubr.f32.gmra.mrb[0].mxu0 %v1791
        %v1864 = vpop.f32.mrb[0].mxu0
        %v1865 = vadd.f32 0.0, %v1864
        %v1866 = vpop.f32.mrb[0].mxu0
        %1867 = vdwg.mxu0
        %1868 = vst.msk [vmem:[#allocation3] sm:$0xff] %vm1676, %v1860
        %1869 = vst.msk [vmem:[#allocation3 + $0x10] sm:$0xff] %vm1676, %v1865
        %1870 = vrot.lane.b32.xlu0 %v1510, 96
        %v1871 = vpop.permute.xlu0 %1870
        %1872 = vrot.lane.b32.xlu0 %v1516, 96
        %v1873 = vpop.permute.xlu0 %1872
        %1874 = vrot.lane.b32.xlu0 %v1587, 96
        %v1875 = vpop.permute.xlu0 %1874
        %1876 = vrot.lane.b32.xlu0 %v1593, 96
        %v1877 = vpop.permute.xlu0 %1876
        %v1878 = vsel %vm1676, %v1871, 0
        %v1880 = vsel %vm1676, %v1873, 0
        %v1882 = vsel %vm1676, %v1875, 0
        %v1884 = vsel %vm1676, %v1877, 0
        %1886 = vmatprep.subr.mxu0 0.0
        %1887 = vmatpush1.xpose.msra.mxu0 %v1882
        %1888 = vmatprep.subr.mxu0 0.0
        %1889 = vmatpush1.xpose.msra.mxu0 %v1884
        %1890 = vmatprep.subr.mxu0 0.0
        %1891 = vmatpush1.xpose.msra.mxu0 0.0
        %1892 = vmatprep.subr.mxu0 0.0
        %1893 = vmatpush1.xpose.msra.mxu0 0.0
        %1894 = vmatprep.subr.mxu0 0.0
        %1895 = vmatpush1.xpose.msra.mxu0 0.0
        %1896 = vmatprep.subr.mxu0 0.0
        %1897 = vmatpush1.xpose.msra.mxu0 0.0
        %1898 = vmatprep.subr.mxu0 0.0
        %1899 = vmatpush1.xpose.msra.mxu0 0.0
        %1900 = vmatprep.subr.mxu0 0.0
        %1901 = vmatpush1.xpose.msra.mxu0 0.0
        %1902 = vmatprep.subr.mxu0 0.0
        %1903 = vmatpush1.xpose.msra.mxu0 0.0
        %1904 = vmatprep.subr.mxu0 0.0
        %1905 = vmatpush1.xpose.msra.mxu0 0.0
        %1906 = vmatprep.subr.mxu0 0.0
        %1907 = vmatpush1.xpose.msra.mxu0 0.0
        %1908 = vmatprep.subr.mxu0 0.0
        %1909 = vmatpush1.xpose.msra.mxu0 0.0
        %1910 = vmatprep.subr.mxu0 0.0
        %1911 = vmatpush1.xpose.msra.mxu0 0.0
        %1912 = vmatprep.subr.mxu0 0.0
        %1913 = vmatpush1.xpose.msra.mxu0 0.0
        %1914 = vmatprep.subr.mxu0 0.0
        %1915 = vmatpush1.xpose.msra.mxu0 0.0
        %1916 = vmatprep.subr.mxu0 0.0
        %1917 = vmatpush1.xpose.msra.mxu0 0.0
        %1918 = vmatprep.subr.mxu0 0.0
        %1919 = vmatpush1.xpose.msra.mxu0 0.0
        %1920 = vmatprep.subr.mxu0 0.0
        %1921 = vmatpush1.xpose.msra.mxu0 0.0
        %1922 = vmatprep.subr.mxu0 0.0
        %1923 = vmatpush1.xpose.msra.mxu0 0.0
        %1924 = vmatprep.subr.mxu0 0.0
        %1925 = vmatpush1.xpose.msra.mxu0 0.0
        %1926 = vmatprep.subr.mxu0 0.0
        %1927 = vmatpush1.xpose.msra.mxu0 0.0
        %1928 = vmatprep.subr.mxu0 0.0
        %1929 = vmatpush1.xpose.msra.mxu0 0.0
        %1930 = vmatprep.subr.mxu0 0.0
        %1931 = vmatpush1.xpose.msra.mxu0 0.0
        %1932 = vmatprep.subr.mxu0 0.0
        %1933 = vmatpush1.xpose.msra.mxu0 0.0
        %1934 = vmatprep.subr.mxu0 0.0
        %1935 = vmatpush1.xpose.msra.mxu0 0.0
        %1936 = vmatprep.subr.mxu0 0.0
        %1937 = vmatpush1.xpose.msra.mxu0 0.0
        %1938 = vmatprep.subr.mxu0 0.0
        %1939 = vmatpush1.xpose.msra.mxu0 0.0
        %1940 = vmatprep.subr.mxu0 0.0
        %1941 = vmatpush1.xpose.msra.mxu0 0.0
        %1942 = vmatprep.subr.mxu0 0.0
        %1943 = vmatpush1.xpose.msra.mxu0 0.0
        %1944 = vmatprep.subr.mxu0 0.0
        %1945 = vmatpush1.xpose.msra.mxu0 0.0
        %1946 = vmatprep.subr.mxu0 0.0
        %1947 = vmatpush1.xpose.msra.mxu0 0.0
        %1948 = vmatprep.subr.mxu0 0.0
        %1949 = vmatpush1.xpose.msra.mxu0 0.0
        %1950 = vmatprep.mubr.f32.mxu0 0.0
        %1951 = vmatmul.mubr.f32.gmra.mrb[0].mxu0 %v1878
        %v1952 = vpop.f32.mrb[0].mxu0
        %v1953 = vadd.f32 %v1674, %v1952
        %v1954 = vpop.f32.mrb[0].mxu0
        %1955 = vmatprep.mubr.f32.mxu0 0.0
        %1956 = vmatmul.mubr.f32.gmra.mrb[0].mxu0 %v1880
        %v1957 = vpop.f32.mrb[0].mxu0
        %v1958 = vadd.f32 %v1675, %v1957
        %v1959 = vpop.f32.mrb[0].mxu0
        %1960 = vdwg.mxu0
        %v1961 = vsel %vm1764, %v1953, -inf
        %1962 = vmax.xlane.f32.xlu0 %v1961
        %v1963 = vpop.xlane.xlu0 %1962
        %v1964 = vsel %vm1764, %v1958, -inf
        %1965 = vmax.xlane.f32.xlu0 %v1964
        %v1966 = vpop.xlane.xlu0 %1965
        %v1967 = vsub.f32 %v1953, %v1963
        %v1968 = vsub.f32 %v1958, %v1966
        %v1969 = vmul.f32 %v1967, 1.442695
        %v1970 = vpow.pop %v1969
        %v1971 = vmul.f32 %v1968, 1.442695
        %v1972 = vpow.pop %v1971
        %v1973 = vsel %vm1764, %v1970, 0.0
        %1974 = vadd.xlane.f32.xlu0 %v1973
        %v1975 = vpop.xlane.xlu0 %1974
        %v1976 = vsel %vm1764, %v1972, 0.0
        %1977 = vadd.xlane.f32.xlu0 %v1976
        %v1978 = vpop.xlane.xlu0 %1977
        %v1979 = vrcp.pop %v1975
        %v1980 = vrcp.pop %v1978
        %v1981 = vmul.f32 %v1970, %v1979
        %v1982 = vmul.f32 %v1972, %v1980
        %1985 = vrot.lane.b32.xlu0 %v1664, 96
        %v1986 = vpop.permute.xlu0 %1985
        %1987 = vrot.lane.b32.xlu0 %v1670, 96
        %v1988 = vpop.permute.xlu0 %1987
        %v1992 = vsel %vm1764, %v1981, 0
        %v1995 = vsel %vm1764, %v1982, 0
        %1997 = vmatprep.subr.mxu0 0.0
        %1998 = vmatpush1.msra.mxu0 %v1986
        %1999 = vmatprep.subr.mxu0 0.0
        %2000 = vmatpush1.msra.mxu0 %v1988
        %2001 = vmatprep.subr.mxu0 0.0
        %2002 = vmatpush1.msra.mxu0 0.0
        %2003 = vmatprep.subr.mxu0 0.0
        %2004 = vmatpush1.msra.mxu0 0.0
        %2005 = vmatprep.subr.mxu0 0.0
        %2006 = vmatpush1.msra.mxu0 0.0
        %2007 = vmatprep.subr.mxu0 0.0
        %2008 = vmatpush1.msra.mxu0 0.0
        %2009 = vmatprep.subr.mxu0 0.0
        %2010 = vmatpush1.msra.mxu0 0.0
        %2011 = vmatprep.subr.mxu0 0.0
        %2012 = vmatpush1.msra.mxu0 0.0
        %2013 = vmatprep.subr.mxu0 0.0
        %2014 = vmatpush1.msra.mxu0 0.0
        %2015 = vmatprep.subr.mxu0 0.0
        %2016 = vmatpush1.msra.mxu0 0.0
        %2017 = vmatprep.subr.mxu0 0.0
        %2018 = vmatpush1.msra.mxu0 0.0
        %2019 = vmatprep.subr.mxu0 0.0
        %2020 = vmatpush1.msra.mxu0 0.0
        %2021 = vmatprep.subr.mxu0 0.0
        %2022 = vmatpush1.msra.mxu0 0.0
        %2023 = vmatprep.subr.mxu0 0.0
        %2024 = vmatpush1.msra.mxu0 0.0
        %2025 = vmatprep.subr.mxu0 0.0
        %2026 = vmatpush1.msra.mxu0 0.0
        %2027 = vmatprep.subr.mxu0 0.0
        %2028 = vmatpush1.msra.mxu0 0.0
        %2029 = vmatprep.subr.mxu0 0.0
        %2030 = vmatpush1.msra.mxu0 0.0
        %2031 = vmatprep.subr.mxu0 0.0
        %2032 = vmatpush1.msra.mxu0 0.0
        %2033 = vmatprep.subr.mxu0 0.0
        %2034 = vmatpush1.msra.mxu0 0.0
        %2035 = vmatprep.subr.mxu0 0.0
        %2036 = vmatpush1.msra.mxu0 0.0
        %2037 = vmatprep.subr.mxu0 0.0
        %2038 = vmatpush1.msra.mxu0 0.0
        %2039 = vmatprep.subr.mxu0 0.0
        %2040 = vmatpush1.msra.mxu0 0.0
        %2041 = vmatprep.subr.mxu0 0.0
        %2042 = vmatpush1.msra.mxu0 0.0
        %2043 = vmatprep.subr.mxu0 0.0
        %2044 = vmatpush1.msra.mxu0 0.0
        %2045 = vmatprep.subr.mxu0 0.0
        %2046 = vmatpush1.msra.mxu0 0.0
        %2047 = vmatprep.subr.mxu0 0.0
        %2048 = vmatpush1.msra.mxu0 0.0
        %2049 = vmatprep.subr.mxu0 0.0
        %2050 = vmatpush1.msra.mxu0 0.0
        %2051 = vmatprep.subr.mxu0 0.0
        %2052 = vmatpush1.msra.mxu0 0.0
        %2053 = vmatprep.subr.mxu0 0.0
        %2054 = vmatpush1.msra.mxu0 0.0
        %2055 = vmatprep.subr.mxu0 0.0
        %2056 = vmatpush1.msra.mxu0 0.0
        %2057 = vmatprep.subr.mxu0 0.0
        %2058 = vmatpush1.msra.mxu0 0.0
        %2059 = vmatprep.subr.mxu0 0.0
        %2060 = vmatpush1.msra.mxu0 0.0
        %2061 = vmatprep.mubr.f32.mxu0 0.0
        %2062 = vmatmul.mubr.f32.gmra.mrb[0].mxu0 %v1992
        %v2063 = vpop.f32.mrb[0].mxu0
        %v2064 = vadd.f32 0.0, %v2063
        %v2065 = vpop.f32.mrb[0].mxu0
        %2066 = vmatprep.mubr.f32.mxu0 0.0
        %2067 = vmatmul.mubr.f32.gmra.mrb[0].mxu0 %v1995
        %v2068 = vpop.f32.mrb[0].mxu0
        %v2069 = vadd.f32 0.0, %v2068
        %v2070 = vpop.f32.mrb[0].mxu0
        %2071 = vdwg.mxu0
        %2074 = vrot.lane.b32.xlu0 %v2064, 32
        %v2075 = vpop.permute.xlu0 %2074
        %2076 = vrot.lane.b32.xlu0 %v2069, 32
        %v2077 = vpop.permute.xlu0 %2076
        %vm2080 = vcmask 523520
        %2081 = vst.msk [vmem:[#allocation3] sm:$0xff] %vm2080, %v2075
        %2082 = vst.msk [vmem:[#allocation3 + $0x10] sm:$0xff] %vm2080, %v2077
        %2083 = vrot.lane.b32.xlu0 %v1510, 64
        %v2084 = vpop.permute.xlu0 %2083
        %2085 = vrot.lane.b32.xlu0 %v1516, 64
        %v2086 = vpop.permute.xlu0 %2085
        %2087 = vrot.lane.b32.xlu0 %v1587, 64
        %v2088 = vpop.permute.xlu0 %2087
        %2089 = vrot.lane.b32.xlu0 %v1593, 64
        %v2090 = vpop.permute.xlu0 %2089
        %v2091 = vsel %vm1676, %v2084, 0
        %v2093 = vsel %vm1676, %v2086, 0
        %v2095 = vsel %vm1676, %v2088, 0
        %v2097 = vsel %vm1676, %v2090, 0
        %2099 = vmatprep.subr.mxu0 0.0
        %2100 = vmatpush1.xpose.msra.mxu0 %v2095
        %2101 = vmatprep.subr.mxu0 0.0
        %2102 = vmatpush1.xpose.msra.mxu0 %v2097
        %2103 = vmatprep.subr.mxu0 0.0
        %2104 = vmatpush1.xpose.msra.mxu0 0.0
        %2105 = vmatprep.subr.mxu0 0.0
        %2106 = vmatpush1.xpose.msra.mxu0 0.0
        %2107 = vmatprep.subr.mxu0 0.0
        %2108 = vmatpush1.xpose.msra.mxu0 0.0
        %2109 = vmatprep.subr.mxu0 0.0
        %2110 = vmatpush1.xpose.msra.mxu0 0.0
        %2111 = vmatprep.subr.mxu0 0.0
        %2112 = vmatpush1.xpose.msra.mxu0 0.0
        %2113 = vmatprep.subr.mxu0 0.0
        %2114 = vmatpush1.xpose.msra.mxu0 0.0
        %2115 = vmatprep.subr.mxu0 0.0
        %2116 = vmatpush1.xpose.msra.mxu0 0.0
        %2117 = vmatprep.subr.mxu0 0.0
        %2118 = vmatpush1.xpose.msra.mxu0 0.0
        %2119 = vmatprep.subr.mxu0 0.0
        %2120 = vmatpush1.xpose.msra.mxu0 0.0
        %2121 = vmatprep.subr.mxu0 0.0
        %2122 = vmatpush1.xpose.msra.mxu0 0.0
        %2123 = vmatprep.subr.mxu0 0.0
        %2124 = vmatpush1.xpose.msra.mxu0 0.0
        %2125 = vmatprep.subr.mxu0 0.0
        %2126 = vmatpush1.xpose.msra.mxu0 0.0
        %2127 = vmatprep.subr.mxu0 0.0
        %2128 = vmatpush1.xpose.msra.mxu0 0.0
        %2129 = vmatprep.subr.mxu0 0.0
        %2130 = vmatpush1.xpose.msra.mxu0 0.0
        %2131 = vmatprep.subr.mxu0 0.0
        %2132 = vmatpush1.xpose.msra.mxu0 0.0
        %2133 = vmatprep.subr.mxu0 0.0
        %2134 = vmatpush1.xpose.msra.mxu0 0.0
        %2135 = vmatprep.subr.mxu0 0.0
        %2136 = vmatpush1.xpose.msra.mxu0 0.0
        %2137 = vmatprep.subr.mxu0 0.0
        %2138 = vmatpush1.xpose.msra.mxu0 0.0
        %2139 = vmatprep.subr.mxu0 0.0
        %2140 = vmatpush1.xpose.msra.mxu0 0.0
        %2141 = vmatprep.subr.mxu0 0.0
        %2142 = vmatpush1.xpose.msra.mxu0 0.0
        %2143 = vmatprep.subr.mxu0 0.0
        %2144 = vmatpush1.xpose.msra.mxu0 0.0
        %2145 = vmatprep.subr.mxu0 0.0
        %2146 = vmatpush1.xpose.msra.mxu0 0.0
        %2147 = vmatprep.subr.mxu0 0.0
        %2148 = vmatpush1.xpose.msra.mxu0 0.0
        %2149 = vmatprep.subr.mxu0 0.0
        %2150 = vmatpush1.xpose.msra.mxu0 0.0
        %2151 = vmatprep.subr.mxu0 0.0
        %2152 = vmatpush1.xpose.msra.mxu0 0.0
        %2153 = vmatprep.subr.mxu0 0.0
        %2154 = vmatpush1.xpose.msra.mxu0 0.0
        %2155 = vmatprep.subr.mxu0 0.0
        %2156 = vmatpush1.xpose.msra.mxu0 0.0
        %2157 = vmatprep.subr.mxu0 0.0
        %2158 = vmatpush1.xpose.msra.mxu0 0.0
        %2159 = vmatprep.subr.mxu0 0.0
        %2160 = vmatpush1.xpose.msra.mxu0 0.0
        %2161 = vmatprep.subr.mxu0 0.0
        %2162 = vmatpush1.xpose.msra.mxu0 0.0
        %2163 = vmatprep.mubr.f32.mxu0 0.0
        %2164 = vmatmul.mubr.f32.gmra.mrb[0].mxu0 %v2091
        %v2165 = vpop.f32.mrb[0].mxu0
        %v2166 = vadd.f32 %v1674, %v2165
        %v2167 = vpop.f32.mrb[0].mxu0
        %2168 = vmatprep.mubr.f32.mxu0 0.0
        %2169 = vmatmul.mubr.f32.gmra.mrb[0].mxu0 %v2093
        %v2170 = vpop.f32.mrb[0].mxu0
        %v2171 = vadd.f32 %v1675, %v2170
        %v2172 = vpop.f32.mrb[0].mxu0
        %2173 = vdwg.mxu0
        %v2174 = vsel %vm1764, %v2166, -inf
        %2175 = vmax.xlane.f32.xlu0 %v2174
        %v2176 = vpop.xlane.xlu0 %2175
        %v2177 = vsel %vm1764, %v2171, -inf
        %2178 = vmax.xlane.f32.xlu0 %v2177
        %v2179 = vpop.xlane.xlu0 %2178
        %v2180 = vsub.f32 %v2166, %v2176
        %v2181 = vsub.f32 %v2171, %v2179
        %v2182 = vmul.f32 %v2180, 1.442695
        %v2183 = vpow.pop %v2182
        %v2184 = vmul.f32 %v2181, 1.442695
        %v2185 = vpow.pop %v2184
        %v2186 = vsel %vm1764, %v2183, 0.0
        %2187 = vadd.xlane.f32.xlu0 %v2186
        %v2188 = vpop.xlane.xlu0 %2187
        %v2189 = vsel %vm1764, %v2185, 0.0
        %2190 = vadd.xlane.f32.xlu0 %v2189
        %v2191 = vpop.xlane.xlu0 %2190
        %v2192 = vrcp.pop %v2188
        %v2193 = vrcp.pop %v2191
        %v2194 = vmul.f32 %v2183, %v2192
        %v2195 = vmul.f32 %v2185, %v2193
        %2196 = vrot.lane.b32.xlu0 %v1664, 64
        %v2197 = vpop.permute.xlu0 %2196
        %2198 = vrot.lane.b32.xlu0 %v1670, 64
        %v2199 = vpop.permute.xlu0 %2198
        %v2203 = vsel %vm1764, %v2194, 0
        %v2206 = vsel %vm1764, %v2195, 0
        %2208 = vmatprep.subr.mxu0 0.0
        %2209 = vmatpush1.msra.mxu0 %v2197
        %2210 = vmatprep.subr.mxu0 0.0
        %2211 = vmatpush1.msra.mxu0 %v2199
        %2212 = vmatprep.subr.mxu0 0.0
        %2213 = vmatpush1.msra.mxu0 0.0
        %2214 = vmatprep.subr.mxu0 0.0
        %2215 = vmatpush1.msra.mxu0 0.0
        %2216 = vmatprep.subr.mxu0 0.0
        %2217 = vmatpush1.msra.mxu0 0.0
        %2218 = vmatprep.subr.mxu0 0.0
        %2219 = vmatpush1.msra.mxu0 0.0
        %2220 = vmatprep.subr.mxu0 0.0
        %2221 = vmatpush1.msra.mxu0 0.0
        %2222 = vmatprep.subr.mxu0 0.0
        %2223 = vmatpush1.msra.mxu0 0.0
        %2224 = vmatprep.subr.mxu0 0.0
        %2225 = vmatpush1.msra.mxu0 0.0
        %2226 = vmatprep.subr.mxu0 0.0
        %2227 = vmatpush1.msra.mxu0 0.0
        %2228 = vmatprep.subr.mxu0 0.0
        %2229 = vmatpush1.msra.mxu0 0.0
        %2230 = vmatprep.subr.mxu0 0.0
        %2231 = vmatpush1.msra.mxu0 0.0
        %2232 = vmatprep.subr.mxu0 0.0
        %2233 = vmatpush1.msra.mxu0 0.0
        %2234 = vmatprep.subr.mxu0 0.0
        %2235 = vmatpush1.msra.mxu0 0.0
        %2236 = vmatprep.subr.mxu0 0.0
        %2237 = vmatpush1.msra.mxu0 0.0
        %2238 = vmatprep.subr.mxu0 0.0
        %2239 = vmatpush1.msra.mxu0 0.0
        %2240 = vmatprep.subr.mxu0 0.0
        %2241 = vmatpush1.msra.mxu0 0.0
        %2242 = vmatprep.subr.mxu0 0.0
        %2243 = vmatpush1.msra.mxu0 0.0
        %2244 = vmatprep.subr.mxu0 0.0
        %2245 = vmatpush1.msra.mxu0 0.0
        %2246 = vmatprep.subr.mxu0 0.0
        %2247 = vmatpush1.msra.mxu0 0.0
        %2248 = vmatprep.subr.mxu0 0.0
        %2249 = vmatpush1.msra.mxu0 0.0
        %2250 = vmatprep.subr.mxu0 0.0
        %2251 = vmatpush1.msra.mxu0 0.0
        %2252 = vmatprep.subr.mxu0 0.0
        %2253 = vmatpush1.msra.mxu0 0.0
        %2254 = vmatprep.subr.mxu0 0.0
        %2255 = vmatpush1.msra.mxu0 0.0
        %2256 = vmatprep.subr.mxu0 0.0
        %2257 = vmatpush1.msra.mxu0 0.0
        %2258 = vmatprep.subr.mxu0 0.0
        %2259 = vmatpush1.msra.mxu0 0.0
        %2260 = vmatprep.subr.mxu0 0.0
        %2261 = vmatpush1.msra.mxu0 0.0
        %2262 = vmatprep.subr.mxu0 0.0
        %2263 = vmatpush1.msra.mxu0 0.0
        %2264 = vmatprep.subr.mxu0 0.0
        %2265 = vmatpush1.msra.mxu0 0.0
        %2266 = vmatprep.subr.mxu0 0.0
        %2267 = vmatpush1.msra.mxu0 0.0
        %2268 = vmatprep.subr.mxu0 0.0
        %2269 = vmatpush1.msra.mxu0 0.0
        %2270 = vmatprep.subr.mxu0 0.0
        %2271 = vmatpush1.msra.mxu0 0.0
        %2272 = vmatprep.mubr.f32.mxu0 0.0
        %2273 = vmatmul.mubr.f32.gmra.mrb[0].mxu0 %v2203
        %v2274 = vpop.f32.mrb[0].mxu0
        %v2275 = vadd.f32 0.0, %v2274
        %v2276 = vpop.f32.mrb[0].mxu0
        %2277 = vmatprep.mubr.f32.mxu0 0.0
        %2278 = vmatmul.mubr.f32.gmra.mrb[0].mxu0 %v2206
        %v2279 = vpop.f32.mrb[0].mxu0
        %v2280 = vadd.f32 0.0, %v2279
        %v2281 = vpop.f32.mrb[0].mxu0
        %2282 = vdwg.mxu0
        %2285 = vrot.lane.b32.xlu0 %v2275, 64
        %v2286 = vpop.permute.xlu0 %2285
        %2287 = vrot.lane.b32.xlu0 %v2280, 64
        %v2288 = vpop.permute.xlu0 %2287
        %vm2291 = vcmask 785920
        %2292 = vst.msk [vmem:[#allocation3] sm:$0xff] %vm2291, %v2286
        %2293 = vst.msk [vmem:[#allocation3 + $0x10] sm:$0xff] %vm2291, %v2288
        %2294 = vrot.lane.b32.xlu0 %v1510, 32
        %v2295 = vpop.permute.xlu0 %2294
        %2296 = vrot.lane.b32.xlu0 %v1516, 32
        %v2297 = vpop.permute.xlu0 %2296
        %2298 = vrot.lane.b32.xlu0 %v1587, 32
        %v2299 = vpop.permute.xlu0 %2298
        %2300 = vrot.lane.b32.xlu0 %v1593, 32
        %v2301 = vpop.permute.xlu0 %2300
        %v2302 = vsel %vm1676, %v2295, 0
        %v2304 = vsel %vm1676, %v2297, 0
        %v2306 = vsel %vm1676, %v2299, 0
        %v2308 = vsel %vm1676, %v2301, 0
        %2310 = vmatprep.subr.mxu0 0.0
        %2311 = vmatpush1.xpose.msra.mxu0 %v2306
        %2312 = vmatprep.subr.mxu0 0.0
        %2313 = vmatpush1.xpose.msra.mxu0 %v2308
        %2314 = vmatprep.subr.mxu0 0.0
        %2315 = vmatpush1.xpose.msra.mxu0 0.0
        %2316 = vmatprep.subr.mxu0 0.0
        %2317 = vmatpush1.xpose.msra.mxu0 0.0
        %2318 = vmatprep.subr.mxu0 0.0
        %2319 = vmatpush1.xpose.msra.mxu0 0.0
        %2320 = vmatprep.subr.mxu0 0.0
        %2321 = vmatpush1.xpose.msra.mxu0 0.0
        %2322 = vmatprep.subr.mxu0 0.0
        %2323 = vmatpush1.xpose.msra.mxu0 0.0
        %2324 = vmatprep.subr.mxu0 0.0
        %2325 = vmatpush1.xpose.msra.mxu0 0.0
        %2326 = vmatprep.subr.mxu0 0.0
        %2327 = vmatpush1.xpose.msra.mxu0 0.0
        %2328 = vmatprep.subr.mxu0 0.0
        %2329 = vmatpush1.xpose.msra.mxu0 0.0
        %2330 = vmatprep.subr.mxu0 0.0
        %2331 = vmatpush1.xpose.msra.mxu0 0.0
        %2332 = vmatprep.subr.mxu0 0.0
        %2333 = vmatpush1.xpose.msra.mxu0 0.0
        %2334 = vmatprep.subr.mxu0 0.0
        %2335 = vmatpush1.xpose.msra.mxu0 0.0
        %2336 = vmatprep.subr.mxu0 0.0
        %2337 = vmatpush1.xpose.msra.mxu0 0.0
        %2338 = vmatprep.subr.mxu0 0.0
        %2339 = vmatpush1.xpose.msra.mxu0 0.0
        %2340 = vmatprep.subr.mxu0 0.0
        %2341 = vmatpush1.xpose.msra.mxu0 0.0
        %2342 = vmatprep.subr.mxu0 0.0
        %2343 = vmatpush1.xpose.msra.mxu0 0.0
        %2344 = vmatprep.subr.mxu0 0.0
        %2345 = vmatpush1.xpose.msra.mxu0 0.0
        %2346 = vmatprep.subr.mxu0 0.0
        %2347 = vmatpush1.xpose.msra.mxu0 0.0
        %2348 = vmatprep.subr.mxu0 0.0
        %2349 = vmatpush1.xpose.msra.mxu0 0.0
        %2350 = vmatprep.subr.mxu0 0.0
        %2351 = vmatpush1.xpose.msra.mxu0 0.0
        %2352 = vmatprep.subr.mxu0 0.0
        %2353 = vmatpush1.xpose.msra.mxu0 0.0
        %2354 = vmatprep.subr.mxu0 0.0
        %2355 = vmatpush1.xpose.msra.mxu0 0.0
        %2356 = vmatprep.subr.mxu0 0.0
        %2357 = vmatpush1.xpose.msra.mxu0 0.0
        %2358 = vmatprep.subr.mxu0 0.0
        %2359 = vmatpush1.xpose.msra.mxu0 0.0
        %2360 = vmatprep.subr.mxu0 0.0
        %2361 = vmatpush1.xpose.msra.mxu0 0.0
        %2362 = vmatprep.subr.mxu0 0.0
        %2363 = vmatpush1.xpose.msra.mxu0 0.0
        %2364 = vmatprep.subr.mxu0 0.0
        %2365 = vmatpush1.xpose.msra.mxu0 0.0
        %2366 = vmatprep.subr.mxu0 0.0
        %2367 = vmatpush1.xpose.msra.mxu0 0.0
        %2368 = vmatprep.subr.mxu0 0.0
        %2369 = vmatpush1.xpose.msra.mxu0 0.0
        %2370 = vmatprep.subr.mxu0 0.0
        %2371 = vmatpush1.xpose.msra.mxu0 0.0
        %2372 = vmatprep.subr.mxu0 0.0
        %2373 = vmatpush1.xpose.msra.mxu0 0.0
        %2374 = vmatprep.mubr.f32.mxu0 0.0
        %2375 = vmatmul.mubr.f32.gmra.mrb[0].mxu0 %v2302
        %v2376 = vpop.f32.mrb[0].mxu0
        %v2377 = vadd.f32 %v1674, %v2376
        %v2378 = vpop.f32.mrb[0].mxu0
        %2379 = vmatprep.mubr.f32.mxu0 0.0
        %2380 = vmatmul.mubr.f32.gmra.mrb[0].mxu0 %v2304
        %v2381 = vpop.f32.mrb[0].mxu0
        %v2382 = vadd.f32 %v1675, %v2381
        %v2383 = vpop.f32.mrb[0].mxu0
        %2384 = vdwg.mxu0
        %v2385 = vsel %vm1764, %v2377, -inf
        %2386 = vmax.xlane.f32.xlu0 %v2385
        %v2387 = vpop.xlane.xlu0 %2386
        %v2388 = vsel %vm1764, %v2382, -inf
        %2389 = vmax.xlane.f32.xlu0 %v2388
        %v2390 = vpop.xlane.xlu0 %2389
        %v2391 = vsub.f32 %v2377, %v2387
        %v2392 = vsub.f32 %v2382, %v2390
        %v2393 = vmul.f32 %v2391, 1.442695
        %v2394 = vpow.pop %v2393
        %v2395 = vmul.f32 %v2392, 1.442695
        %v2396 = vpow.pop %v2395
        %v2397 = vsel %vm1764, %v2394, 0.0
        %2398 = vadd.xlane.f32.xlu0 %v2397
        %v2399 = vpop.xlane.xlu0 %2398
        %v2400 = vsel %vm1764, %v2396, 0.0
        %2401 = vadd.xlane.f32.xlu0 %v2400
        %v2402 = vpop.xlane.xlu0 %2401
        %v2403 = vrcp.pop %v2399
        %v2404 = vrcp.pop %v2402
        %v2405 = vmul.f32 %v2394, %v2403
        %v2406 = vmul.f32 %v2396, %v2404
        %2407 = vrot.lane.b32.xlu0 %v1664, 32
        %v2408 = vpop.permute.xlu0 %2407
        %2409 = vrot.lane.b32.xlu0 %v1670, 32
        %v2410 = vpop.permute.xlu0 %2409
        %v2414 = vsel %vm1764, %v2405, 0
        %v2417 = vsel %vm1764, %v2406, 0
        %2419 = vmatprep.subr.mxu0 0.0
        %2420 = vmatpush1.msra.mxu0 %v2408
        %2421 = vmatprep.subr.mxu0 0.0
        %2422 = vmatpush1.msra.mxu0 %v2410
        %2423 = vmatprep.subr.mxu0 0.0
        %2424 = vmatpush1.msra.mxu0 0.0
        %2425 = vmatprep.subr.mxu0 0.0
        %2426 = vmatpush1.msra.mxu0 0.0
        %2427 = vmatprep.subr.mxu0 0.0
        %2428 = vmatpush1.msra.mxu0 0.0
        %2429 = vmatprep.subr.mxu0 0.0
        %2430 = vmatpush1.msra.mxu0 0.0
        %2431 = vmatprep.subr.mxu0 0.0
        %2432 = vmatpush1.msra.mxu0 0.0
        %2433 = vmatprep.subr.mxu0 0.0
        %2434 = vmatpush1.msra.mxu0 0.0
        %2435 = vmatprep.subr.mxu0 0.0
        %2436 = vmatpush1.msra.mxu0 0.0
        %2437 = vmatprep.subr.mxu0 0.0
        %2438 = vmatpush1.msra.mxu0 0.0
        %2439 = vmatprep.subr.mxu0 0.0
        %2440 = vmatpush1.msra.mxu0 0.0
        %2441 = vmatprep.subr.mxu0 0.0
        %2442 = vmatpush1.msra.mxu0 0.0
        %2443 = vmatprep.subr.mxu0 0.0
        %2444 = vmatpush1.msra.mxu0 0.0
        %2445 = vmatprep.subr.mxu0 0.0
        %2446 = vmatpush1.msra.mxu0 0.0
        %2447 = vmatprep.subr.mxu0 0.0
        %2448 = vmatpush1.msra.mxu0 0.0
        %2449 = vmatprep.subr.mxu0 0.0
        %2450 = vmatpush1.msra.mxu0 0.0
        %2451 = vmatprep.subr.mxu0 0.0
        %2452 = vmatpush1.msra.mxu0 0.0
        %2453 = vmatprep.subr.mxu0 0.0
        %2454 = vmatpush1.msra.mxu0 0.0
        %2455 = vmatprep.subr.mxu0 0.0
        %2456 = vmatpush1.msra.mxu0 0.0
        %2457 = vmatprep.subr.mxu0 0.0
        %2458 = vmatpush1.msra.mxu0 0.0
        %2459 = vmatprep.subr.mxu0 0.0
        %2460 = vmatpush1.msra.mxu0 0.0
        %2461 = vmatprep.subr.mxu0 0.0
        %2462 = vmatpush1.msra.mxu0 0.0
        %2463 = vmatprep.subr.mxu0 0.0
        %2464 = vmatpush1.msra.mxu0 0.0
        %2465 = vmatprep.subr.mxu0 0.0
        %2466 = vmatpush1.msra.mxu0 0.0
        %2467 = vmatprep.subr.mxu0 0.0
        %2468 = vmatpush1.msra.mxu0 0.0
        %2469 = vmatprep.subr.mxu0 0.0
        %2470 = vmatpush1.msra.mxu0 0.0
        %2471 = vmatprep.subr.mxu0 0.0
        %2472 = vmatpush1.msra.mxu0 0.0
        %2473 = vmatprep.subr.mxu0 0.0
        %2474 = vmatpush1.msra.mxu0 0.0
        %2475 = vmatprep.subr.mxu0 0.0
        %2476 = vmatpush1.msra.mxu0 0.0
        %2477 = vmatprep.subr.mxu0 0.0
        %2478 = vmatpush1.msra.mxu0 0.0
        %2479 = vmatprep.subr.mxu0 0.0
        %2480 = vmatpush1.msra.mxu0 0.0
        %2481 = vmatprep.subr.mxu0 0.0
        %2482 = vmatpush1.msra.mxu0 0.0
        %2483 = vmatprep.mubr.f32.mxu0 0.0
        %2484 = vmatmul.mubr.f32.gmra.mrb[0].mxu0 %v2414
        %v2485 = vpop.f32.mrb[0].mxu0
        %v2486 = vadd.f32 0.0, %v2485
        %v2487 = vpop.f32.mrb[0].mxu0
        %2488 = vmatprep.mubr.f32.mxu0 0.0
        %2489 = vmatmul.mubr.f32.gmra.mrb[0].mxu0 %v2417
        %v2490 = vpop.f32.mrb[0].mxu0
        %v2491 = vadd.f32 0.0, %v2490
        %v2492 = vpop.f32.mrb[0].mxu0
        %2493 = vdwg.mxu0
        %2496 = vrot.lane.b32.xlu0 %v2486, 96
        %v2497 = vpop.permute.xlu0 %2496
        %2498 = vrot.lane.b32.xlu0 %v2491, 96
        %v2499 = vpop.permute.xlu0 %2498
        %vm2502 = vcmask 1048320
        %2503 = vst.msk [vmem:[#allocation3] sm:$0xff] %vm2502, %v2497
        %2504 = vst.msk [vmem:[#allocation3 + $0x10] sm:$0xff] %vm2502, %v2499
        %v2506 = vsel %vm1676, %v1512, 0
        %v2509 = vsel %vm1676, %v1518, 0
        %v2512 = vsel %vm1676, %v1589, 0
        %v2515 = vsel %vm1676, %v1595, 0
        %2517 = vmatprep.subr.mxu0 0.0
        %2518 = vmatpush1.xpose.msra.mxu0 %v2512
        %2519 = vmatprep.subr.mxu0 0.0
        %2520 = vmatpush1.xpose.msra.mxu0 %v2515
        %2521 = vmatprep.subr.mxu0 0.0
        %2522 = vmatpush1.xpose.msra.mxu0 0.0
        %2523 = vmatprep.subr.mxu0 0.0
        %2524 = vmatpush1.xpose.msra.mxu0 0.0
        %2525 = vmatprep.subr.mxu0 0.0
        %2526 = vmatpush1.xpose.msra.mxu0 0.0
        %2527 = vmatprep.subr.mxu0 0.0
        %2528 = vmatpush1.xpose.msra.mxu0 0.0
        %2529 = vmatprep.subr.mxu0 0.0
        %2530 = vmatpush1.xpose.msra.mxu0 0.0
        %2531 = vmatprep.subr.mxu0 0.0
        %2532 = vmatpush1.xpose.msra.mxu0 0.0
        %2533 = vmatprep.subr.mxu0 0.0
        %2534 = vmatpush1.xpose.msra.mxu0 0.0
        %2535 = vmatprep.subr.mxu0 0.0
        %2536 = vmatpush1.xpose.msra.mxu0 0.0
        %2537 = vmatprep.subr.mxu0 0.0
        %2538 = vmatpush1.xpose.msra.mxu0 0.0
        %2539 = vmatprep.subr.mxu0 0.0
        %2540 = vmatpush1.xpose.msra.mxu0 0.0
        %2541 = vmatprep.subr.mxu0 0.0
        %2542 = vmatpush1.xpose.msra.mxu0 0.0
        %2543 = vmatprep.subr.mxu0 0.0
        %2544 = vmatpush1.xpose.msra.mxu0 0.0
        %2545 = vmatprep.subr.mxu0 0.0
        %2546 = vmatpush1.xpose.msra.mxu0 0.0
        %2547 = vmatprep.subr.mxu0 0.0
        %2548 = vmatpush1.xpose.msra.mxu0 0.0
        %2549 = vmatprep.subr.mxu0 0.0
        %2550 = vmatpush1.xpose.msra.mxu0 0.0
        %2551 = vmatprep.subr.mxu0 0.0
        %2552 = vmatpush1.xpose.msra.mxu0 0.0
        %2553 = vmatprep.subr.mxu0 0.0
        %2554 = vmatpush1.xpose.msra.mxu0 0.0
        %2555 = vmatprep.subr.mxu0 0.0
        %2556 = vmatpush1.xpose.msra.mxu0 0.0
        %2557 = vmatprep.subr.mxu0 0.0
        %2558 = vmatpush1.xpose.msra.mxu0 0.0
        %2559 = vmatprep.subr.mxu0 0.0
        %2560 = vmatpush1.xpose.msra.mxu0 0.0
        %2561 = vmatprep.subr.mxu0 0.0
        %2562 = vmatpush1.xpose.msra.mxu0 0.0
        %2563 = vmatprep.subr.mxu0 0.0
        %2564 = vmatpush1.xpose.msra.mxu0 0.0
        %2565 = vmatprep.subr.mxu0 0.0
        %2566 = vmatpush1.xpose.msra.mxu0 0.0
        %2567 = vmatprep.subr.mxu0 0.0
        %2568 = vmatpush1.xpose.msra.mxu0 0.0
        %2569 = vmatprep.subr.mxu0 0.0
        %2570 = vmatpush1.xpose.msra.mxu0 0.0
        %2571 = vmatprep.subr.mxu0 0.0
        %2572 = vmatpush1.xpose.msra.mxu0 0.0
        %2573 = vmatprep.subr.mxu0 0.0
        %2574 = vmatpush1.xpose.msra.mxu0 0.0
        %2575 = vmatprep.subr.mxu0 0.0
        %2576 = vmatpush1.xpose.msra.mxu0 0.0
        %2577 = vmatprep.subr.mxu0 0.0
        %2578 = vmatpush1.xpose.msra.mxu0 0.0
        %2579 = vmatprep.subr.mxu0 0.0
        %2580 = vmatpush1.xpose.msra.mxu0 0.0
        %2581 = vmatprep.mubr.f32.mxu0 0.0
        %2582 = vmatmul.mubr.f32.gmra.mrb[0].mxu0 %v2506
        %v2583 = vpop.f32.mrb[0].mxu0
        %v2584 = vadd.f32 %v1674, %v2583
        %v2585 = vpop.f32.mrb[0].mxu0
        %2586 = vmatprep.mubr.f32.mxu0 0.0
        %2587 = vmatmul.mubr.f32.gmra.mrb[0].mxu0 %v2509
        %v2588 = vpop.f32.mrb[0].mxu0
        %v2589 = vadd.f32 %v1675, %v2588
        %v2590 = vpop.f32.mrb[0].mxu0
        %2591 = vdwg.mxu0
        %v2592 = vsel %vm1764, %v2584, -inf
        %2593 = vmax.xlane.f32.xlu0 %v2592
        %v2594 = vpop.xlane.xlu0 %2593
        %v2595 = vsel %vm1764, %v2589, -inf
        %2596 = vmax.xlane.f32.xlu0 %v2595
        %v2597 = vpop.xlane.xlu0 %2596
        %v2598 = vsub.f32 %v2584, %v2594
        %v2599 = vsub.f32 %v2589, %v2597
        %v2600 = vmul.f32 %v2598, 1.442695
        %v2601 = vpow.pop %v2600
        %v2602 = vmul.f32 %v2599, 1.442695
        %v2603 = vpow.pop %v2602
        %v2604 = vsel %vm1764, %v2601, 0.0
        %2605 = vadd.xlane.f32.xlu0 %v2604
        %v2606 = vpop.xlane.xlu0 %2605
        %v2607 = vsel %vm1764, %v2603, 0.0
        %2608 = vadd.xlane.f32.xlu0 %v2607
        %v2609 = vpop.xlane.xlu0 %2608
        %v2610 = vrcp.pop %v2606
        %v2611 = vrcp.pop %v2609
        %v2612 = vmul.f32 %v2601, %v2610
        %v2613 = vmul.f32 %v2603, %v2611
        %v2615 = vsel %vm1764, %v2612, 0
        %v2618 = vsel %vm1764, %v2613, 0
        %2620 = vmatprep.subr.mxu0 0.0
        %2621 = vmatpush1.msra.mxu0 %v1666
        %2622 = vmatprep.subr.mxu0 0.0
        %2623 = vmatpush1.msra.mxu0 %v1672
        %2624 = vmatprep.subr.mxu0 0.0
        %2625 = vmatpush1.msra.mxu0 0.0
        %2626 = vmatprep.subr.mxu0 0.0
        %2627 = vmatpush1.msra.mxu0 0.0
        %2628 = vmatprep.subr.mxu0 0.0
        %2629 = vmatpush1.msra.mxu0 0.0
        %2630 = vmatprep.subr.mxu0 0.0
        %2631 = vmatpush1.msra.mxu0 0.0
        %2632 = vmatprep.subr.mxu0 0.0
        %2633 = vmatpush1.msra.mxu0 0.0
        %2634 = vmatprep.subr.mxu0 0.0
        %2635 = vmatpush1.msra.mxu0 0.0
        %2636 = vmatprep.subr.mxu0 0.0
        %2637 = vmatpush1.msra.mxu0 0.0
        %2638 = vmatprep.subr.mxu0 0.0
        %2639 = vmatpush1.msra.mxu0 0.0
        %2640 = vmatprep.subr.mxu0 0.0
        %2641 = vmatpush1.msra.mxu0 0.0
        %2642 = vmatprep.subr.mxu0 0.0
        %2643 = vmatpush1.msra.mxu0 0.0
        %2644 = vmatprep.subr.mxu0 0.0
        %2645 = vmatpush1.msra.mxu0 0.0
        %2646 = vmatprep.subr.mxu0 0.0
        %2647 = vmatpush1.msra.mxu0 0.0
        %2648 = vmatprep.subr.mxu0 0.0
        %2649 = vmatpush1.msra.mxu0 0.0
        %2650 = vmatprep.subr.mxu0 0.0
        %2651 = vmatpush1.msra.mxu0 0.0
        %2652 = vmatprep.subr.mxu0 0.0
        %2653 = vmatpush1.msra.mxu0 0.0
        %2654 = vmatprep.subr.mxu0 0.0
        %2655 = vmatpush1.msra.mxu0 0.0
        %2656 = vmatprep.subr.mxu0 0.0
        %2657 = vmatpush1.msra.mxu0 0.0
        %2658 = vmatprep.subr.mxu0 0.0
        %2659 = vmatpush1.msra.mxu0 0.0
        %2660 = vmatprep.subr.mxu0 0.0
        %2661 = vmatpush1.msra.mxu0 0.0
        %2662 = vmatprep.subr.mxu0 0.0
        %2663 = vmatpush1.msra.mxu0 0.0
        %2664 = vmatprep.subr.mxu0 0.0
        %2665 = vmatpush1.msra.mxu0 0.0
        %2666 = vmatprep.subr.mxu0 0.0
        %2667 = vmatpush1.msra.mxu0 0.0
        %2668 = vmatprep.subr.mxu0 0.0
        %2669 = vmatpush1.msra.mxu0 0.0
        %2670 = vmatprep.subr.mxu0 0.0
        %2671 = vmatpush1.msra.mxu0 0.0
        %2672 = vmatprep.subr.mxu0 0.0
        %2673 = vmatpush1.msra.mxu0 0.0
        %2674 = vmatprep.subr.mxu0 0.0
        %2675 = vmatpush1.msra.mxu0 0.0
        %2676 = vmatprep.subr.mxu0 0.0
        %2677 = vmatpush1.msra.mxu0 0.0
        %2678 = vmatprep.subr.mxu0 0.0
        %2679 = vmatpush1.msra.mxu0 0.0
        %2680 = vmatprep.subr.mxu0 0.0
        %2681 = vmatpush1.msra.mxu0 0.0
        %2682 = vmatprep.subr.mxu0 0.0
        %2683 = vmatpush1.msra.mxu0 0.0
        %2684 = vmatprep.mubr.f32.mxu0 0.0
        %2685 = vmatmul.mubr.f32.gmra.mrb[0].mxu0 %v2615
        %v2686 = vpop.f32.mrb[0].mxu0
        %v2687 = vadd.f32 0.0, %v2686
        %v2688 = vpop.f32.mrb[0].mxu0
        %2689 = vmatprep.mubr.f32.mxu0 0.0
        %2690 = vmatmul.mubr.f32.gmra.mrb[0].mxu0 %v2618
        %v2691 = vpop.f32.mrb[0].mxu0
        %v2692 = vadd.f32 0.0, %v2691
        %v2693 = vpop.f32.mrb[0].mxu0
        %2694 = vdwg.mxu0
        %2695 = vst.msk [vmem:[#allocation3 + $0x8] sm:$0xff] %vm1676, %v2687
        %2696 = vst.msk [vmem:[#allocation3 + $0x18] sm:$0xff] %vm1676, %v2692
        %2697 = vrot.lane.b32.xlu0 %v1512, 96
        %v2698 = vpop.permute.xlu0 %2697
        %2699 = vrot.lane.b32.xlu0 %v1518, 96
        %v2700 = vpop.permute.xlu0 %2699
        %2701 = vrot.lane.b32.xlu0 %v1589, 96
        %v2702 = vpop.permute.xlu0 %2701
        %2703 = vrot.lane.b32.xlu0 %v1595, 96
        %v2704 = vpop.permute.xlu0 %2703
        %v2705 = vsel %vm1676, %v2698, 0
        %v2707 = vsel %vm1676, %v2700, 0
        %v2709 = vsel %vm1676, %v2702, 0
        %v2711 = vsel %vm1676, %v2704, 0
        %2713 = vmatprep.subr.mxu0 0.0
        %2714 = vmatpush1.xpose.msra.mxu0 %v2709
        %2715 = vmatprep.subr.mxu0 0.0
        %2716 = vmatpush1.xpose.msra.mxu0 %v2711
        %2717 = vmatprep.subr.mxu0 0.0
        %2718 = vmatpush1.xpose.msra.mxu0 0.0
        %2719 = vmatprep.subr.mxu0 0.0
        %2720 = vmatpush1.xpose.msra.mxu0 0.0
        %2721 = vmatprep.subr.mxu0 0.0
        %2722 = vmatpush1.xpose.msra.mxu0 0.0
        %2723 = vmatprep.subr.mxu0 0.0
        %2724 = vmatpush1.xpose.msra.mxu0 0.0
        %2725 = vmatprep.subr.mxu0 0.0
        %2726 = vmatpush1.xpose.msra.mxu0 0.0
        %2727 = vmatprep.subr.mxu0 0.0
        %2728 = vmatpush1.xpose.msra.mxu0 0.0
        %2729 = vmatprep.subr.mxu0 0.0
        %2730 = vmatpush1.xpose.msra.mxu0 0.0
        %2731 = vmatprep.subr.mxu0 0.0
        %2732 = vmatpush1.xpose.msra.mxu0 0.0
        %2733 = vmatprep.subr.mxu0 0.0
        %2734 = vmatpush1.xpose.msra.mxu0 0.0
        %2735 = vmatprep.subr.mxu0 0.0
        %2736 = vmatpush1.xpose.msra.mxu0 0.0
        %2737 = vmatprep.subr.mxu0 0.0
        %2738 = vmatpush1.xpose.msra.mxu0 0.0
        %2739 = vmatprep.subr.mxu0 0.0
        %2740 = vmatpush1.xpose.msra.mxu0 0.0
        %2741 = vmatprep.subr.mxu0 0.0
        %2742 = vmatpush1.xpose.msra.mxu0 0.0
        %2743 = vmatprep.subr.mxu0 0.0
        %2744 = vmatpush1.xpose.msra.mxu0 0.0
        %2745 = vmatprep.subr.mxu0 0.0
        %2746 = vmatpush1.xpose.msra.mxu0 0.0
        %2747 = vmatprep.subr.mxu0 0.0
        %2748 = vmatpush1.xpose.msra.mxu0 0.0
        %2749 = vmatprep.subr.mxu0 0.0
        %2750 = vmatpush1.xpose.msra.mxu0 0.0
        %2751 = vmatprep.subr.mxu0 0.0
        %2752 = vmatpush1.xpose.msra.mxu0 0.0
        %2753 = vmatprep.subr.mxu0 0.0
        %2754 = vmatpush1.xpose.msra.mxu0 0.0
        %2755 = vmatprep.subr.mxu0 0.0
        %2756 = vmatpush1.xpose.msra.mxu0 0.0
        %2757 = vmatprep.subr.mxu0 0.0
        %2758 = vmatpush1.xpose.msra.mxu0 0.0
        %2759 = vmatprep.subr.mxu0 0.0
        %2760 = vmatpush1.xpose.msra.mxu0 0.0
        %2761 = vmatprep.subr.mxu0 0.0
        %2762 = vmatpush1.xpose.msra.mxu0 0.0
        %2763 = vmatprep.subr.mxu0 0.0
        %2764 = vmatpush1.xpose.msra.mxu0 0.0
        %2765 = vmatprep.subr.mxu0 0.0
        %2766 = vmatpush1.xpose.msra.mxu0 0.0
        %2767 = vmatprep.subr.mxu0 0.0
        %2768 = vmatpush1.xpose.msra.mxu0 0.0
        %2769 = vmatprep.subr.mxu0 0.0
        %2770 = vmatpush1.xpose.msra.mxu0 0.0
        %2771 = vmatprep.subr.mxu0 0.0
        %2772 = vmatpush1.xpose.msra.mxu0 0.0
        %2773 = vmatprep.subr.mxu0 0.0
        %2774 = vmatpush1.xpose.msra.mxu0 0.0
        %2775 = vmatprep.subr.mxu0 0.0
        %2776 = vmatpush1.xpose.msra.mxu0 0.0
        %2777 = vmatprep.mubr.f32.mxu0 0.0
        %2778 = vmatmul.mubr.f32.gmra.mrb[0].mxu0 %v2705
        %v2779 = vpop.f32.mrb[0].mxu0
        %v2780 = vadd.f32 %v1674, %v2779
        %v2781 = vpop.f32.mrb[0].mxu0
        %2782 = vmatprep.mubr.f32.mxu0 0.0
        %2783 = vmatmul.mubr.f32.gmra.mrb[0].mxu0 %v2707
        %v2784 = vpop.f32.mrb[0].mxu0
        %v2785 = vadd.f32 %v1675, %v2784
        %v2786 = vpop.f32.mrb[0].mxu0
        %2787 = vdwg.mxu0
        %v2788 = vsel %vm1764, %v2780, -inf
        %2789 = vmax.xlane.f32.xlu0 %v2788
        %v2790 = vpop.xlane.xlu0 %2789
        %v2791 = vsel %vm1764, %v2785, -inf
        %2792 = vmax.xlane.f32.xlu0 %v2791
        %v2793 = vpop.xlane.xlu0 %2792
        %v2794 = vsub.f32 %v2780, %v2790
        %v2795 = vsub.f32 %v2785, %v2793
        %v2796 = vmul.f32 %v2794, 1.442695
        %v2797 = vpow.pop %v2796
        %v2798 = vmul.f32 %v2795, 1.442695
        %v2799 = vpow.pop %v2798
        %v2800 = vsel %vm1764, %v2797, 0.0
        %2801 = vadd.xlane.f32.xlu0 %v2800
        %v2802 = vpop.xlane.xlu0 %2801
        %v2803 = vsel %vm1764, %v2799, 0.0
        %2804 = vadd.xlane.f32.xlu0 %v2803
        %v2805 = vpop.xlane.xlu0 %2804
        %v2806 = vrcp.pop %v2802
        %v2807 = vrcp.pop %v2805
        %v2808 = vmul.f32 %v2797, %v2806
        %v2809 = vmul.f32 %v2799, %v2807
        %2812 = vrot.lane.b32.xlu0 %v1666, 96
        %v2813 = vpop.permute.xlu0 %2812
        %2814 = vrot.lane.b32.xlu0 %v1672, 96
        %v2815 = vpop.permute.xlu0 %2814
        %v2819 = vsel %vm1764, %v2808, 0
        %v2822 = vsel %vm1764, %v2809, 0
        %2824 = vmatprep.subr.mxu0 0.0
        %2825 = vmatpush1.msra.mxu0 %v2813
        %2826 = vmatprep.subr.mxu0 0.0
        %2827 = vmatpush1.msra.mxu0 %v2815
        %2828 = vmatprep.subr.mxu0 0.0
        %2829 = vmatpush1.msra.mxu0 0.0
        %2830 = vmatprep.subr.mxu0 0.0
        %2831 = vmatpush1.msra.mxu0 0.0
        %2832 = vmatprep.subr.mxu0 0.0
        %2833 = vmatpush1.msra.mxu0 0.0
        %2834 = vmatprep.subr.mxu0 0.0
        %2835 = vmatpush1.msra.mxu0 0.0
        %2836 = vmatprep.subr.mxu0 0.0
        %2837 = vmatpush1.msra.mxu0 0.0
        %2838 = vmatprep.subr.mxu0 0.0
        %2839 = vmatpush1.msra.mxu0 0.0
        %2840 = vmatprep.subr.mxu0 0.0
        %2841 = vmatpush1.msra.mxu0 0.0
        %2842 = vmatprep.subr.mxu0 0.0
        %2843 = vmatpush1.msra.mxu0 0.0
        %2844 = vmatprep.subr.mxu0 0.0
        %2845 = vmatpush1.msra.mxu0 0.0
        %2846 = vmatprep.subr.mxu0 0.0
        %2847 = vmatpush1.msra.mxu0 0.0
        %2848 = vmatprep.subr.mxu0 0.0
        %2849 = vmatpush1.msra.mxu0 0.0
        %2850 = vmatprep.subr.mxu0 0.0
        %2851 = vmatpush1.msra.mxu0 0.0
        %2852 = vmatprep.subr.mxu0 0.0
        %2853 = vmatpush1.msra.mxu0 0.0
        %2854 = vmatprep.subr.mxu0 0.0
        %2855 = vmatpush1.msra.mxu0 0.0
        %2856 = vmatprep.subr.mxu0 0.0
        %2857 = vmatpush1.msra.mxu0 0.0
        %2858 = vmatprep.subr.mxu0 0.0
        %2859 = vmatpush1.msra.mxu0 0.0
        %2860 = vmatprep.subr.mxu0 0.0
        %2861 = vmatpush1.msra.mxu0 0.0
        %2862 = vmatprep.subr.mxu0 0.0
        %2863 = vmatpush1.msra.mxu0 0.0
        %2864 = vmatprep.subr.mxu0 0.0
        %2865 = vmatpush1.msra.mxu0 0.0
        %2866 = vmatprep.subr.mxu0 0.0
        %2867 = vmatpush1.msra.mxu0 0.0
        %2868 = vmatprep.subr.mxu0 0.0
        %2869 = vmatpush1.msra.mxu0 0.0
        %2870 = vmatprep.subr.mxu0 0.0
        %2871 = vmatpush1.msra.mxu0 0.0
        %2872 = vmatprep.subr.mxu0 0.0
        %2873 = vmatpush1.msra.mxu0 0.0
        %2874 = vmatprep.subr.mxu0 0.0
        %2875 = vmatpush1.msra.mxu0 0.0
        %2876 = vmatprep.subr.mxu0 0.0
        %2877 = vmatpush1.msra.mxu0 0.0
        %2878 = vmatprep.subr.mxu0 0.0
        %2879 = vmatpush1.msra.mxu0 0.0
        %2880 = vmatprep.subr.mxu0 0.0
        %2881 = vmatpush1.msra.mxu0 0.0
        %2882 = vmatprep.subr.mxu0 0.0
        %2883 = vmatpush1.msra.mxu0 0.0
        %2884 = vmatprep.subr.mxu0 0.0
        %2885 = vmatpush1.msra.mxu0 0.0
        %2886 = vmatprep.subr.mxu0 0.0
        %2887 = vmatpush1.msra.mxu0 0.0
        %2888 = vmatprep.mubr.f32.mxu0 0.0
        %2889 = vmatmul.mubr.f32.gmra.mrb[0].mxu0 %v2819
        %v2890 = vpop.f32.mrb[0].mxu0
        %v2891 = vadd.f32 0.0, %v2890
        %v2892 = vpop.f32.mrb[0].mxu0
        %2893 = vmatprep.mubr.f32.mxu0 0.0
        %2894 = vmatmul.mubr.f32.gmra.mrb[0].mxu0 %v2822
        %v2895 = vpop.f32.mrb[0].mxu0
        %v2896 = vadd.f32 0.0, %v2895
        %v2897 = vpop.f32.mrb[0].mxu0
        %2898 = vdwg.mxu0
        %2901 = vrot.lane.b32.xlu0 %v2891, 32
        %v2902 = vpop.permute.xlu0 %2901
        %2903 = vrot.lane.b32.xlu0 %v2896, 32
        %v2904 = vpop.permute.xlu0 %2903
        %2907 = vst.msk [vmem:[#allocation3 + $0x8] sm:$0xff] %vm2080, %v2902
        %2908 = vst.msk [vmem:[#allocation3 + $0x18] sm:$0xff] %vm2080, %v2904
        %2909 = vrot.lane.b32.xlu0 %v1512, 64
        %v2910 = vpop.permute.xlu0 %2909
        %2911 = vrot.lane.b32.xlu0 %v1518, 64
        %v2912 = vpop.permute.xlu0 %2911
        %2913 = vrot.lane.b32.xlu0 %v1589, 64
        %v2914 = vpop.permute.xlu0 %2913
        %2915 = vrot.lane.b32.xlu0 %v1595, 64
        %v2916 = vpop.permute.xlu0 %2915
        %v2917 = vsel %vm1676, %v2910, 0
        %v2919 = vsel %vm1676, %v2912, 0
        %v2921 = vsel %vm1676, %v2914, 0
        %v2923 = vsel %vm1676, %v2916, 0
        %2925 = vmatprep.subr.mxu0 0.0
        %2926 = vmatpush1.xpose.msra.mxu0 %v2921
        %2927 = vmatprep.subr.mxu0 0.0
        %2928 = vmatpush1.xpose.msra.mxu0 %v2923
        %2929 = vmatprep.subr.mxu0 0.0
        %2930 = vmatpush1.xpose.msra.mxu0 0.0
        %2931 = vmatprep.subr.mxu0 0.0
        %2932 = vmatpush1.xpose.msra.mxu0 0.0
        %2933 = vmatprep.subr.mxu0 0.0
        %2934 = vmatpush1.xpose.msra.mxu0 0.0
        %2935 = vmatprep.subr.mxu0 0.0
        %2936 = vmatpush1.xpose.msra.mxu0 0.0
        %2937 = vmatprep.subr.mxu0 0.0
        %2938 = vmatpush1.xpose.msra.mxu0 0.0
        %2939 = vmatprep.subr.mxu0 0.0
        %2940 = vmatpush1.xpose.msra.mxu0 0.0
        %2941 = vmatprep.subr.mxu0 0.0
        %2942 = vmatpush1.xpose.msra.mxu0 0.0
        %2943 = vmatprep.subr.mxu0 0.0
        %2944 = vmatpush1.xpose.msra.mxu0 0.0
        %2945 = vmatprep.subr.mxu0 0.0
        %2946 = vmatpush1.xpose.msra.mxu0 0.0
        %2947 = vmatprep.subr.mxu0 0.0
        %2948 = vmatpush1.xpose.msra.mxu0 0.0
        %2949 = vmatprep.subr.mxu0 0.0
        %2950 = vmatpush1.xpose.msra.mxu0 0.0
        %2951 = vmatprep.subr.mxu0 0.0
        %2952 = vmatpush1.xpose.msra.mxu0 0.0
        %2953 = vmatprep.subr.mxu0 0.0
        %2954 = vmatpush1.xpose.msra.mxu0 0.0
        %2955 = vmatprep.subr.mxu0 0.0
        %2956 = vmatpush1.xpose.msra.mxu0 0.0
        %2957 = vmatprep.subr.mxu0 0.0
        %2958 = vmatpush1.xpose.msra.mxu0 0.0
        %2959 = vmatprep.subr.mxu0 0.0
        %2960 = vmatpush1.xpose.msra.mxu0 0.0
        %2961 = vmatprep.subr.mxu0 0.0
        %2962 = vmatpush1.xpose.msra.mxu0 0.0
        %2963 = vmatprep.subr.mxu0 0.0
        %2964 = vmatpush1.xpose.msra.mxu0 0.0
        %2965 = vmatprep.subr.mxu0 0.0
        %2966 = vmatpush1.xpose.msra.mxu0 0.0
        %2967 = vmatprep.subr.mxu0 0.0
        %2968 = vmatpush1.xpose.msra.mxu0 0.0
        %2969 = vmatprep.subr.mxu0 0.0
        %2970 = vmatpush1.xpose.msra.mxu0 0.0
        %2971 = vmatprep.subr.mxu0 0.0
        %2972 = vmatpush1.xpose.msra.mxu0 0.0
        %2973 = vmatprep.subr.mxu0 0.0
        %2974 = vmatpush1.xpose.msra.mxu0 0.0
        %2975 = vmatprep.subr.mxu0 0.0
        %2976 = vmatpush1.xpose.msra.mxu0 0.0
        %2977 = vmatprep.subr.mxu0 0.0
        %2978 = vmatpush1.xpose.msra.mxu0 0.0
        %2979 = vmatprep.subr.mxu0 0.0
        %2980 = vmatpush1.xpose.msra.mxu0 0.0
        %2981 = vmatprep.subr.mxu0 0.0
        %2982 = vmatpush1.xpose.msra.mxu0 0.0
        %2983 = vmatprep.subr.mxu0 0.0
        %2984 = vmatpush1.xpose.msra.mxu0 0.0
        %2985 = vmatprep.subr.mxu0 0.0
        %2986 = vmatpush1.xpose.msra.mxu0 0.0
        %2987 = vmatprep.subr.mxu0 0.0
        %2988 = vmatpush1.xpose.msra.mxu0 0.0
        %2989 = vmatprep.mubr.f32.mxu0 0.0
        %2990 = vmatmul.mubr.f32.gmra.mrb[0].mxu0 %v2917
        %v2991 = vpop.f32.mrb[0].mxu0
        %v2992 = vadd.f32 %v1674, %v2991
        %v2993 = vpop.f32.mrb[0].mxu0
        %2994 = vmatprep.mubr.f32.mxu0 0.0
        %2995 = vmatmul.mubr.f32.gmra.mrb[0].mxu0 %v2919
        %v2996 = vpop.f32.mrb[0].mxu0
        %v2997 = vadd.f32 %v1675, %v2996
        %v2998 = vpop.f32.mrb[0].mxu0
        %2999 = vdwg.mxu0
        %v3000 = vsel %vm1764, %v2992, -inf
        %3001 = vmax.xlane.f32.xlu0 %v3000
        %v3002 = vpop.xlane.xlu0 %3001
        %v3003 = vsel %vm1764, %v2997, -inf
        %3004 = vmax.xlane.f32.xlu0 %v3003
        %v3005 = vpop.xlane.xlu0 %3004
        %v3006 = vsub.f32 %v2992, %v3002
        %v3007 = vsub.f32 %v2997, %v3005
        %v3008 = vmul.f32 %v3006, 1.442695
        %v3009 = vpow.pop %v3008
        %v3010 = vmul.f32 %v3007, 1.442695
        %v3011 = vpow.pop %v3010
        %v3012 = vsel %vm1764, %v3009, 0.0
        %3013 = vadd.xlane.f32.xlu0 %v3012
        %v3014 = vpop.xlane.xlu0 %3013
        %v3015 = vsel %vm1764, %v3011, 0.0
        %3016 = vadd.xlane.f32.xlu0 %v3015
        %v3017 = vpop.xlane.xlu0 %3016
        %v3018 = vrcp.pop %v3014
        %v3019 = vrcp.pop %v3017
        %v3020 = vmul.f32 %v3009, %v3018
        %v3021 = vmul.f32 %v3011, %v3019
        %3022 = vrot.lane.b32.xlu0 %v1666, 64
        %v3023 = vpop.permute.xlu0 %3022
        %3024 = vrot.lane.b32.xlu0 %v1672, 64
        %v3025 = vpop.permute.xlu0 %3024
        %v3029 = vsel %vm1764, %v3020, 0
        %v3032 = vsel %vm1764, %v3021, 0
        %3034 = vmatprep.subr.mxu0 0.0
        %3035 = vmatpush1.msra.mxu0 %v3023
        %3036 = vmatprep.subr.mxu0 0.0
        %3037 = vmatpush1.msra.mxu0 %v3025
        %3038 = vmatprep.subr.mxu0 0.0
        %3039 = vmatpush1.msra.mxu0 0.0
        %3040 = vmatprep.subr.mxu0 0.0
        %3041 = vmatpush1.msra.mxu0 0.0
        %3042 = vmatprep.subr.mxu0 0.0
        %3043 = vmatpush1.msra.mxu0 0.0
        %3044 = vmatprep.subr.mxu0 0.0
        %3045 = vmatpush1.msra.mxu0 0.0
        %3046 = vmatprep.subr.mxu0 0.0
        %3047 = vmatpush1.msra.mxu0 0.0
        %3048 = vmatprep.subr.mxu0 0.0
        %3049 = vmatpush1.msra.mxu0 0.0
        %3050 = vmatprep.subr.mxu0 0.0
        %3051 = vmatpush1.msra.mxu0 0.0
        %3052 = vmatprep.subr.mxu0 0.0
        %3053 = vmatpush1.msra.mxu0 0.0
        %3054 = vmatprep.subr.mxu0 0.0
        %3055 = vmatpush1.msra.mxu0 0.0
        %3056 = vmatprep.subr.mxu0 0.0
        %3057 = vmatpush1.msra.mxu0 0.0
        %3058 = vmatprep.subr.mxu0 0.0
        %3059 = vmatpush1.msra.mxu0 0.0
        %3060 = vmatprep.subr.mxu0 0.0
        %3061 = vmatpush1.msra.mxu0 0.0
        %3062 = vmatprep.subr.mxu0 0.0
        %3063 = vmatpush1.msra.mxu0 0.0
        %3064 = vmatprep.subr.mxu0 0.0
        %3065 = vmatpush1.msra.mxu0 0.0
        %3066 = vmatprep.subr.mxu0 0.0
        %3067 = vmatpush1.msra.mxu0 0.0
        %3068 = vmatprep.subr.mxu0 0.0
        %3069 = vmatpush1.msra.mxu0 0.0
        %3070 = vmatprep.subr.mxu0 0.0
        %3071 = vmatpush1.msra.mxu0 0.0
        %3072 = vmatprep.subr.mxu0 0.0
        %3073 = vmatpush1.msra.mxu0 0.0
        %3074 = vmatprep.subr.mxu0 0.0
        %3075 = vmatpush1.msra.mxu0 0.0
        %3076 = vmatprep.subr.mxu0 0.0
        %3077 = vmatpush1.msra.mxu0 0.0
        %3078 = vmatprep.subr.mxu0 0.0
        %3079 = vmatpush1.msra.mxu0 0.0
        %3080 = vmatprep.subr.mxu0 0.0
        %3081 = vmatpush1.msra.mxu0 0.0
        %3082 = vmatprep.subr.mxu0 0.0
        %3083 = vmatpush1.msra.mxu0 0.0
        %3084 = vmatprep.subr.mxu0 0.0
        %3085 = vmatpush1.msra.mxu0 0.0
        %3086 = vmatprep.subr.mxu0 0.0
        %3087 = vmatpush1.msra.mxu0 0.0
        %3088 = vmatprep.subr.mxu0 0.0
        %3089 = vmatpush1.msra.mxu0 0.0
        %3090 = vmatprep.subr.mxu0 0.0
        %3091 = vmatpush1.msra.mxu0 0.0
        %3092 = vmatprep.subr.mxu0 0.0
        %3093 = vmatpush1.msra.mxu0 0.0
        %3094 = vmatprep.subr.mxu0 0.0
        %3095 = vmatpush1.msra.mxu0 0.0
        %3096 = vmatprep.subr.mxu0 0.0
        %3097 = vmatpush1.msra.mxu0 0.0
        %3098 = vmatprep.mubr.f32.mxu0 0.0
        %3099 = vmatmul.mubr.f32.gmra.mrb[0].mxu0 %v3029
        %v3100 = vpop.f32.mrb[0].mxu0
        %v3101 = vadd.f32 0.0, %v3100
        %v3102 = vpop.f32.mrb[0].mxu0
        %3103 = vmatprep.mubr.f32.mxu0 0.0
        %3104 = vmatmul.mubr.f32.gmra.mrb[0].mxu0 %v3032
        %v3105 = vpop.f32.mrb[0].mxu0
        %v3106 = vadd.f32 0.0, %v3105
        %v3107 = vpop.f32.mrb[0].mxu0
        %3108 = vdwg.mxu0
        %3111 = vrot.lane.b32.xlu0 %v3101, 64
        %v3112 = vpop.permute.xlu0 %3111
        %3113 = vrot.lane.b32.xlu0 %v3106, 64
        %v3114 = vpop.permute.xlu0 %3113
        %3117 = vst.msk [vmem:[#allocation3 + $0x8] sm:$0xff] %vm2291, %v3112
        %3118 = vst.msk [vmem:[#allocation3 + $0x18] sm:$0xff] %vm2291, %v3114
        %3119 = vrot.lane.b32.xlu0 %v1512, 32
        %v3120 = vpop.permute.xlu0 %3119
        %3121 = vrot.lane.b32.xlu0 %v1518, 32
        %v3122 = vpop.permute.xlu0 %3121
        %3123 = vrot.lane.b32.xlu0 %v1589, 32
        %v3124 = vpop.permute.xlu0 %3123
        %3125 = vrot.lane.b32.xlu0 %v1595, 32
        %v3126 = vpop.permute.xlu0 %3125
        %v3127 = vsel %vm1676, %v3120, 0
        %v3129 = vsel %vm1676, %v3122, 0
        %v3131 = vsel %vm1676, %v3124, 0
        %v3133 = vsel %vm1676, %v3126, 0
        %3135 = vmatprep.subr.mxu0 0.0
        %3136 = vmatpush1.xpose.msra.mxu0 %v3131
        %3137 = vmatprep.subr.mxu0 0.0
        %3138 = vmatpush1.xpose.msra.mxu0 %v3133
        %3139 = vmatprep.subr.mxu0 0.0
        %3140 = vmatpush1.xpose.msra.mxu0 0.0
        %3141 = vmatprep.subr.mxu0 0.0
        %3142 = vmatpush1.xpose.msra.mxu0 0.0
        %3143 = vmatprep.subr.mxu0 0.0
        %3144 = vmatpush1.xpose.msra.mxu0 0.0
        %3145 = vmatprep.subr.mxu0 0.0
        %3146 = vmatpush1.xpose.msra.mxu0 0.0
        %3147 = vmatprep.subr.mxu0 0.0
        %3148 = vmatpush1.xpose.msra.mxu0 0.0
        %3149 = vmatprep.subr.mxu0 0.0
        %3150 = vmatpush1.xpose.msra.mxu0 0.0
        %3151 = vmatprep.subr.mxu0 0.0
        %3152 = vmatpush1.xpose.msra.mxu0 0.0
        %3153 = vmatprep.subr.mxu0 0.0
        %3154 = vmatpush1.xpose.msra.mxu0 0.0
        %3155 = vmatprep.subr.mxu0 0.0
        %3156 = vmatpush1.xpose.msra.mxu0 0.0
        %3157 = vmatprep.subr.mxu0 0.0
        %3158 = vmatpush1.xpose.msra.mxu0 0.0
        %3159 = vmatprep.subr.mxu0 0.0
        %3160 = vmatpush1.xpose.msra.mxu0 0.0
        %3161 = vmatprep.subr.mxu0 0.0
        %3162 = vmatpush1.xpose.msra.mxu0 0.0
        %3163 = vmatprep.subr.mxu0 0.0
        %3164 = vmatpush1.xpose.msra.mxu0 0.0
        %3165 = vmatprep.subr.mxu0 0.0
        %3166 = vmatpush1.xpose.msra.mxu0 0.0
        %3167 = vmatprep.subr.mxu0 0.0
        %3168 = vmatpush1.xpose.msra.mxu0 0.0
        %3169 = vmatprep.subr.mxu0 0.0
        %3170 = vmatpush1.xpose.msra.mxu0 0.0
        %3171 = vmatprep.subr.mxu0 0.0
        %3172 = vmatpush1.xpose.msra.mxu0 0.0
        %3173 = vmatprep.subr.mxu0 0.0
        %3174 = vmatpush1.xpose.msra.mxu0 0.0
        %3175 = vmatprep.subr.mxu0 0.0
        %3176 = vmatpush1.xpose.msra.mxu0 0.0
        %3177 = vmatprep.subr.mxu0 0.0
        %3178 = vmatpush1.xpose.msra.mxu0 0.0
        %3179 = vmatprep.subr.mxu0 0.0
        %3180 = vmatpush1.xpose.msra.mxu0 0.0
        %3181 = vmatprep.subr.mxu0 0.0
        %3182 = vmatpush1.xpose.msra.mxu0 0.0
        %3183 = vmatprep.subr.mxu0 0.0
        %3184 = vmatpush1.xpose.msra.mxu0 0.0
        %3185 = vmatprep.subr.mxu0 0.0
        %3186 = vmatpush1.xpose.msra.mxu0 0.0
        %3187 = vmatprep.subr.mxu0 0.0
        %3188 = vmatpush1.xpose.msra.mxu0 0.0
        %3189 = vmatprep.subr.mxu0 0.0
        %3190 = vmatpush1.xpose.msra.mxu0 0.0
        %3191 = vmatprep.subr.mxu0 0.0
        %3192 = vmatpush1.xpose.msra.mxu0 0.0
        %3193 = vmatprep.subr.mxu0 0.0
        %3194 = vmatpush1.xpose.msra.mxu0 0.0
        %3195 = vmatprep.subr.mxu0 0.0
        %3196 = vmatpush1.xpose.msra.mxu0 0.0
        %3197 = vmatprep.subr.mxu0 0.0
        %3198 = vmatpush1.xpose.msra.mxu0 0.0
        %3199 = vmatprep.mubr.f32.mxu0 0.0
        %3200 = vmatmul.mubr.f32.gmra.mrb[0].mxu0 %v3127
        %v3201 = vpop.f32.mrb[0].mxu0
        %v3202 = vadd.f32 %v1674, %v3201
        %v3203 = vpop.f32.mrb[0].mxu0
        %3204 = vmatprep.mubr.f32.mxu0 0.0
        %3205 = vmatmul.mubr.f32.gmra.mrb[0].mxu0 %v3129
        %v3206 = vpop.f32.mrb[0].mxu0
        %v3207 = vadd.f32 %v1675, %v3206
        %v3208 = vpop.f32.mrb[0].mxu0
        %3209 = vdwg.mxu0
        %v3210 = vsel %vm1764, %v3202, -inf
        %3211 = vmax.xlane.f32.xlu0 %v3210
        %v3212 = vpop.xlane.xlu0 %3211
        %v3213 = vsel %vm1764, %v3207, -inf
        %3214 = vmax.xlane.f32.xlu0 %v3213
        %v3215 = vpop.xlane.xlu0 %3214
        %v3216 = vsub.f32 %v3202, %v3212
        %v3217 = vsub.f32 %v3207, %v3215
        %v3218 = vmul.f32 %v3216, 1.442695
        %v3219 = vpow.pop %v3218
        %v3220 = vmul.f32 %v3217, 1.442695
        %v3221 = vpow.pop %v3220
        %v3222 = vsel %vm1764, %v3219, 0.0
        %3223 = vadd.xlane.f32.xlu0 %v3222
        %v3224 = vpop.xlane.xlu0 %3223
        %v3225 = vsel %vm1764, %v3221, 0.0
        %3226 = vadd.xlane.f32.xlu0 %v3225
        %v3227 = vpop.xlane.xlu0 %3226
        %v3228 = vrcp.pop %v3224
        %v3229 = vrcp.pop %v3227
        %v3230 = vmul.f32 %v3219, %v3228
        %v3231 = vmul.f32 %v3221, %v3229
        %3232 = vrot.lane.b32.xlu0 %v1666, 32
        %v3233 = vpop.permute.xlu0 %3232
        %3234 = vrot.lane.b32.xlu0 %v1672, 32
        %v3235 = vpop.permute.xlu0 %3234
        %v3239 = vsel %vm1764, %v3230, 0
        %v3242 = vsel %vm1764, %v3231, 0
        %3244 = vmatprep.subr.mxu0 0.0
        %3245 = vmatpush1.msra.mxu0 %v3233
        %3246 = vmatprep.subr.mxu0 0.0
        %3247 = vmatpush1.msra.mxu0 %v3235
        %3248 = vmatprep.subr.mxu0 0.0
        %3249 = vmatpush1.msra.mxu0 0.0
        %3250 = vmatprep.subr.mxu0 0.0
        %3251 = vmatpush1.msra.mxu0 0.0
        %3252 = vmatprep.subr.mxu0 0.0
        %3253 = vmatpush1.msra.mxu0 0.0
        %3254 = vmatprep.subr.mxu0 0.0
        %3255 = vmatpush1.msra.mxu0 0.0
        %3256 = vmatprep.subr.mxu0 0.0
        %3257 = vmatpush1.msra.mxu0 0.0
        %3258 = vmatprep.subr.mxu0 0.0
        %3259 = vmatpush1.msra.mxu0 0.0
        %3260 = vmatprep.subr.mxu0 0.0
        %3261 = vmatpush1.msra.mxu0 0.0
        %3262 = vmatprep.subr.mxu0 0.0
        %3263 = vmatpush1.msra.mxu0 0.0
        %3264 = vmatprep.subr.mxu0 0.0
        %3265 = vmatpush1.msra.mxu0 0.0
        %3266 = vmatprep.subr.mxu0 0.0
        %3267 = vmatpush1.msra.mxu0 0.0
        %3268 = vmatprep.subr.mxu0 0.0
        %3269 = vmatpush1.msra.mxu0 0.0
        %3270 = vmatprep.subr.mxu0 0.0
        %3271 = vmatpush1.msra.mxu0 0.0
        %3272 = vmatprep.subr.mxu0 0.0
        %3273 = vmatpush1.msra.mxu0 0.0
        %3274 = vmatprep.subr.mxu0 0.0
        %3275 = vmatpush1.msra.mxu0 0.0
        %3276 = vmatprep.subr.mxu0 0.0
        %3277 = vmatpush1.msra.mxu0 0.0
        %3278 = vmatprep.subr.mxu0 0.0
        %3279 = vmatpush1.msra.mxu0 0.0
        %3280 = vmatprep.subr.mxu0 0.0
        %3281 = vmatpush1.msra.mxu0 0.0
        %3282 = vmatprep.subr.mxu0 0.0
        %3283 = vmatpush1.msra.mxu0 0.0
        %3284 = vmatprep.subr.mxu0 0.0
        %3285 = vmatpush1.msra.mxu0 0.0
        %3286 = vmatprep.subr.mxu0 0.0
        %3287 = vmatpush1.msra.mxu0 0.0
        %3288 = vmatprep.subr.mxu0 0.0
        %3289 = vmatpush1.msra.mxu0 0.0
        %3290 = vmatprep.subr.mxu0 0.0
        %3291 = vmatpush1.msra.mxu0 0.0
        %3292 = vmatprep.subr.mxu0 0.0
        %3293 = vmatpush1.msra.mxu0 0.0
        %3294 = vmatprep.subr.mxu0 0.0
        %3295 = vmatpush1.msra.mxu0 0.0
        %3296 = vmatprep.subr.mxu0 0.0
        %3297 = vmatpush1.msra.mxu0 0.0
        %3298 = vmatprep.subr.mxu0 0.0
        %3299 = vmatpush1.msra.mxu0 0.0
        %3300 = vmatprep.subr.mxu0 0.0
        %3301 = vmatpush1.msra.mxu0 0.0
        %3302 = vmatprep.subr.mxu0 0.0
        %3303 = vmatpush1.msra.mxu0 0.0
        %3304 = vmatprep.subr.mxu0 0.0
        %3305 = vmatpush1.msra.mxu0 0.0
        %3306 = vmatprep.subr.mxu0 0.0
        %3307 = vmatpush1.msra.mxu0 0.0
        %3308 = vmatprep.mubr.f32.mxu0 0.0
        %3309 = vmatmul.mubr.f32.gmra.mrb[0].mxu0 %v3239
        %v3310 = vpop.f32.mrb[0].mxu0
        %v3311 = vadd.f32 0.0, %v3310
        %v3312 = vpop.f32.mrb[0].mxu0
        %3313 = vmatprep.mubr.f32.mxu0 0.0
        %3314 = vmatmul.mubr.f32.gmra.mrb[0].mxu0 %v3242
        %v3315 = vpop.f32.mrb[0].mxu0
        %v3316 = vadd.f32 0.0, %v3315
        %v3317 = vpop.f32.mrb[0].mxu0
        %3318 = vdwg.mxu0
        %3321 = vrot.lane.b32.xlu0 %v3311, 96
        %v3322 = vpop.permute.xlu0 %3321
        %3323 = vrot.lane.b32.xlu0 %v3316, 96
        %v3324 = vpop.permute.xlu0 %3323
        %3327 = vst.msk [vmem:[#allocation3 + $0x8] sm:$0xff] %vm2502, %v3322
        %3328 = vst.msk [vmem:[#allocation3 + $0x18] sm:$0xff] %vm2502, %v3324
        %v3329 = vld [vmem:[#allocation3] sm:$0xff]
        %v3330 = vld [vmem:[#allocation3 + $0x8] sm:$0xff]
        %v3331 = vld [vmem:[#allocation3 + $0x10] sm:$0xff]
        %v3332 = vld [vmem:[#allocation3 + $0x18] sm:$0xff]
        %v3333 = vld [vmem:[%s898] sm:$0xff]
        %v3334 = vld [vmem:[%s898 + $0x8] sm:$0xff]
        %v3335 = vld [vmem:[%s898 + $0x10] sm:$0xff]
        %v3336 = vld [vmem:[%s898 + $0x18] sm:$0xff]
        %v3337 = vld [vmem:[%s898 + $0x20] sm:$0xff]
        %v3338 = vld [vmem:[%s898 + $0x28] sm:$0xff]
        %v3339 = vld [vmem:[%s898 + $0x30] sm:$0xff]
        %v3340 = vld [vmem:[%s898 + $0x38] sm:$0xff]
        %v3341 = vld [vmem:[%s898 + $0x40] sm:$0xff]
        %v3342 = vld [vmem:[%s898 + $0x48] sm:$0xff]
        %v3343 = vld [vmem:[%s898 + $0x50] sm:$0xff]
        %v3344 = vld [vmem:[%s898 + $0x58] sm:$0xff]
        %v3345 = vld [vmem:[%s898 + $0x60] sm:$0xff]
        %v3346 = vld [vmem:[%s898 + $0x68] sm:$0xff]
        %v3347 = vld [vmem:[%s898 + $0x70] sm:$0xff]
        %v3348 = vld [vmem:[%s898 + $0x78] sm:$0xff]
        %v3349 = vld [vmem:[%s898 + $0x80] sm:$0xff]
        %v3350 = vld [vmem:[%s898 + $0x88] sm:$0xff]
        %v3351 = vld [vmem:[%s898 + $0x90] sm:$0xff]
        %v3352 = vld [vmem:[%s898 + $0x98] sm:$0xff]
        %v3353 = vld [vmem:[%s898 + $0xa0] sm:$0xff]
        %v3354 = vld [vmem:[%s898 + $0xa8] sm:$0xff]
        %v3355 = vld [vmem:[%s898 + $0xb0] sm:$0xff]
        %v3356 = vld [vmem:[%s898 + $0xb8] sm:$0xff]
        %v3357 = vld [vmem:[%s898 + $0xc0] sm:$0xff]
        %v3358 = vld [vmem:[%s898 + $0xc8] sm:$0xff]
        %v3359 = vld [vmem:[%s898 + $0xd0] sm:$0xff]
        %v3360 = vld [vmem:[%s898 + $0xd8] sm:$0xff]
        %v3361 = vld [vmem:[%s898 + $0xe0] sm:$0xff]
        %v3362 = vld [vmem:[%s898 + $0xe8] sm:$0xff]
        %v3363 = vld [vmem:[%s898 + $0xf0] sm:$0xff]
        %v3364 = vld [vmem:[%s898 + $0xf8] sm:$0xff]
        %v3365 = vld [vmem:[%s898 + $0x100] sm:$0xff]
        %v3366 = vld [vmem:[%s898 + $0x108] sm:$0xff]
        %v3367 = vld [vmem:[%s898 + $0x110] sm:$0xff]
        %v3368 = vld [vmem:[%s898 + $0x118] sm:$0xff]
        %v3369 = vld [vmem:[%s898 + $0x120] sm:$0xff]
        %v3370 = vld [vmem:[%s898 + $0x128] sm:$0xff]
        %v3371 = vld [vmem:[%s898 + $0x130] sm:$0xff]
        %v3372 = vld [vmem:[%s898 + $0x138] sm:$0xff]
        %v3373 = vld [vmem:[%s898 + $0x140] sm:$0xff]
        %v3374 = vld [vmem:[%s898 + $0x148] sm:$0xff]
        %v3375 = vld [vmem:[%s898 + $0x150] sm:$0xff]
        %v3376 = vld [vmem:[%s898 + $0x158] sm:$0xff]
        %v3377 = vld [vmem:[%s898 + $0x160] sm:$0xff]
        %v3378 = vld [vmem:[%s898 + $0x168] sm:$0xff]
        %v3379 = vld [vmem:[%s898 + $0x170] sm:$0xff]
        %v3380 = vld [vmem:[%s898 + $0x178] sm:$0xff]
        %v3381 = vld [vmem:[%s898 + $0x180] sm:$0xff]
        %v3382 = vld [vmem:[%s898 + $0x188] sm:$0xff]
        %v3383 = vld [vmem:[%s898 + $0x190] sm:$0xff]
        %v3384 = vld [vmem:[%s898 + $0x198] sm:$0xff]
        %v3385 = vld [vmem:[%s898 + $0x1a0] sm:$0xff]
        %v3386 = vld [vmem:[%s898 + $0x1a8] sm:$0xff]
        %v3387 = vld [vmem:[%s898 + $0x1b0] sm:$0xff]
        %v3388 = vld [vmem:[%s898 + $0x1b8] sm:$0xff]
        %v3389 = vld [vmem:[%s898 + $0x1c0] sm:$0xff]
        %v3390 = vld [vmem:[%s898 + $0x1c8] sm:$0xff]
        %v3391 = vld [vmem:[%s898 + $0x1d0] sm:$0xff]
        %v3392 = vld [vmem:[%s898 + $0x1d8] sm:$0xff]
        %v3393 = vld [vmem:[%s898 + $0x1e0] sm:$0xff]
        %v3394 = vld [vmem:[%s898 + $0x1e8] sm:$0xff]
        %v3395 = vld [vmem:[%s898 + $0x1f0] sm:$0xff]
        %v3396 = vld [vmem:[%s898 + $0x1f8] sm:$0xff]
        %v3397 = vld [vmem:[%s907] sm:$0x3]
        %v3399 = vlaneseq
        %v3400 = vshrl.u32 %v3399, 7
        %v3401 = vsub.s32 0, %v3400
        %v3402 = vrot.slane %v3397, %v3401
        %v3403 = vlaneseq
        %v3404 = vshrl.u32 %v3403, 7
        %v3405 = vsub.s32 1, %v3404
        %v3406 = vrot.slane %v3397, %v3405
        %3409 = vmatprep.subr.mxu0 %v3334
        %3410 = vmatpush1.msra.mxu0 %v3333
        %3411 = vmatprep.subr.mxu0 %v3336
        %3412 = vmatpush1.msra.mxu0 %v3335
        %3413 = vmatprep.subr.mxu0 %v3338
        %3414 = vmatpush1.msra.mxu0 %v3337
        %3415 = vmatprep.subr.mxu0 %v3340
        %3416 = vmatpush1.msra.mxu0 %v3339
        %3417 = vmatprep.subr.mxu0 %v3342
        %3418 = vmatpush1.msra.mxu0 %v3341
        %3419 = vmatprep.subr.mxu0 %v3344
        %3420 = vmatpush1.msra.mxu0 %v3343
        %3421 = vmatprep.subr.mxu0 %v3346
        %3422 = vmatpush1.msra.mxu0 %v3345
        %3423 = vmatprep.subr.mxu0 %v3348
        %3424 = vmatpush1.msra.mxu0 %v3347
        %3425 = vmatprep.subr.mxu0 %v3350
        %3426 = vmatpush1.msra.mxu0 %v3349
        %3427 = vmatprep.subr.mxu0 %v3352
        %3428 = vmatpush1.msra.mxu0 %v3351
        %3429 = vmatprep.subr.mxu0 %v3354
        %3430 = vmatpush1.msra.mxu0 %v3353
        %3431 = vmatprep.subr.mxu0 %v3356
        %3432 = vmatpush1.msra.mxu0 %v3355
        %3433 = vmatprep.subr.mxu0 %v3358
        %3434 = vmatpush1.msra.mxu0 %v3357
        %3435 = vmatprep.subr.mxu0 %v3360
        %3436 = vmatpush1.msra.mxu0 %v3359
        %3437 = vmatprep.subr.mxu0 %v3362
        %3438 = vmatpush1.msra.mxu0 %v3361
        %3439 = vmatprep.subr.mxu0 %v3364
        %3440 = vmatpush1.msra.mxu0 %v3363
        %3441 = vmatprep.subr.mxu0 %v3366
        %3442 = vmatpush1.msra.mxu0 %v3365
        %3443 = vmatprep.subr.mxu0 %v3368
        %3444 = vmatpush1.msra.mxu0 %v3367
        %3445 = vmatprep.subr.mxu0 %v3370
        %3446 = vmatpush1.msra.mxu0 %v3369
        %3447 = vmatprep.subr.mxu0 %v3372
        %3448 = vmatpush1.msra.mxu0 %v3371
        %3449 = vmatprep.subr.mxu0 %v3374
        %3450 = vmatpush1.msra.mxu0 %v3373
        %3451 = vmatprep.subr.mxu0 %v3376
        %3452 = vmatpush1.msra.mxu0 %v3375
        %3453 = vmatprep.subr.mxu0 %v3378
        %3454 = vmatpush1.msra.mxu0 %v3377
        %3455 = vmatprep.subr.mxu0 %v3380
        %3456 = vmatpush1.msra.mxu0 %v3379
        %3457 = vmatprep.subr.mxu0 %v3382
        %3458 = vmatpush1.msra.mxu0 %v3381
        %3459 = vmatprep.subr.mxu0 %v3384
        %3460 = vmatpush1.msra.mxu0 %v3383
        %3461 = vmatprep.subr.mxu0 %v3386
        %3462 = vmatpush1.msra.mxu0 %v3385
        %3463 = vmatprep.subr.mxu0 %v3388
        %3464 = vmatpush1.msra.mxu0 %v3387
        %3465 = vmatprep.subr.mxu0 %v3390
        %3466 = vmatpush1.msra.mxu0 %v3389
        %3467 = vmatprep.subr.mxu0 %v3392
        %3468 = vmatpush1.msra.mxu0 %v3391
        %3469 = vmatprep.subr.mxu0 %v3394
        %3470 = vmatpush1.msra.mxu0 %v3393
        %3471 = vmatprep.subr.mxu0 %v3396
        %3472 = vmatpush1.msra.mxu0 %v3395
        %3473 = vmatprep.mubr.f32.mxu0 %v3330
        %3474 = vmatmul.mubr.f32.gmra.mrb[0].mxu0 %v3329
        %v3475 = vpop.f32.mrb[0].mxu0
        %v3476 = vadd.f32 %v3402, %v3475
        %v3477 = vpop.f32.mrb[0].mxu0
        %v3478 = vadd.f32 %v3406, %v3477
        %3479 = vmatprep.mubr.f32.mxu0 %v3332
        %3480 = vmatmul.mubr.f32.gmra.mrb[0].mxu0 %v3331
        %v3481 = vpop.f32.mrb[0].mxu0
        %v3482 = vadd.f32 %v3402, %v3481
        %v3483 = vpop.f32.mrb[0].mxu0
        %v3484 = vadd.f32 %v3406, %v3483
        %3485 = vdwg.mxu0
        %v3486 = vadd.f32 %v1215, %v3476
        %v3487 = vadd.f32 %v1216, %v3478
        %v3488 = vadd.f32 %v1217, %v3482
        %v3489 = vadd.f32 %v1218, %v3484
        %v3490 = vld [vmem:[%s916] sm:$0x3]
        %v3491 = vld [vmem:[%s925] sm:$0x3]
        %v3492 = vadd.f32 %v3486, %v3487
        %3493 = vadd.xlane.f32.xlu0 %v3492
        %v3494 = vpop.xlane.xlu0 %3493
        %v3495 = vadd.f32 %v3488, %v3489
        %3496 = vadd.xlane.f32.xlu0 %v3495
        %v3497 = vpop.xlane.xlu0 %3496
        %v3498 = vrcp.pop 256.0
        %v3499 = vmul.f32 %v3494, %v3498
        %v3500 = vmul.f32 %v3497, %v3498
        %v3501 = vsub.f32 %v3486, %v3499
        %v3502 = vsub.f32 %v3487, %v3499
        %v3503 = vsub.f32 %v3488, %v3500
        %v3504 = vsub.f32 %v3489, %v3500
        %v3505 = vmul.f32 %v3501, %v3501
        %v3506 = vmul.f32 %v3502, %v3502
        %v3507 = vmul.f32 %v3503, %v3503
        %v3508 = vmul.f32 %v3504, %v3504
        %v3509 = vadd.f32 %v3505, %v3506
        %3510 = vadd.xlane.f32.xlu0 %v3509
        %v3511 = vpop.xlane.xlu0 %3510
        %v3512 = vadd.f32 %v3507, %v3508
        %3513 = vadd.xlane.f32.xlu0 %v3512
        %v3514 = vpop.xlane.xlu0 %3513
        %v3515 = vmul.f32 %v3511, %v3498
        %v3516 = vmul.f32 %v3514, %v3498
        %v3517 = vadd.f32 %v3515, 1e-05
        %v3518 = vadd.f32 %v3516, 1e-05
        %v3519 = vrsqrt.pop %v3517
        %v3520 = vrsqrt.pop %v3518
        %v3521 = vmul.f32 %v3501, %v3519
        %v3522 = vmul.f32 %v3502, %v3519
        %v3523 = vmul.f32 %v3503, %v3520
        %v3524 = vmul.f32 %v3504, %v3520
        %v3526 = vlaneseq
        %v3527 = vshrl.u32 %v3526, 7
        %v3528 = vsub.s32 0, %v3527
        %v3529 = vrot.slane %v3490, %v3528
        %v3530 = vlaneseq
        %v3531 = vshrl.u32 %v3530, 7
        %v3532 = vsub.s32 1, %v3531
        %v3533 = vrot.slane %v3490, %v3532
        %v3536 = vmul.f32 %v3521, %v3529
        %v3537 = vmul.f32 %v3522, %v3533
        %v3538 = vmul.f32 %v3523, %v3529
        %v3539 = vmul.f32 %v3524, %v3533
        %v3541 = vlaneseq
        %v3542 = vshrl.u32 %v3541, 7
        %v3543 = vsub.s32 0, %v3542
        %v3544 = vrot.slane %v3491, %v3543
        %v3545 = vlaneseq
        %v3546 = vshrl.u32 %v3545, 7
        %v3547 = vsub.s32 1, %v3546
        %v3548 = vrot.slane %v3491, %v3547
        %v3551 = vadd.f32 %v3536, %v3544
        %v3552 = vadd.f32 %v3537, %v3548
        %v3553 = vadd.f32 %v3538, %v3544
        %v3554 = vadd.f32 %v3539, %v3548
        %v3555 = vld [vmem:[%s934] sm:$0xff]
        %v3556 = vld [vmem:[%s934 + $0x8] sm:$0xff]
        %v3557 = vld [vmem:[%s934 + $0x10] sm:$0xff]
        %v3558 = vld [vmem:[%s934 + $0x18] sm:$0xff]
        %v3559 = vld [vmem:[%s934 + $0x20] sm:$0xff]
        %v3560 = vld [vmem:[%s934 + $0x28] sm:$0xff]
        %v3561 = vld [vmem:[%s934 + $0x30] sm:$0xff]
        %v3562 = vld [vmem:[%s934 + $0x38] sm:$0xff]
        %v3563 = vld [vmem:[%s934 + $0x40] sm:$0xff]
        %v3564 = vld [vmem:[%s934 + $0x48] sm:$0xff]
        %v3565 = vld [vmem:[%s934 + $0x50] sm:$0xff]
        %v3566 = vld [vmem:[%s934 + $0x58] sm:$0xff]
        %v3567 = vld [vmem:[%s934 + $0x60] sm:$0xff]
        %v3568 = vld [vmem:[%s934 + $0x68] sm:$0xff]
        %v3569 = vld [vmem:[%s934 + $0x70] sm:$0xff]
        %v3570 = vld [vmem:[%s934 + $0x78] sm:$0xff]
        %v3571 = vld [vmem:[%s934 + $0x80] sm:$0xff]
        %v3572 = vld [vmem:[%s934 + $0x88] sm:$0xff]
        %v3573 = vld [vmem:[%s934 + $0x90] sm:$0xff]
        %v3574 = vld [vmem:[%s934 + $0x98] sm:$0xff]
        %v3575 = vld [vmem:[%s934 + $0xa0] sm:$0xff]
        %v3576 = vld [vmem:[%s934 + $0xa8] sm:$0xff]
        %v3577 = vld [vmem:[%s934 + $0xb0] sm:$0xff]
        %v3578 = vld [vmem:[%s934 + $0xb8] sm:$0xff]
        %v3579 = vld [vmem:[%s934 + $0xc0] sm:$0xff]
        %v3580 = vld [vmem:[%s934 + $0xc8] sm:$0xff]
        %v3581 = vld [vmem:[%s934 + $0xd0] sm:$0xff]
        %v3582 = vld [vmem:[%s934 + $0xd8] sm:$0xff]
        %v3583 = vld [vmem:[%s934 + $0xe0] sm:$0xff]
        %v3584 = vld [vmem:[%s934 + $0xe8] sm:$0xff]
        %v3585 = vld [vmem:[%s934 + $0xf0] sm:$0xff]
        %v3586 = vld [vmem:[%s934 + $0xf8] sm:$0xff]
        %v3587 = vld [vmem:[%s934 + $0x100] sm:$0xff]
        %v3588 = vld [vmem:[%s934 + $0x108] sm:$0xff]
        %v3589 = vld [vmem:[%s934 + $0x110] sm:$0xff]
        %v3590 = vld [vmem:[%s934 + $0x118] sm:$0xff]
        %v3591 = vld [vmem:[%s934 + $0x120] sm:$0xff]
        %v3592 = vld [vmem:[%s934 + $0x128] sm:$0xff]
        %v3593 = vld [vmem:[%s934 + $0x130] sm:$0xff]
        %v3594 = vld [vmem:[%s934 + $0x138] sm:$0xff]
        %v3595 = vld [vmem:[%s934 + $0x140] sm:$0xff]
        %v3596 = vld [vmem:[%s934 + $0x148] sm:$0xff]
        %v3597 = vld [vmem:[%s934 + $0x150] sm:$0xff]
        %v3598 = vld [vmem:[%s934 + $0x158] sm:$0xff]
        %v3599 = vld [vmem:[%s934 + $0x160] sm:$0xff]
        %v3600 = vld [vmem:[%s934 + $0x168] sm:$0xff]
        %v3601 = vld [vmem:[%s934 + $0x170] sm:$0xff]
        %v3602 = vld [vmem:[%s934 + $0x178] sm:$0xff]
        %v3603 = vld [vmem:[%s934 + $0x180] sm:$0xff]
        %v3604 = vld [vmem:[%s934 + $0x188] sm:$0xff]
        %v3605 = vld [vmem:[%s934 + $0x190] sm:$0xff]
        %v3606 = vld [vmem:[%s934 + $0x198] sm:$0xff]
        %v3607 = vld [vmem:[%s934 + $0x1a0] sm:$0xff]
        %v3608 = vld [vmem:[%s934 + $0x1a8] sm:$0xff]
        %v3609 = vld [vmem:[%s934 + $0x1b0] sm:$0xff]
        %v3610 = vld [vmem:[%s934 + $0x1b8] sm:$0xff]
        %v3611 = vld [vmem:[%s934 + $0x1c0] sm:$0xff]
        %v3612 = vld [vmem:[%s934 + $0x1c8] sm:$0xff]
        %v3613 = vld [vmem:[%s934 + $0x1d0] sm:$0xff]
        %v3614 = vld [vmem:[%s934 + $0x1d8] sm:$0xff]
        %v3615 = vld [vmem:[%s934 + $0x1e0] sm:$0xff]
        %v3616 = vld [vmem:[%s934 + $0x1e8] sm:$0xff]
        %v3617 = vld [vmem:[%s934 + $0x1f0] sm:$0xff]
        %v3618 = vld [vmem:[%s934 + $0x1f8] sm:$0xff]
        %v3619 = vld [vmem:[%s943] sm:$0x3]
        %v3621 = vlaneseq
        %v3622 = vshrl.u32 %v3621, 7
        %v3623 = vsub.s32 0, %v3622
        %v3624 = vrot.slane %v3619, %v3623
        %v3625 = vlaneseq
        %v3626 = vshrl.u32 %v3625, 7
        %v3627 = vsub.s32 1, %v3626
        %v3628 = vrot.slane %v3619, %v3627
        %3631 = vmatprep.subr.mxu0 %v3556
        %3632 = vmatpush1.msra.mxu0 %v3555
        %3633 = vmatprep.subr.mxu0 %v3558
        %3634 = vmatpush1.msra.mxu0 %v3557
        %3635 = vmatprep.subr.mxu0 %v3560
        %3636 = vmatpush1.msra.mxu0 %v3559
        %3637 = vmatprep.subr.mxu0 %v3562
        %3638 = vmatpush1.msra.mxu0 %v3561
        %3639 = vmatprep.subr.mxu0 %v3564
        %3640 = vmatpush1.msra.mxu0 %v3563
        %3641 = vmatprep.subr.mxu0 %v3566
        %3642 = vmatpush1.msra.mxu0 %v3565
        %3643 = vmatprep.subr.mxu0 %v3568
        %3644 = vmatpush1.msra.mxu0 %v3567
        %3645 = vmatprep.subr.mxu0 %v3570
        %3646 = vmatpush1.msra.mxu0 %v3569
        %3647 = vmatprep.subr.mxu0 %v3572
        %3648 = vmatpush1.msra.mxu0 %v3571
        %3649 = vmatprep.subr.mxu0 %v3574
        %3650 = vmatpush1.msra.mxu0 %v3573
        %3651 = vmatprep.subr.mxu0 %v3576
        %3652 = vmatpush1.msra.mxu0 %v3575
        %3653 = vmatprep.subr.mxu0 %v3578
        %3654 = vmatpush1.msra.mxu0 %v3577
        %3655 = vmatprep.subr.mxu0 %v3580
        %3656 = vmatpush1.msra.mxu0 %v3579
        %3657 = vmatprep.subr.mxu0 %v3582
        %3658 = vmatpush1.msra.mxu0 %v3581
        %3659 = vmatprep.subr.mxu0 %v3584
        %3660 = vmatpush1.msra.mxu0 %v3583
        %3661 = vmatprep.subr.mxu0 %v3586
        %3662 = vmatpush1.msra.mxu0 %v3585
        %3663 = vmatprep.subr.mxu0 %v3588
        %3664 = vmatpush1.msra.mxu0 %v3587
        %3665 = vmatprep.subr.mxu0 %v3590
        %3666 = vmatpush1.msra.mxu0 %v3589
        %3667 = vmatprep.subr.mxu0 %v3592
        %3668 = vmatpush1.msra.mxu0 %v3591
        %3669 = vmatprep.subr.mxu0 %v3594
        %3670 = vmatpush1.msra.mxu0 %v3593
        %3671 = vmatprep.subr.mxu0 %v3596
        %3672 = vmatpush1.msra.mxu0 %v3595
        %3673 = vmatprep.subr.mxu0 %v3598
        %3674 = vmatpush1.msra.mxu0 %v3597
        %3675 = vmatprep.subr.mxu0 %v3600
        %3676 = vmatpush1.msra.mxu0 %v3599
        %3677 = vmatprep.subr.mxu0 %v3602
        %3678 = vmatpush1.msra.mxu0 %v3601
        %3679 = vmatprep.subr.mxu0 %v3604
        %3680 = vmatpush1.msra.mxu0 %v3603
        %3681 = vmatprep.subr.mxu0 %v3606
        %3682 = vmatpush1.msra.mxu0 %v3605
        %3683 = vmatprep.subr.mxu0 %v3608
        %3684 = vmatpush1.msra.mxu0 %v3607
        %3685 = vmatprep.subr.mxu0 %v3610
        %3686 = vmatpush1.msra.mxu0 %v3609
        %3687 = vmatprep.subr.mxu0 %v3612
        %3688 = vmatpush1.msra.mxu0 %v3611
        %3689 = vmatprep.subr.mxu0 %v3614
        %3690 = vmatpush1.msra.mxu0 %v3613
        %3691 = vmatprep.subr.mxu0 %v3616
        %3692 = vmatpush1.msra.mxu0 %v3615
        %3693 = vmatprep.subr.mxu0 %v3618
        %3694 = vmatpush1.msra.mxu0 %v3617
        %3695 = vmatprep.mubr.f32.mxu0 %v3552
        %3696 = vmatmul.mubr.f32.gmra.mrb[0].mxu0 %v3551
        %v3697 = vpop.f32.mrb[0].mxu0
        %v3698 = vadd.f32 %v3624, %v3697
        %v3699 = vpop.f32.mrb[0].mxu0
        %v3700 = vadd.f32 %v3628, %v3699
        %3701 = vmatprep.mubr.f32.mxu0 %v3554
        %3702 = vmatmul.mubr.f32.gmra.mrb[0].mxu0 %v3553
        %v3703 = vpop.f32.mrb[0].mxu0
        %v3704 = vadd.f32 %v3624, %v3703
        %v3705 = vpop.f32.mrb[0].mxu0
        %v3706 = vadd.f32 %v3628, %v3705
        %3707 = vdwg.mxu0
        %v3708 = vmax.f32 %v3698, 0.0
        %v3709 = vmax.f32 %v3700, 0.0
        %v3710 = vmax.f32 %v3704, 0.0
        %v3711 = vmax.f32 %v3706, 0.0
        %v3712 = vld [vmem:[%s952] sm:$0xff]
        %v3713 = vld [vmem:[%s952 + $0x8] sm:$0xff]
        %v3714 = vld [vmem:[%s952 + $0x10] sm:$0xff]
        %v3715 = vld [vmem:[%s952 + $0x18] sm:$0xff]
        %v3716 = vld [vmem:[%s952 + $0x20] sm:$0xff]
        %v3717 = vld [vmem:[%s952 + $0x28] sm:$0xff]
        %v3718 = vld [vmem:[%s952 + $0x30] sm:$0xff]
        %v3719 = vld [vmem:[%s952 + $0x38] sm:$0xff]
        %v3720 = vld [vmem:[%s952 + $0x40] sm:$0xff]
        %v3721 = vld [vmem:[%s952 + $0x48] sm:$0xff]
        %v3722 = vld [vmem:[%s952 + $0x50] sm:$0xff]
        %v3723 = vld [vmem:[%s952 + $0x58] sm:$0xff]
        %v3724 = vld [vmem:[%s952 + $0x60] sm:$0xff]
        %v3725 = vld [vmem:[%s952 + $0x68] sm:$0xff]
        %v3726 = vld [vmem:[%s952 + $0x70] sm:$0xff]
        %v3727 = vld [vmem:[%s952 + $0x78] sm:$0xff]
        %v3728 = vld [vmem:[%s952 + $0x80] sm:$0xff]
        %v3729 = vld [vmem:[%s952 + $0x88] sm:$0xff]
        %v3730 = vld [vmem:[%s952 + $0x90] sm:$0xff]
        %v3731 = vld [vmem:[%s952 + $0x98] sm:$0xff]
        %v3732 = vld [vmem:[%s952 + $0xa0] sm:$0xff]
        %v3733 = vld [vmem:[%s952 + $0xa8] sm:$0xff]
        %v3734 = vld [vmem:[%s952 + $0xb0] sm:$0xff]
        %v3735 = vld [vmem:[%s952 + $0xb8] sm:$0xff]
        %v3736 = vld [vmem:[%s952 + $0xc0] sm:$0xff]
        %v3737 = vld [vmem:[%s952 + $0xc8] sm:$0xff]
        %v3738 = vld [vmem:[%s952 + $0xd0] sm:$0xff]
        %v3739 = vld [vmem:[%s952 + $0xd8] sm:$0xff]
        %v3740 = vld [vmem:[%s952 + $0xe0] sm:$0xff]
        %v3741 = vld [vmem:[%s952 + $0xe8] sm:$0xff]
        %v3742 = vld [vmem:[%s952 + $0xf0] sm:$0xff]
        %v3743 = vld [vmem:[%s952 + $0xf8] sm:$0xff]
        %v3744 = vld [vmem:[%s952 + $0x100] sm:$0xff]
        %v3745 = vld [vmem:[%s952 + $0x108] sm:$0xff]
        %v3746 = vld [vmem:[%s952 + $0x110] sm:$0xff]
        %v3747 = vld [vmem:[%s952 + $0x118] sm:$0xff]
        %v3748 = vld [vmem:[%s952 + $0x120] sm:$0xff]
        %v3749 = vld [vmem:[%s952 + $0x128] sm:$0xff]
        %v3750 = vld [vmem:[%s952 + $0x130] sm:$0xff]
        %v3751 = vld [vmem:[%s952 + $0x138] sm:$0xff]
        %v3752 = vld [vmem:[%s952 + $0x140] sm:$0xff]
        %v3753 = vld [vmem:[%s952 + $0x148] sm:$0xff]
        %v3754 = vld [vmem:[%s952 + $0x150] sm:$0xff]
        %v3755 = vld [vmem:[%s952 + $0x158] sm:$0xff]
        %v3756 = vld [vmem:[%s952 + $0x160] sm:$0xff]
        %v3757 = vld [vmem:[%s952 + $0x168] sm:$0xff]
        %v3758 = vld [vmem:[%s952 + $0x170] sm:$0xff]
        %v3759 = vld [vmem:[%s952 + $0x178] sm:$0xff]
        %v3760 = vld [vmem:[%s952 + $0x180] sm:$0xff]
        %v3761 = vld [vmem:[%s952 + $0x188] sm:$0xff]
        %v3762 = vld [vmem:[%s952 + $0x190] sm:$0xff]
        %v3763 = vld [vmem:[%s952 + $0x198] sm:$0xff]
        %v3764 = vld [vmem:[%s952 + $0x1a0] sm:$0xff]
        %v3765 = vld [vmem:[%s952 + $0x1a8] sm:$0xff]
        %v3766 = vld [vmem:[%s952 + $0x1b0] sm:$0xff]
        %v3767 = vld [vmem:[%s952 + $0x1b8] sm:$0xff]
        %v3768 = vld [vmem:[%s952 + $0x1c0] sm:$0xff]
        %v3769 = vld [vmem:[%s952 + $0x1c8] sm:$0xff]
        %v3770 = vld [vmem:[%s952 + $0x1d0] sm:$0xff]
        %v3771 = vld [vmem:[%s952 + $0x1d8] sm:$0xff]
        %v3772 = vld [vmem:[%s952 + $0x1e0] sm:$0xff]
        %v3773 = vld [vmem:[%s952 + $0x1e8] sm:$0xff]
        %v3774 = vld [vmem:[%s952 + $0x1f0] sm:$0xff]
        %v3775 = vld [vmem:[%s952 + $0x1f8] sm:$0xff]
        %v3776 = vld [vmem:[%s961] sm:$0x3]
        %v3778 = vlaneseq
        %v3779 = vshrl.u32 %v3778, 7
        %v3780 = vsub.s32 0, %v3779
        %v3781 = vrot.slane %v3776, %v3780
        %v3782 = vlaneseq
        %v3783 = vshrl.u32 %v3782, 7
        %v3784 = vsub.s32 1, %v3783
        %v3785 = vrot.slane %v3776, %v3784
        %3788 = vmatprep.subr.mxu0 %v3713
        %3789 = vmatpush1.msra.mxu0 %v3712
        %3790 = vmatprep.subr.mxu0 %v3715
        %3791 = vmatpush1.msra.mxu0 %v3714
        %3792 = vmatprep.subr.mxu0 %v3717
        %3793 = vmatpush1.msra.mxu0 %v3716
        %3794 = vmatprep.subr.mxu0 %v3719
        %3795 = vmatpush1.msra.mxu0 %v3718
        %3796 = vmatprep.subr.mxu0 %v3721
        %3797 = vmatpush1.msra.mxu0 %v3720
        %3798 = vmatprep.subr.mxu0 %v3723
        %3799 = vmatpush1.msra.mxu0 %v3722
        %3800 = vmatprep.subr.mxu0 %v3725
        %3801 = vmatpush1.msra.mxu0 %v3724
        %3802 = vmatprep.subr.mxu0 %v3727
        %3803 = vmatpush1.msra.mxu0 %v3726
        %3804 = vmatprep.subr.mxu0 %v3729
        %3805 = vmatpush1.msra.mxu0 %v3728
        %3806 = vmatprep.subr.mxu0 %v3731
        %3807 = vmatpush1.msra.mxu0 %v3730
        %3808 = vmatprep.subr.mxu0 %v3733
        %3809 = vmatpush1.msra.mxu0 %v3732
        %3810 = vmatprep.subr.mxu0 %v3735
        %3811 = vmatpush1.msra.mxu0 %v3734
        %3812 = vmatprep.subr.mxu0 %v3737
        %3813 = vmatpush1.msra.mxu0 %v3736
        %3814 = vmatprep.subr.mxu0 %v3739
        %3815 = vmatpush1.msra.mxu0 %v3738
        %3816 = vmatprep.subr.mxu0 %v3741
        %3817 = vmatpush1.msra.mxu0 %v3740
        %3818 = vmatprep.subr.mxu0 %v3743
        %3819 = vmatpush1.msra.mxu0 %v3742
        %3820 = vmatprep.subr.mxu0 %v3745
        %3821 = vmatpush1.msra.mxu0 %v3744
        %3822 = vmatprep.subr.mxu0 %v3747
        %3823 = vmatpush1.msra.mxu0 %v3746
        %3824 = vmatprep.subr.mxu0 %v3749
        %3825 = vmatpush1.msra.mxu0 %v3748
        %3826 = vmatprep.subr.mxu0 %v3751
        %3827 = vmatpush1.msra.mxu0 %v3750
        %3828 = vmatprep.subr.mxu0 %v3753
        %3829 = vmatpush1.msra.mxu0 %v3752
        %3830 = vmatprep.subr.mxu0 %v3755
        %3831 = vmatpush1.msra.mxu0 %v3754
        %3832 = vmatprep.subr.mxu0 %v3757
        %3833 = vmatpush1.msra.mxu0 %v3756
        %3834 = vmatprep.subr.mxu0 %v3759
        %3835 = vmatpush1.msra.mxu0 %v3758
        %3836 = vmatprep.subr.mxu0 %v3761
        %3837 = vmatpush1.msra.mxu0 %v3760
        %3838 = vmatprep.subr.mxu0 %v3763
        %3839 = vmatpush1.msra.mxu0 %v3762
        %3840 = vmatprep.subr.mxu0 %v3765
        %3841 = vmatpush1.msra.mxu0 %v3764
        %3842 = vmatprep.subr.mxu0 %v3767
        %3843 = vmatpush1.msra.mxu0 %v3766
        %3844 = vmatprep.subr.mxu0 %v3769
        %3845 = vmatpush1.msra.mxu0 %v3768
        %3846 = vmatprep.subr.mxu0 %v3771
        %3847 = vmatpush1.msra.mxu0 %v3770
        %3848 = vmatprep.subr.mxu0 %v3773
        %3849 = vmatpush1.msra.mxu0 %v3772
        %3850 = vmatprep.subr.mxu0 %v3775
        %3851 = vmatpush1.msra.mxu0 %v3774
        %3852 = vmatprep.mubr.f32.mxu0 %v3709
        %3853 = vmatmul.mubr.f32.gmra.mrb[0].mxu0 %v3708
        %v3854 = vpop.f32.mrb[0].mxu0
        %v3855 = vadd.f32 %v3781, %v3854
        %v3856 = vpop.f32.mrb[0].mxu0
        %v3857 = vadd.f32 %v3785, %v3856
        %3858 = vmatprep.mubr.f32.mxu0 %v3711
        %3859 = vmatmul.mubr.f32.gmra.mrb[0].mxu0 %v3710
        %v3860 = vpop.f32.mrb[0].mxu0
        %v3861 = vadd.f32 %v3781, %v3860
        %v3862 = vpop.f32.mrb[0].mxu0
        %v3863 = vadd.f32 %v3785, %v3862
        %3864 = vdwg.mxu0
        %v3865 = vadd.f32 %v3551, %v3855
        %v3866 = vadd.f32 %v3552, %v3857
        %v3867 = vadd.f32 %v3553, %v3861
        %v3868 = vadd.f32 %v3554, %v3863
        %v3869 = vld [vmem:[%s970] sm:$0x3]
        %v3870 = vld [vmem:[%s979] sm:$0x3]
        %v3871 = vadd.f32 %v3865, %v3866
        %3872 = vadd.xlane.f32.xlu0 %v3871
        %v3873 = vpop.xlane.xlu0 %3872
        %v3874 = vadd.f32 %v3867, %v3868
        %3875 = vadd.xlane.f32.xlu0 %v3874
        %v3876 = vpop.xlane.xlu0 %3875
        %v3877 = vmul.f32 %v3873, %v3498
        %v3878 = vmul.f32 %v3876, %v3498
        %v3879 = vsub.f32 %v3865, %v3877
        %v3880 = vsub.f32 %v3866, %v3877
        %v3881 = vsub.f32 %v3867, %v3878
        %v3882 = vsub.f32 %v3868, %v3878
        %v3883 = vmul.f32 %v3879, %v3879
        %v3884 = vmul.f32 %v3880, %v3880
        %v3885 = vmul.f32 %v3881, %v3881
        %v3886 = vmul.f32 %v3882, %v3882
        %v3887 = vadd.f32 %v3883, %v3884
        %3888 = vadd.xlane.f32.xlu0 %v3887
        %v3889 = vpop.xlane.xlu0 %3888
        %v3890 = vadd.f32 %v3885, %v3886
        %3891 = vadd.xlane.f32.xlu0 %v3890
        %v3892 = vpop.xlane.xlu0 %3891
        %v3893 = vmul.f32 %v3889, %v3498
        %v3894 = vmul.f32 %v3892, %v3498
        %v3895 = vadd.f32 %v3893, 1e-05
        %v3896 = vadd.f32 %v3894, 1e-05
        %v3897 = vrsqrt.pop %v3895
        %v3898 = vrsqrt.pop %v3896
        %v3899 = vmul.f32 %v3879, %v3897
        %v3900 = vmul.f32 %v3880, %v3897
        %v3901 = vmul.f32 %v3881, %v3898
        %v3902 = vmul.f32 %v3882, %v3898
        %v3904 = vlaneseq
        %v3905 = vshrl.u32 %v3904, 7
        %v3906 = vsub.s32 0, %v3905
        %v3907 = vrot.slane %v3869, %v3906
        %v3908 = vlaneseq
        %v3909 = vshrl.u32 %v3908, 7
        %v3910 = vsub.s32 1, %v3909
        %v3911 = vrot.slane %v3869, %v3910
        %v3914 = vmul.f32 %v3899, %v3907
        %v3915 = vmul.f32 %v3900, %v3911
        %v3916 = vmul.f32 %v3901, %v3907
        %v3917 = vmul.f32 %v3902, %v3911
        %v3919 = vlaneseq
        %v3920 = vshrl.u32 %v3919, 7
        %v3921 = vsub.s32 0, %v3920
        %v3922 = vrot.slane %v3870, %v3921
        %v3923 = vlaneseq
        %v3924 = vshrl.u32 %v3923, 7
        %v3925 = vsub.s32 1, %v3924
        %v3926 = vrot.slane %v3870, %v3925
        %v3929 = vadd.f32 %v3914, %v3922
        %v3930 = vadd.f32 %v3915, %v3926
        %v3931 = vadd.f32 %v3916, %v3922
        %v3932 = vadd.f32 %v3917, %v3926
        %3933 = vst [vmem:[#allocation2] sm:$0xff] %v3929
        %3934 = vst [vmem:[#allocation2 + $0x8] sm:$0xff] %v3930
        %3935 = vst [vmem:[#allocation2 + $0x10] sm:$0xff] %v3931
        %3936 = vst [vmem:[#allocation2 + $0x18] sm:$0xff] %v3932
        %p3937 = scmp.eq.s32.totalorder %s52, 1
        // Predicated region
        $region169: #{mt_forward.1} parent=95 // pred_check
          %p3938 = pneg %p3937
        $region170: #{mt_forward.1} parent=95 // pred_check_branch
          %3940 = sbr.rel (%p3938) target = $region172
        $region171: #{mt_forward.1} parent=95 // pred_region
          %v3941 = vld [vmem:[%s4] sm:$0x3]
          %v3943 = vsel %vm1764, %v3941, 0
          %3945 = vmatprep.subr.mxu0 %v3930
          %3946 = vmatpush1.msra.mxu0 %v3929
          %3947 = vmatprep.subr.mxu0 %v3932
          %3948 = vmatpush1.msra.mxu0 %v3931
          %3949 = vmatprep.subr.mxu0 0.0
          %3950 = vmatpush1.msra.mxu0 0.0
          %3951 = vmatprep.subr.mxu0 0.0
          %3952 = vmatpush1.msra.mxu0 0.0
          %3953 = vmatprep.subr.mxu0 0.0
          %3954 = vmatpush1.msra.mxu0 0.0
          %3955 = vmatprep.subr.mxu0 0.0
          %3956 = vmatpush1.msra.mxu0 0.0
          %3957 = vmatprep.subr.mxu0 0.0
          %3958 = vmatpush1.msra.mxu0 0.0
          %3959 = vmatprep.subr.mxu0 0.0
          %3960 = vmatpush1.msra.mxu0 0.0
          %3961 = vmatprep.subr.mxu0 0.0
          %3962 = vmatpush1.msra.mxu0 0.0
          %3963 = vmatprep.subr.mxu0 0.0
          %3964 = vmatpush1.msra.mxu0 0.0
          %3965 = vmatprep.subr.mxu0 0.0
          %3966 = vmatpush1.msra.mxu0 0.0
          %3967 = vmatprep.subr.mxu0 0.0
          %3968 = vmatpush1.msra.mxu0 0.0
          %3969 = vmatprep.subr.mxu0 0.0
          %3970 = vmatpush1.msra.mxu0 0.0
          %3971 = vmatprep.subr.mxu0 0.0
          %3972 = vmatpush1.msra.mxu0 0.0
          %3973 = vmatprep.subr.mxu0 0.0
          %3974 = vmatpush1.msra.mxu0 0.0
          %3975 = vmatprep.subr.mxu0 0.0
          %3976 = vmatpush1.msra.mxu0 0.0
          %3977 = vmatprep.subr.mxu0 0.0
          %3978 = vmatpush1.msra.mxu0 0.0
          %3979 = vmatprep.subr.mxu0 0.0
          %3980 = vmatpush1.msra.mxu0 0.0
          %3981 = vmatprep.subr.mxu0 0.0
          %3982 = vmatpush1.msra.mxu0 0.0
          %3983 = vmatprep.subr.mxu0 0.0
          %3984 = vmatpush1.msra.mxu0 0.0
          %3985 = vmatprep.subr.mxu0 0.0
          %3986 = vmatpush1.msra.mxu0 0.0
          %3987 = vmatprep.subr.mxu0 0.0
          %3988 = vmatpush1.msra.mxu0 0.0
          %3989 = vmatprep.subr.mxu0 0.0
          %3990 = vmatpush1.msra.mxu0 0.0
          %3991 = vmatprep.subr.mxu0 0.0
          %3992 = vmatpush1.msra.mxu0 0.0
          %3993 = vmatprep.subr.mxu0 0.0
          %3994 = vmatpush1.msra.mxu0 0.0
          %3995 = vmatprep.subr.mxu0 0.0
          %3996 = vmatpush1.msra.mxu0 0.0
          %3997 = vmatprep.subr.mxu0 0.0
          %3998 = vmatpush1.msra.mxu0 0.0
          %3999 = vmatprep.subr.mxu0 0.0
          %4000 = vmatpush1.msra.mxu0 0.0
          %4001 = vmatprep.subr.mxu0 0.0
          %4002 = vmatpush1.msra.mxu0 0.0
          %4003 = vmatprep.subr.mxu0 0.0
          %4004 = vmatpush1.msra.mxu0 0.0
          %4005 = vmatprep.subr.mxu0 0.0
          %4006 = vmatpush1.msra.mxu0 0.0
          %4007 = vmatprep.subr.mxu0 0.0
          %4008 = vmatpush1.msra.mxu0 0.0
          %4009 = vmatprep.mubr.f32.mxu0 0.0
          %4010 = vmatmul.mubr.f32.gmra.mrb[0].mxu0 %v3943
          %v4011 = vpop.f32.mrb[0].mxu0
          %v4012 = vadd.f32 0.0, %v4011
          %v4013 = vpop.f32.mrb[0].mxu0
          %v4014 = vadd.f32 0.0, %v4013
          %4015 = vdwg.mxu0
          %v4016 = vld [vmem:[#allocation10] sm:$0xff]
          %v4017 = vld [vmem:[#allocation10 + $0x8] sm:$0xff]
          %v4018 = vld [vmem:[#allocation10 + $0x10] sm:$0xff]
          %v4019 = vld [vmem:[#allocation10 + $0x18] sm:$0xff]
          %v4020 = vld [vmem:[#allocation10 + $0x20] sm:$0xff]
          %v4021 = vld [vmem:[#allocation10 + $0x28] sm:$0xff]
          %v4022 = vld [vmem:[#allocation10 + $0x30] sm:$0xff]
          %v4023 = vld [vmem:[#allocation10 + $0x38] sm:$0xff]
          %v4024 = vld [vmem:[#allocation10 + $0x40] sm:$0xff]
          %v4025 = vld [vmem:[#allocation10 + $0x48] sm:$0xff]
          %v4026 = vld [vmem:[#allocation10 + $0x50] sm:$0xff]
          %v4027 = vld [vmem:[#allocation10 + $0x58] sm:$0xff]
          %v4028 = vld [vmem:[#allocation10 + $0x60] sm:$0xff]
          %v4029 = vld [vmem:[#allocation10 + $0x68] sm:$0xff]
          %v4030 = vld [vmem:[#allocation10 + $0x70] sm:$0xff]
          %v4031 = vld [vmem:[#allocation10 + $0x78] sm:$0xff]
          %v4032 = vld [vmem:[#allocation10 + $0x80] sm:$0xff]
          %v4033 = vld [vmem:[#allocation10 + $0x88] sm:$0xff]
          %v4034 = vld [vmem:[#allocation10 + $0x90] sm:$0xff]
          %v4035 = vld [vmem:[#allocation10 + $0x98] sm:$0xff]
          %v4036 = vld [vmem:[#allocation10 + $0xa0] sm:$0xff]
          %v4037 = vld [vmem:[#allocation10 + $0xa8] sm:$0xff]
          %v4038 = vld [vmem:[#allocation10 + $0xb0] sm:$0xff]
          %v4039 = vld [vmem:[#allocation10 + $0xb8] sm:$0xff]
          %v4040 = vld [vmem:[#allocation10 + $0xc0] sm:$0xff]
          %v4041 = vld [vmem:[#allocation10 + $0xc8] sm:$0xff]
          %v4042 = vld [vmem:[#allocation10 + $0xd0] sm:$0xff]
          %v4043 = vld [vmem:[#allocation10 + $0xd8] sm:$0xff]
          %v4044 = vld [vmem:[#allocation10 + $0xe0] sm:$0xff]
          %v4045 = vld [vmem:[#allocation10 + $0xe8] sm:$0xff]
          %v4046 = vld [vmem:[#allocation10 + $0xf0] sm:$0xff]
          %v4047 = vld [vmem:[#allocation10 + $0xf8] sm:$0xff]
          %v4048 = vld [vmem:[#allocation12] sm:$0x1]
          %v4050 = vlaneseq
          %v4051 = vshrl.u32 %v4050, 7
          %v4052 = vsub.s32 0, %v4051
          %v4053 = vrot.slane %v4048, %v4052
          %4055 = vmatprep.subr.mxu0 0.0
          %4056 = vmatpush1.msra.mxu0 %v4016
          %4057 = vmatprep.subr.mxu0 0.0
          %4058 = vmatpush1.msra.mxu0 %v4017
          %4059 = vmatprep.subr.mxu0 0.0
          %4060 = vmatpush1.msra.mxu0 %v4018
          %4061 = vmatprep.subr.mxu0 0.0
          %4062 = vmatpush1.msra.mxu0 %v4019
          %4063 = vmatprep.subr.mxu0 0.0
          %4064 = vmatpush1.msra.mxu0 %v4020
          %4065 = vmatprep.subr.mxu0 0.0
          %4066 = vmatpush1.msra.mxu0 %v4021
          %4067 = vmatprep.subr.mxu0 0.0
          %4068 = vmatpush1.msra.mxu0 %v4022
          %4069 = vmatprep.subr.mxu0 0.0
          %4070 = vmatpush1.msra.mxu0 %v4023
          %4071 = vmatprep.subr.mxu0 0.0
          %4072 = vmatpush1.msra.mxu0 %v4024
          %4073 = vmatprep.subr.mxu0 0.0
          %4074 = vmatpush1.msra.mxu0 %v4025
          %4075 = vmatprep.subr.mxu0 0.0
          %4076 = vmatpush1.msra.mxu0 %v4026
          %4077 = vmatprep.subr.mxu0 0.0
          %4078 = vmatpush1.msra.mxu0 %v4027
          %4079 = vmatprep.subr.mxu0 0.0
          %4080 = vmatpush1.msra.mxu0 %v4028
          %4081 = vmatprep.subr.mxu0 0.0
          %4082 = vmatpush1.msra.mxu0 %v4029
          %4083 = vmatprep.subr.mxu0 0.0
          %4084 = vmatpush1.msra.mxu0 %v4030
          %4085 = vmatprep.subr.mxu0 0.0
          %4086 = vmatpush1.msra.mxu0 %v4031
          %4087 = vmatprep.subr.mxu0 0.0
          %4088 = vmatpush1.msra.mxu0 %v4032
          %4089 = vmatprep.subr.mxu0 0.0
          %4090 = vmatpush1.msra.mxu0 %v4033
          %4091 = vmatprep.subr.mxu0 0.0
          %4092 = vmatpush1.msra.mxu0 %v4034
          %4093 = vmatprep.subr.mxu0 0.0
          %4094 = vmatpush1.msra.mxu0 %v4035
          %4095 = vmatprep.subr.mxu0 0.0
          %4096 = vmatpush1.msra.mxu0 %v4036
          %4097 = vmatprep.subr.mxu0 0.0
          %4098 = vmatpush1.msra.mxu0 %v4037
          %4099 = vmatprep.subr.mxu0 0.0
          %4100 = vmatpush1.msra.mxu0 %v4038
          %4101 = vmatprep.subr.mxu0 0.0
          %4102 = vmatpush1.msra.mxu0 %v4039
          %4103 = vmatprep.subr.mxu0 0.0
          %4104 = vmatpush1.msra.mxu0 %v4040
          %4105 = vmatprep.subr.mxu0 0.0
          %4106 = vmatpush1.msra.mxu0 %v4041
          %4107 = vmatprep.subr.mxu0 0.0
          %4108 = vmatpush1.msra.mxu0 %v4042
          %4109 = vmatprep.subr.mxu0 0.0
          %4110 = vmatpush1.msra.mxu0 %v4043
          %4111 = vmatprep.subr.mxu0 0.0
          %4112 = vmatpush1.msra.mxu0 %v4044
          %4113 = vmatprep.subr.mxu0 0.0
          %4114 = vmatpush1.msra.mxu0 %v4045
          %4115 = vmatprep.subr.mxu0 0.0
          %4116 = vmatpush1.msra.mxu0 %v4046
          %4117 = vmatprep.subr.mxu0 0.0
          %4118 = vmatpush1.msra.mxu0 %v4047
          %4119 = vmatprep.mubr.f32.mxu0 %v4014
          %4120 = vmatmul.mubr.f32.gmra.mrb[0].mxu0 %v4012
          %v4121 = vpop.f32.mrb[0].mxu0
          %v4122 = vadd.f32 %v4053, %v4121
          %v4123 = vpop.f32.mrb[0].mxu0
          %4124 = vdwg.mxu0
          %v4125 = vmul.f32 %v4122, %v4122
          %vm4126 = vcmask 1041408
          %v4127 = vsel %vm4126, %v4125, 0.0
          %4128 = vadd.xlane.f32.xlu0 %v4127
          %v4129 = vpop.xlane.xlu0 %4128
          %v4130 = vrsqrt.pop %v4129
          %v4131 = vmul.f32 %v4129, %v4130
          %vm4132 = vcmp.eq.f32.partialorder %v4129, inf
          %v4133 = vsel %vm4132, %v4129, %v4131
          %vm4134 = vcmp.eq.f32.partialorder %v4129, 0.0
          %v4135 = vand.u32 %v4129, 2147483648
          %v4136 = vsel %vm4134, %v4135, %v4133
          %v4137 = vmax.f32 %v4136, 1e-12
          %v4138 = vrcp.pop %v4137
          %v4139 = vmul.f32 %v4122, %v4138
          %4140 = vst [vmem:[#allocation31] sm:$0x3] %v4139
        $region172: #{mt_forward.1} parent=95 // pred_fallthru
          _
        // Predicated region
        $region173: #{mt_forward.1} parent=95 // pred_check
          %p4141 = pneg %p524
        $region174: #{mt_forward.1} parent=95 // pred_check_branch
          %4143 = sbr.rel (%p4141) target = $region176
        $region175: #{mt_forward.1} parent=95 // pred_region
          %s4145 = ssub.s32 32, 32
          %4146 = vsyncadd [#allocation6], %s4145
          %s4148 = sshll.u32 [#allocation31], 4
          %s4149 = int_to_ptr.vmem [resolvable:$true] %s4148
          %4151 = dma.vmem_to_hbm [thread:$0]  %s4149, 32, %s19, [#allocation6]
        $region176: #{mt_forward.1} parent=95 // pred_fallthru
          _
        // Predicated region
        $region177: #{mt_forward.1} parent=95 // pred_check
          %p4152 = pneg %p524
        $region178: #{mt_forward.1} parent=95 // pred_check_branch
          %4154 = sbr.rel (%p4152) target = $region180
        $region179: #{mt_forward.1} parent=95 // pred_region
          %4155 = dma.done [#allocation6], 32
        $region180: #{mt_forward.1} parent=95 // pred_fallthru
          _
      $region96: #{mt_forward.1} parent=5 // pred_fallthru
        _
      %p4156 = scmp.le.s32.totalorder 2, %s47
      // Predicated region
      $region181: #{mt_forward.1} parent=5 // pred_check
        %p4157 = pneg %p4156
      $region182: #{mt_forward.1} parent=5 // pred_check_branch
        %4159 = sbr.rel (%p4157) target = $region184
      $region183: #{mt_forward.1} parent=5 // pred_region
        %s4160 = ssub.s32 %s47, 2
      $region184: #{mt_forward.1} parent=5 // pred_fallthru
        _
    $region6: #{mt_forward.1} parent=1 // loop_footer
      %s51 = sadd.s32 1, %s47
    $region7: #{mt_forward.1} parent=1 // loop_footer_branch
      %46 = sbr.rel target = $region3
    $region8: #{mt_forward.1} parent=1 // loop_exit
      _
    %4161 = vsyncpa [#allocation5], 1
    %s4162 = scalar_lea.sflag [#allocation5], 1
    %4163 = vsyncpa %s4162, 1
    %4164 = vsyncpa [#allocation8], 1
    %4165 = vsyncpa [#allocation11], 1
    %4166 = vsyncpa [#allocation14], 1
    %s4167 = scalar_lea.sflag [#allocation14], 1
    %4168 = vsyncpa %s4167, 1
    %4169 = vsyncpa [#allocation17], 1
    %s4170 = scalar_lea.sflag [#allocation17], 1
    %4171 = vsyncpa %s4170, 1
    %4172 = vsyncpa [#allocation20], 1
    %s4173 = scalar_lea.sflag [#allocation20], 1
    %4174 = vsyncpa %s4173, 1
    %4175 = vsyncpa [#allocation23], 1
    %s4176 = scalar_lea.sflag [#allocation23], 1
    %4177 = vsyncpa %s4176, 1
    %4178 = vsyncpa [#allocation26], 1
    %s4179 = scalar_lea.sflag [#allocation26], 1
    %4180 = vsyncpa %s4179, 1
    %4181 = vsyncpa [#allocation29], 1
    %s4182 = scalar_lea.sflag [#allocation29], 1
    %4183 = vsyncpa %s4182, 1
    %4184 = vsyncpa [#allocation6], 1
    %s4185 = scalar_lea.sflag [#allocation6], 1
    %4186 = vsyncpa %s4185, 1

</llo_original>
